<compile_context>
chip_gen: v7x
topology: tpu7x:2x2x1
jax: 0.10.0
libtpu: 0.0.40
codegen_flags: <defaults>
</compile_context>

<pallas_src>
import functools

import jax
import jax.numpy as jnp
from jax.experimental import pallas as pl
from jax.experimental.pallas import tpu as pltpu

# CLIP normalization constants (from the reference module).
CLIP_MEAN = jnp.array([0.48145466, 0.4578275, 0.40821073], dtype=jnp.float32)
CLIP_STD = jnp.array([0.26862954, 0.26130258, 0.27577711], dtype=jnp.float32)

# Default CLIPasso config values.
CLIP_CONV_LAYER_WEIGHTS = (0.0, 0.0, 1.0, 1.0, 0.0)
CLIP_FC_LOSS_WEIGHT = 0.1

# Surrogate backbone geometry (true widths; padded to LANE inside the kernel).
_STAGE_CHANNELS = (3, 32, 64, 64, 128, 128)   # stem, layer1..layer4
_FC_DIM = 64
_NUM_STAGES = 5

LANE = 128                    # lane-dense channel padding for all matmul outputs
IMG_C_PAD = 16                # pad 3 image channels to one bf16 sublane tile
COMPUTE_DTYPE = jnp.bfloat16  # MXU operand dtype; accumulation/reductions in f32


# ----------------------------------------------------------------------------
# Morton (Z-order) spatial permutation: makes every 2x2 pooling block occupy
# 4 consecutive rows, at every stage, so pooling == stride-4 row averaging.
# ----------------------------------------------------------------------------
def _morton_perm(h, w):
    assert h == w and (h & (h - 1)) == 0, "need square power-of-two spatial dims"
    nbits = h.bit_length() - 1
    out = []
    for m in range(h * w):
        hh = ww = 0
        for b in range(nbits):
            ww |= ((m >> (2 * b)) & 1) << b
            hh |= ((m >> (2 * b + 1)) & 1) << b
        out.append(hh * w + ww)
    return jnp.asarray(out, dtype=jnp.int32)


# ----------------------------------------------------------------------------
# Fused Pallas kernel: both images' features + all losses in one invocation.
# ----------------------------------------------------------------------------
def _fused_clip_conv_loss_kernel(x_ref, w_ref, b_ref, o_ref, act_ref, *,
                                 batch, pooled_spatial, inv_counts, eps):
    """Writes o_ref = [l2_layer0..l2_layer4, fc_cos_loss] (SMEM, f32[6]).

    x_ref : (2*B*H*W, IMG_C_PAD) bf16 -- sketch rows then target rows,
            spatial positions in Morton order (groups of 4 rows = 2x2 block).
    w_ref : (656, 128) bf16 weight slab  [w0(16) | w1..w4(4*128) | w_fc(128)].
    b_ref : (8, 128)   f32  bias slab    [b0..b4 | b_fc | 0 | 0].
    act_ref: (2*B*H*W, 128) f32 VMEM scratch used for strided pooling loads.
    """
    f = x_ref[...]                       # (2*B*H*W, IMG_C_PAD) bf16
    m = f.shape[0]
    w_off = 0
    p = None
    for i in range(_NUM_STAGES):         # unrolled at trace time
        cin = IMG_C_PAD if i == 0 else LANE
        w = w_ref[w_off:w_off + cin, :]                    # (cin, 128) bf16
        b = b_ref[i:i + 1, :]                              # (1, 128)   f32

        # 1x1 conv as channel matmul (MXU, f32 accumulation) + bias + ReLU.
        # Sketch & target are stacked along M -> ONE matmul per stage.
        a = jnp.maximum(
            jnp.dot(f, w, preferred_element_type=jnp.float32) + b, 0.0)

        # 2x2 average pool: Morton ordering => average 4 consecutive rows.
        # One scratch store + four stride-4 strided loads (VPU adds, no MXU).
        act_ref[0:m, :] = a
        m_out = m // 4
        p = (act_ref[pl.ds(0, m_out, stride=4), :]
             + act_ref[pl.ds(1, m_out, stride=4), :]
             + act_ref[pl.ds(2, m_out, stride=4), :]
             + act_ref[pl.ds(3, m_out, stride=4), :]) * 0.25

        # Per-layer L2 feature loss (f32): mean over the TRUE (unpadded)
        # feature elements; padded channels are zero in both images.
        npix = m_out // 2
        d = p[:npix] - p[npix:]
        o_ref[i] = jnp.sum(d * d) * inv_counts[i]

        f = p.astype(COMPUTE_DTYPE)      # single cast before the next matmul
        m = m_out
        w_off += cin

    # Global average pool (surrogate attention pool) -- no dense operator.
    if pooled_spatial == 1:
        g = p                                             # (2*B, 128) f32
    else:
        act_ref[0:m, :] = p
        g = act_ref[pl.ds(0, 2 * batch, stride=pooled_spatial), :]
        for j in range(1, pooled_spatial):
            g = g + act_ref[pl.ds(j, 2 * batch, stride=pooled_spatial), :]
        g = g * (1.0 / float(pooled_spatial))

    # FC head.
    wfc = w_ref[w_off:w_off + LANE, :]
    bfc = b_ref[_NUM_STAGES:_NUM_STAGES + 1, :]
    fc = jnp.dot(g.astype(COMPUTE_DTYPE), wfc,
                 preferred_element_type=jnp.float32) + bfc

    # mean(1 - cosine_similarity(x, y, dim=1)).  Single EUP rsqrt; the eps^2
    # clamp on ||x||^2*||y||^2 differs from torch's per-norm clamp only for
    # near-zero norms.
    x_fc = fc[:batch]
    y_fc = fc[batch:]
    dotv = jnp.sum(x_fc * y_fc, axis=1, keepdims=True)
    xn2 = jnp.sum(x_fc * x_fc, axis=1, keepdims=True)
    yn2 = jnp.sum(y_fc * y_fc, axis=1, keepdims=True)
    inv = jax.lax.rsqrt(jnp.maximum(xn2 * yn2, eps * eps))
    o_ref[_NUM_STAGES] = jnp.mean(1.0 - dotv * inv)


# ----------------------------------------------------------------------------
# Trace-time operand preparation (fold normalization, pad, build 2 slabs)
# ----------------------------------------------------------------------------
def _pad2d(a, rows, cols):
    return jnp.pad(a, ((0, rows - a.shape[0]), (0, cols - a.shape[1])))


def _prepare_fused_operands(params, batch, height, width):
    inv_std = 1.0 / CLIP_STD
    # Fold CLIP normalization (x - mean)/std into the stage-0 affine layer.
    w0 = params["w0"] * inv_std[:, None]                               # (3, 32)
    b0 = params["b0"] - (CLIP_MEAN * inv_std)[None, :] @ params["w0"]  # (1, 32)

    w_blocks = [_pad2d(w0, IMG_C_PAD, LANE)]
    b_rows = [_pad2d(b0, 1, LANE)]
    for i in range(1, _NUM_STAGES):
        w_blocks.append(_pad2d(params[f"w{i}"], LANE, LANE))
        b_rows.append(_pad2d(params[f"b{i}"], 1, LANE))
    w_blocks.append(_pad2d(params["w_fc"], LANE, LANE))
    b_rows.append(_pad2d(params["b_fc"], 1, LANE))
    b_rows.append(jnp.zeros((8 - len(b_rows), LANE), jnp.float32))

    inv_counts, hh, ww = [], height, width
    for i in range(_NUM_STAGES):
        hh, ww = hh // 2, ww // 2
        inv_counts.append(1.0 / float(batch * hh * ww * _STAGE_CHANNELS[i + 1]))

    return dict(
        w_slab=jnp.concatenate(w_blocks, axis=0).astype(COMPUTE_DTYPE),  # (656,128)
        b_slab=jnp.concatenate(b_rows, axis=0).astype(jnp.float32),      # (8,128)
        inv_counts=tuple(inv_counts),
        pooled_spatial=hh * ww,
        batch=batch,
    )


def fused_clip_conv_loss(rows, ops):
    kernel = functools.partial(
        _fused_clip_conv_loss_kernel,
        batch=ops["batch"],
        pooled_spatial=ops["pooled_spatial"],
        inv_counts=ops["inv_counts"],
        eps=1e-8,
    )
    vmem = pl.BlockSpec(memory_space=pltpu.MemorySpace.VMEM)
    # TODO(synk): at real CLIP resolution (224x224) the whole-image activations
    # exceed v7x's 64 MiB VMEM; the Morton layout makes a row-tiled grid
    # (chunks of 4**_NUM_STAGES rows, loss axis "arbitrary", row axis
    # "parallel" for the two v7x TensorCores) a drop-in extension.
    return pl.pallas_call(
        kernel,
        out_shape=jax.ShapeDtypeStruct((_NUM_STAGES + 1,), jnp.float32),
        in_specs=[vmem, vmem, vmem],
        out_specs=pl.BlockSpec(memory_space=pltpu.MemorySpace.SMEM),
        scratch_shapes=[pltpu.VMEM((rows.shape[0], LANE), jnp.float32)],
    )(rows, ops["w_slab"], ops["b_slab"])


# ----------------------------------------------------------------------------
# Surrogate backbone parameters (deterministic, no checkpoint)
# ----------------------------------------------------------------------------
def init_params(seed=42):
    key = jax.random.PRNGKey(seed)
    params = {}
    for i, (cin, cout) in enumerate(zip(_STAGE_CHANNELS[:-1], _STAGE_CHANNELS[1:])):
        key, kw, kb = jax.random.split(key, 3)
        params[f"w{i}"] = (
            jax.random.normal(kw, (cin, cout), jnp.float32) / jnp.sqrt(float(cin))
        )
        params[f"b{i}"] = 0.01 * jax.random.normal(kb, (1, cout), jnp.float32)
    key, kw, kb = jax.random.split(key, 3)
    params["w_fc"] = (
        jax.random.normal(kw, (_STAGE_CHANNELS[-1], _FC_DIM), jnp.float32)
        / jnp.sqrt(float(_STAGE_CHANNELS[-1]))
    )
    params["b_fc"] = 0.01 * jax.random.normal(kb, (1, _FC_DIM), jnp.float32)
    return params


# ----------------------------------------------------------------------------
# Loss.forward (losses_to_apply = ['clip_conv_loss'])
# ----------------------------------------------------------------------------
def loss_forward(sketch_nchw, target_nchw, params,
                 conv_layer_weights=CLIP_CONV_LAYER_WEIGHTS,
                 fc_loss_weight=CLIP_FC_LOSS_WEIGHT):
    xs = sketch_nchw.astype(jnp.float32)
    ys = jax.lax.stop_gradient(target_nchw.astype(jnp.float32))  # detach target
    b, c, h, w = xs.shape
    assert c == 3 and h == w and (h & (h - 1)) == 0 and h >= (1 << _NUM_STAGES), \
        "need 3 channels and square power-of-two spatial dims >= 32"

    # TODO(synk): train-mode stochastic augmentations (RandomPerspective /
    # RandomResizedCrop) have no clean Pallas equivalent; effectively num_aug_clip=0.

    perm = _morton_perm(h, w)                 # trace-time constant permutation
    ops = _prepare_fused_operands(params, b, h, w)

    def to_rows(img_nchw):
        flat = img_nchw.reshape(b, c, h * w)
        flat = jnp.take(flat, perm, axis=2)                 # Morton spatial order
        rows = jnp.transpose(flat, (0, 2, 1)).reshape(b * h * w, c)
        pad = jnp.zeros((b * h * w, IMG_C_PAD - c), jnp.float32)
        return jnp.concatenate([rows, pad], axis=1).astype(COMPUTE_DTYPE)

    # Sketch rows then target rows, stacked along M -> one matmul per stage.
    rows = jnp.concatenate([to_rows(xs), to_rows(ys)], axis=0)

    # One fused kernel: both feature pipelines + all 5 L2 losses + FC cosine.
    loss_vec = fused_clip_conv_loss(rows, ops)

    # Mirrors Loss.forward: initial zero entry for 'clip_conv_loss' with coeff
    # 1.0 (kept shape (1,) to match torch.tensor([0.0]) in the reference).
    losses = {"clip_conv_loss": jnp.zeros((1,), jnp.float32)}
    for layer, wgt in enumerate(conv_layer_weights):
        if wgt:
            losses[f"clip_conv_loss_layer{layer}"] = loss_vec[layer] * wgt
    if fc_loss_weight:
        losses["fc"] = loss_vec[_NUM_STAGES] * fc_loss_weight
    return losses


# ----------------------------------------------------------------------------
if __name__ == "__main__":
    key = jax.random.PRNGKey(0)
    k_s, k_t = jax.random.split(key)
    B, C, H, W = 1, 3, 32, 32                     # sketch/target: [1, C, H, W]
    sketch = jax.random.uniform(k_s, (B, C, H, W), jnp.float32)
    target = jax.random.uniform(k_t, (B, C, H, W), jnp.float32)

    params = init_params(seed=42)

    loss_fn = jax.jit(loss_forward)
    losses = loss_fn(sketch, target, params)

    for leaf in jax.tree_util.tree_leaves(losses):
        jax.block_until_ready(leaf)

    print("KERNEL_OK")
</pallas_src>

<mosaic_0001>
module attributes {stable_mosaic.version = 11 : i64} {
  func.func @_fused_clip_conv_loss_kernel(%arg0: memref<2048x16xbf16, #tpu.memory_space<vmem>>, %arg1: memref<656x128xbf16, #tpu.memory_space<vmem>>, %arg2: memref<8x128xf32, #tpu.memory_space<vmem>>, %arg3: memref<6xf32, #tpu.memory_space<smem>>, %arg4: memref<2048x128xf32, #tpu.memory_space<vmem>>) attributes {dimension_semantics = [], scalar_prefetch = 0 : i64, scratch_operands = 1 : i64, tpu.core_type = #tpu.core_type<tc>} {
    %c0 = arith.constant 0 : index
    %c0_0 = arith.constant 0 : index
    %0 = vector.load %arg0[%c0, %c0_0] : memref<2048x16xbf16, #tpu.memory_space<vmem>>, vector<2048x16xbf16>
    %c0_1 = arith.constant 0 : index
    %c0_2 = arith.constant 0 : index
    %1 = vector.load %arg1[%c0_1, %c0_2] : memref<656x128xbf16, #tpu.memory_space<vmem>>, vector<16x128xbf16>
    %c0_3 = arith.constant 0 : index
    %c0_4 = arith.constant 0 : index
    %2 = vector.load %arg2[%c0_3, %c0_4] : memref<8x128xf32, #tpu.memory_space<vmem>>, vector<1x128xf32>
    %cst = arith.constant dense<0.000000e+00> : vector<2048x128xf32>
    %3 = tpu.matmul %0, %1, %cst {dimension_numbers = #tpu.dot_dimension_numbers<[1], [0], [0], [1], [0, 0, 1, 1], [], []>} : vector<2048x16xbf16>, vector<16x128xbf16>, vector<2048x128xf32> -> vector<2048x128xf32>
    %4 = vector.broadcast %2 : vector<1x128xf32> to vector<2048x128xf32>
    %5 = arith.addf %3, %4 : vector<2048x128xf32>
    %cst_5 = arith.constant 0.000000e+00 : f32
    %6 = vector.broadcast %cst_5 : f32 to vector<2048x128xf32>
    %7 = arith.maximumf %5, %6 : vector<2048x128xf32>
    %c0_6 = arith.constant 0 : index
    %c0_7 = arith.constant 0 : index
    %8 = vector.load %arg4[%c0_6, %c0_7] : memref<2048x128xf32, #tpu.memory_space<vmem>>, vector<2048x128xf32>
    tpu.vector_store %arg4[%c0_6, %c0_7], %7 {strides = array<i32>} : memref<2048x128xf32, #tpu.memory_space<vmem>>, vector<2048x128xf32>,
    %c0_8 = arith.constant 0 : index
    %c0_9 = arith.constant 0 : index
    %9 = tpu.strided_load %arg4[%c0_8, %c0_9] {strides = array<i32: 4, 1>} : memref<2048x128xf32, #tpu.memory_space<vmem>>, vector<512x128xf32>
    %c1 = arith.constant 1 : index
    %c0_10 = arith.constant 0 : index
    %10 = tpu.strided_load %arg4[%c1, %c0_10] {strides = array<i32: 4, 1>} : memref<2048x128xf32, #tpu.memory_space<vmem>>, vector<512x128xf32>
    %11 = arith.addf %9, %10 : vector<512x128xf32>
    %c2 = arith.constant 2 : index
    %c0_11 = arith.constant 0 : index
    %12 = tpu.strided_load %arg4[%c2, %c0_11] {strides = array<i32: 4, 1>} : memref<2048x128xf32, #tpu.memory_space<vmem>>, vector<512x128xf32>
    %13 = arith.addf %11, %12 : vector<512x128xf32>
    %c3 = arith.constant 3 : index
    %c0_12 = arith.constant 0 : index
    %14 = tpu.strided_load %arg4[%c3, %c0_12] {strides = array<i32: 4, 1>} : memref<2048x128xf32, #tpu.memory_space<vmem>>, vector<512x128xf32>
    %15 = arith.addf %13, %14 : vector<512x128xf32>
    %cst_13 = arith.constant 2.500000e-01 : f32
    %16 = vector.broadcast %cst_13 : f32 to vector<512x128xf32>
    %17 = arith.mulf %15, %16 : vector<512x128xf32>
    %18 = vector.extract_strided_slice %17 {offsets = [0, 0], sizes = [256, 128], strides = [1, 1]} : vector<512x128xf32> to vector<256x128xf32>
    %19 = vector.extract_strided_slice %17 {offsets = [256, 0], sizes = [256, 128], strides = [1, 1]} : vector<512x128xf32> to vector<256x128xf32>
    %20 = arith.subf %18, %19 : vector<256x128xf32>
    %21 = arith.mulf %20, %20 : vector<256x128xf32>
    %22 = vector.shape_cast %21 : vector<256x128xf32> to vector<1x256x128xf32>
    %cst_14 = arith.constant dense<0.000000e+00> : vector<1xf32>
    %23 = vector.multi_reduction <add>, %22, %cst_14 [1, 2] : vector<1x256x128xf32> to vector<1xf32>
    %24 = vector.shape_cast %23 : vector<1xf32> to vector<1x1x1xf32>
    %25 = vector.extract %24[0, 0, 0] : f32 from vector<1x1x1xf32>
    %cst_15 = arith.constant 1.22070313E-4 : f32
    %26 = arith.mulf %25, %cst_15 : f32
    %c0_16 = arith.constant 0 : index
    %27 = memref.load %arg3[%c0_16] : memref<6xf32, #tpu.memory_space<smem>>
    memref.store %26, %arg3[%c0_16] : memref<6xf32, #tpu.memory_space<smem>>
    %28 = arith.truncf %17 : vector<512x128xf32> to vector<512x128xbf16>
    %c16 = arith.constant 16 : index
    %c0_17 = arith.constant 0 : index
    %29 = vector.load %arg1[%c16, %c0_17] : memref<656x128xbf16, #tpu.memory_space<vmem>>, vector<128x128xbf16>
    %c1_18 = arith.constant 1 : index
    %c0_19 = arith.constant 0 : index
    %30 = vector.load %arg2[%c1_18, %c0_19] : memref<8x128xf32, #tpu.memory_space<vmem>>, vector<1x128xf32>
    %cst_20 = arith.constant dense<0.000000e+00> : vector<512x128xf32>
    %31 = tpu.matmul %28, %29, %cst_20 {dimension_numbers = #tpu.dot_dimension_numbers<[1], [0], [0], [1], [0, 0, 1, 1], [], []>} : vector<512x128xbf16>, vector<128x128xbf16>, vector<512x128xf32> -> vector<512x128xf32>
    %32 = vector.broadcast %30 : vector<1x128xf32> to vector<512x128xf32>
    %33 = arith.addf %31, %32 : vector<512x128xf32>
    %cst_21 = arith.constant 0.000000e+00 : f32
    %34 = vector.broadcast %cst_21 : f32 to vector<512x128xf32>
    %35 = arith.maximumf %33, %34 : vector<512x128xf32>
    %c0_22 = arith.constant 0 : index
    %c0_23 = arith.constant 0 : index
    %36 = vector.load %arg4[%c0_22, %c0_23] : memref<2048x128xf32, #tpu.memory_space<vmem>>, vector<512x128xf32>
    tpu.vector_store %arg4[%c0_22, %c0_23], %35 {strides = array<i32>} : memref<2048x128xf32, #tpu.memory_space<vmem>>, vector<512x128xf32>,
    %c0_24 = arith.constant 0 : index
    %c0_25 = arith.constant 0 : index
    %37 = tpu.strided_load %arg4[%c0_24, %c0_25] {strides = array<i32: 4, 1>} : memref<2048x128xf32, #tpu.memory_space<vmem>>, vector<128x128xf32>
    %c1_26 = arith.constant 1 : index
    %c0_27 = arith.constant 0 : index
    %38 = tpu.strided_load %arg4[%c1_26, %c0_27] {strides = array<i32: 4, 1>} : memref<2048x128xf32, #tpu.memory_space<vmem>>, vector<128x128xf32>
    %39 = arith.addf %37, %38 : vector<128x128xf32>
    %c2_28 = arith.constant 2 : index
    %c0_29 = arith.constant 0 : index
    %40 = tpu.strided_load %arg4[%c2_28, %c0_29] {strides = array<i32: 4, 1>} : memref<2048x128xf32, #tpu.memory_space<vmem>>, vector<128x128xf32>
    %41 = arith.addf %39, %40 : vector<128x128xf32>
    %c3_30 = arith.constant 3 : index
    %c0_31 = arith.constant 0 : index
    %42 = tpu.strided_load %arg4[%c3_30, %c0_31] {strides = array<i32: 4, 1>} : memref<2048x128xf32, #tpu.memory_space<vmem>>, vector<128x128xf32>
    %43 = arith.addf %41, %42 : vector<128x128xf32>
    %cst_32 = arith.constant 2.500000e-01 : f32
    %44 = vector.broadcast %cst_32 : f32 to vector<128x128xf32>
    %45 = arith.mulf %43, %44 : vector<128x128xf32>
    %46 = vector.extract_strided_slice %45 {offsets = [0, 0], sizes = [64, 128], strides = [1, 1]} : vector<128x128xf32> to vector<64x128xf32>
    %47 = vector.extract_strided_slice %45 {offsets = [64, 0], sizes = [64, 128], strides = [1, 1]} : vector<128x128xf32> to vector<64x128xf32>
    %48 = arith.subf %46, %47 : vector<64x128xf32>
    %49 = arith.mulf %48, %48 : vector<64x128xf32>
    %50 = vector.shape_cast %49 : vector<64x128xf32> to vector<1x64x128xf32>
    %cst_33 = arith.constant dense<0.000000e+00> : vector<1xf32>
    %51 = vector.multi_reduction <add>, %50, %cst_33 [1, 2] : vector<1x64x128xf32> to vector<1xf32>
    %52 = vector.shape_cast %51 : vector<1xf32> to vector<1x1x1xf32>
    %53 = vector.extract %52[0, 0, 0] : f32 from vector<1x1x1xf32>
    %cst_34 = arith.constant 2.44140625E-4 : f32
    %54 = arith.mulf %53, %cst_34 : f32
    %c1_35 = arith.constant 1 : index
    %55 = memref.load %arg3[%c1_35] : memref<6xf32, #tpu.memory_space<smem>>
    memref.store %54, %arg3[%c1_35] : memref<6xf32, #tpu.memory_space<smem>>
    %56 = arith.truncf %45 : vector<128x128xf32> to vector<128x128xbf16>
    %c144 = arith.constant 144 : index
    %c0_36 = arith.constant 0 : index
    %57 = vector.load %arg1[%c144, %c0_36] : memref<656x128xbf16, #tpu.memory_space<vmem>>, vector<128x128xbf16>
    %c2_37 = arith.constant 2 : index
    %c0_38 = arith.constant 0 : index
    %58 = vector.load %arg2[%c2_37, %c0_38] : memref<8x128xf32, #tpu.memory_space<vmem>>, vector<1x128xf32>
    %cst_39 = arith.constant dense<0.000000e+00> : vector<128x128xf32>
    %59 = tpu.matmul %56, %57, %cst_39 {dimension_numbers = #tpu.dot_dimension_numbers<[1], [0], [0], [1], [0, 0, 1, 1], [], []>} : vector<128x128xbf16>, vector<128x128xbf16>, vector<128x128xf32> -> vector<128x128xf32>
    %60 = vector.broadcast %58 : vector<1x128xf32> to vector<128x128xf32>
    %61 = arith.addf %59, %60 : vector<128x128xf32>
    %cst_40 = arith.constant 0.000000e+00 : f32
    %62 = vector.broadcast %cst_40 : f32 to vector<128x128xf32>
    %63 = arith.maximumf %61, %62 : vector<128x128xf32>
    %c0_41 = arith.constant 0 : index
    %c0_42 = arith.constant 0 : index
    %64 = vector.load %arg4[%c0_41, %c0_42] : memref<2048x128xf32, #tpu.memory_space<vmem>>, vector<128x128xf32>
    tpu.vector_store %arg4[%c0_41, %c0_42], %63 {strides = array<i32>} : memref<2048x128xf32, #tpu.memory_space<vmem>>, vector<128x128xf32>,
    %c0_43 = arith.constant 0 : index
    %c0_44 = arith.constant 0 : index
    %65 = tpu.strided_load %arg4[%c0_43, %c0_44] {strides = array<i32: 4, 1>} : memref<2048x128xf32, #tpu.memory_space<vmem>>, vector<32x128xf32>
    %c1_45 = arith.constant 1 : index
    %c0_46 = arith.constant 0 : index
    %66 = tpu.strided_load %arg4[%c1_45, %c0_46] {strides = array<i32: 4, 1>} : memref<2048x128xf32, #tpu.memory_space<vmem>>, vector<32x128xf32>
    %67 = arith.addf %65, %66 : vector<32x128xf32>
    %c2_47 = arith.constant 2 : index
    %c0_48 = arith.constant 0 : index
    %68 = tpu.strided_load %arg4[%c2_47, %c0_48] {strides = array<i32: 4, 1>} : memref<2048x128xf32, #tpu.memory_space<vmem>>, vector<32x128xf32>
    %69 = arith.addf %67, %68 : vector<32x128xf32>
    %c3_49 = arith.constant 3 : index
    %c0_50 = arith.constant 0 : index
    %70 = tpu.strided_load %arg4[%c3_49, %c0_50] {strides = array<i32: 4, 1>} : memref<2048x128xf32, #tpu.memory_space<vmem>>, vector<32x128xf32>
    %71 = arith.addf %69, %70 : vector<32x128xf32>
    %cst_51 = arith.constant 2.500000e-01 : f32
    %72 = vector.broadcast %cst_51 : f32 to vector<32x128xf32>
    %73 = arith.mulf %71, %72 : vector<32x128xf32>
    %74 = vector.extract_strided_slice %73 {offsets = [0, 0], sizes = [16, 128], strides = [1, 1]} : vector<32x128xf32> to vector<16x128xf32>
    %75 = vector.extract_strided_slice %73 {offsets = [16, 0], sizes = [16, 128], strides = [1, 1]} : vector<32x128xf32> to vector<16x128xf32>
    %76 = arith.subf %74, %75 : vector<16x128xf32>
    %77 = arith.mulf %76, %76 : vector<16x128xf32>
    %78 = vector.shape_cast %77 : vector<16x128xf32> to vector<1x16x128xf32>
    %cst_52 = arith.constant dense<0.000000e+00> : vector<1xf32>
    %79 = vector.multi_reduction <add>, %78, %cst_52 [1, 2] : vector<1x16x128xf32> to vector<1xf32>
    %80 = vector.shape_cast %79 : vector<1xf32> to vector<1x1x1xf32>
    %81 = vector.extract %80[0, 0, 0] : f32 from vector<1x1x1xf32>
    %cst_53 = arith.constant 9.765625E-4 : f32
    %82 = arith.mulf %81, %cst_53 : f32
    %c2_54 = arith.constant 2 : index
    %83 = memref.load %arg3[%c2_54] : memref<6xf32, #tpu.memory_space<smem>>
    memref.store %82, %arg3[%c2_54] : memref<6xf32, #tpu.memory_space<smem>>
    %84 = arith.truncf %73 : vector<32x128xf32> to vector<32x128xbf16>
    %c272 = arith.constant 272 : index
    %c0_55 = arith.constant 0 : index
    %85 = vector.load %arg1[%c272, %c0_55] : memref<656x128xbf16, #tpu.memory_space<vmem>>, vector<128x128xbf16>
    %c3_56 = arith.constant 3 : index
    %c0_57 = arith.constant 0 : index
    %86 = vector.load %arg2[%c3_56, %c0_57] : memref<8x128xf32, #tpu.memory_space<vmem>>, vector<1x128xf32>
    %cst_58 = arith.constant dense<0.000000e+00> : vector<32x128xf32>
    %87 = tpu.matmul %84, %85, %cst_58 {dimension_numbers = #tpu.dot_dimension_numbers<[1], [0], [0], [1], [0, 0, 1, 1], [], []>} : vector<32x128xbf16>, vector<128x128xbf16>, vector<32x128xf32> -> vector<32x128xf32>
    %88 = vector.broadcast %86 : vector<1x128xf32> to vector<32x128xf32>
    %89 = arith.addf %87, %88 : vector<32x128xf32>
    %cst_59 = arith.constant 0.000000e+00 : f32
    %90 = vector.broadcast %cst_59 : f32 to vector<32x128xf32>
    %91 = arith.maximumf %89, %90 : vector<32x128xf32>
    %c0_60 = arith.constant 0 : index
    %c0_61 = arith.constant 0 : index
    %92 = vector.load %arg4[%c0_60, %c0_61] : memref<2048x128xf32, #tpu.memory_space<vmem>>, vector<32x128xf32>
    tpu.vector_store %arg4[%c0_60, %c0_61], %91 {strides = array<i32>} : memref<2048x128xf32, #tpu.memory_space<vmem>>, vector<32x128xf32>,
    %c0_62 = arith.constant 0 : index
    %c0_63 = arith.constant 0 : index
    %93 = tpu.strided_load %arg4[%c0_62, %c0_63] {strides = array<i32: 4, 1>} : memref<2048x128xf32, #tpu.memory_space<vmem>>, vector<8x128xf32>
    %c1_64 = arith.constant 1 : index
    %c0_65 = arith.constant 0 : index
    %94 = tpu.strided_load %arg4[%c1_64, %c0_65] {strides = array<i32: 4, 1>} : memref<2048x128xf32, #tpu.memory_space<vmem>>, vector<8x128xf32>
    %95 = arith.addf %93, %94 : vector<8x128xf32>
    %c2_66 = arith.constant 2 : index
    %c0_67 = arith.constant 0 : index
    %96 = tpu.strided_load %arg4[%c2_66, %c0_67] {strides = array<i32: 4, 1>} : memref<2048x128xf32, #tpu.memory_space<vmem>>, vector<8x128xf32>
    %97 = arith.addf %95, %96 : vector<8x128xf32>
    %c3_68 = arith.constant 3 : index
    %c0_69 = arith.constant 0 : index
    %98 = tpu.strided_load %arg4[%c3_68, %c0_69] {strides = array<i32: 4, 1>} : memref<2048x128xf32, #tpu.memory_space<vmem>>, vector<8x128xf32>
    %99 = arith.addf %97, %98 : vector<8x128xf32>
    %cst_70 = arith.constant 2.500000e-01 : f32
    %100 = vector.broadcast %cst_70 : f32 to vector<8x128xf32>
    %101 = arith.mulf %99, %100 : vector<8x128xf32>
    %102 = vector.extract_strided_slice %101 {offsets = [0, 0], sizes = [4, 128], strides = [1, 1]} : vector<8x128xf32> to vector<4x128xf32>
    %103 = vector.extract_strided_slice %101 {offsets = [4, 0], sizes = [4, 128], strides = [1, 1]} : vector<8x128xf32> to vector<4x128xf32>
    %104 = arith.subf %102, %103 : vector<4x128xf32>
    %105 = arith.mulf %104, %104 : vector<4x128xf32>
    %106 = vector.shape_cast %105 : vector<4x128xf32> to vector<1x4x128xf32>
    %cst_71 = arith.constant dense<0.000000e+00> : vector<1xf32>
    %107 = vector.multi_reduction <add>, %106, %cst_71 [1, 2] : vector<1x4x128xf32> to vector<1xf32>
    %108 = vector.shape_cast %107 : vector<1xf32> to vector<1x1x1xf32>
    %109 = vector.extract %108[0, 0, 0] : f32 from vector<1x1x1xf32>
    %cst_72 = arith.constant 0.001953125 : f32
    %110 = arith.mulf %109, %cst_72 : f32
    %c3_73 = arith.constant 3 : index
    %111 = memref.load %arg3[%c3_73] : memref<6xf32, #tpu.memory_space<smem>>
    memref.store %110, %arg3[%c3_73] : memref<6xf32, #tpu.memory_space<smem>>
    %112 = arith.truncf %101 : vector<8x128xf32> to vector<8x128xbf16>
    %c400 = arith.constant 400 : index
    %c0_74 = arith.constant 0 : index
    %113 = vector.load %arg1[%c400, %c0_74] : memref<656x128xbf16, #tpu.memory_space<vmem>>, vector<128x128xbf16>
    %c4 = arith.constant 4 : index
    %c0_75 = arith.constant 0 : index
    %114 = vector.load %arg2[%c4, %c0_75] : memref<8x128xf32, #tpu.memory_space<vmem>>, vector<1x128xf32>
    %cst_76 = arith.constant dense<0.000000e+00> : vector<8x128xf32>
    %115 = tpu.matmul %112, %113, %cst_76 {dimension_numbers = #tpu.dot_dimension_numbers<[1], [0], [0], [1], [0, 0, 1, 1], [], []>} : vector<8x128xbf16>, vector<128x128xbf16>, vector<8x128xf32> -> vector<8x128xf32>
    %116 = vector.broadcast %114 : vector<1x128xf32> to vector<8x128xf32>
    %117 = arith.addf %115, %116 : vector<8x128xf32>
    %cst_77 = arith.constant 0.000000e+00 : f32
    %118 = vector.broadcast %cst_77 : f32 to vector<8x128xf32>
    %119 = arith.maximumf %117, %118 : vector<8x128xf32>
    %c0_78 = arith.constant 0 : index
    %c0_79 = arith.constant 0 : index
    %120 = vector.load %arg4[%c0_78, %c0_79] : memref<2048x128xf32, #tpu.memory_space<vmem>>, vector<8x128xf32>
    tpu.vector_store %arg4[%c0_78, %c0_79], %119 {strides = array<i32>} : memref<2048x128xf32, #tpu.memory_space<vmem>>, vector<8x128xf32>,
    %c0_80 = arith.constant 0 : index
    %c0_81 = arith.constant 0 : index
    %121 = tpu.strided_load %arg4[%c0_80, %c0_81] {strides = array<i32: 4, 1>} : memref<2048x128xf32, #tpu.memory_space<vmem>>, vector<2x128xf32>
    %c1_82 = arith.constant 1 : index
    %c0_83 = arith.constant 0 : index
    %122 = tpu.strided_load %arg4[%c1_82, %c0_83] {strides = array<i32: 4, 1>} : memref<2048x128xf32, #tpu.memory_space<vmem>>, vector<2x128xf32>
    %123 = arith.addf %121, %122 : vector<2x128xf32>
    %c2_84 = arith.constant 2 : index
    %c0_85 = arith.constant 0 : index
    %124 = tpu.strided_load %arg4[%c2_84, %c0_85] {strides = array<i32: 4, 1>} : memref<2048x128xf32, #tpu.memory_space<vmem>>, vector<2x128xf32>
    %125 = arith.addf %123, %124 : vector<2x128xf32>
    %c3_86 = arith.constant 3 : index
    %c0_87 = arith.constant 0 : index
    %126 = tpu.strided_load %arg4[%c3_86, %c0_87] {strides = array<i32: 4, 1>} : memref<2048x128xf32, #tpu.memory_space<vmem>>, vector<2x128xf32>
    %127 = arith.addf %125, %126 : vector<2x128xf32>
    %cst_88 = arith.constant 2.500000e-01 : f32
    %128 = vector.broadcast %cst_88 : f32 to vector<2x128xf32>
    %129 = arith.mulf %127, %128 : vector<2x128xf32>
    %130 = vector.extract_strided_slice %129 {offsets = [0, 0], sizes = [1, 128], strides = [1, 1]} : vector<2x128xf32> to vector<1x128xf32>
    %131 = vector.extract_strided_slice %129 {offsets = [1, 0], sizes = [1, 128], strides = [1, 1]} : vector<2x128xf32> to vector<1x128xf32>
    %132 = arith.subf %130, %131 : vector<1x128xf32>
    %133 = arith.mulf %132, %132 : vector<1x128xf32>
    %134 = vector.shape_cast %133 : vector<1x128xf32> to vector<1x1x128xf32>
    %cst_89 = arith.constant dense<0.000000e+00> : vector<1xf32>
    %135 = vector.multi_reduction <add>, %134, %cst_89 [1, 2] : vector<1x1x128xf32> to vector<1xf32>
    %136 = vector.shape_cast %135 : vector<1xf32> to vector<1x1x1xf32>
    %137 = vector.extract %136[0, 0, 0] : f32 from vector<1x1x1xf32>
    %cst_90 = arith.constant 7.812500e-03 : f32
    %138 = arith.mulf %137, %cst_90 : f32
    %c4_91 = arith.constant 4 : index
    %139 = memref.load %arg3[%c4_91] : memref<6xf32, #tpu.memory_space<smem>>
    memref.store %138, %arg3[%c4_91] : memref<6xf32, #tpu.memory_space<smem>>
    %c528 = arith.constant 528 : index
    %c0_92 = arith.constant 0 : index
    %140 = vector.load %arg1[%c528, %c0_92] : memref<656x128xbf16, #tpu.memory_space<vmem>>, vector<128x128xbf16>
    %c5 = arith.constant 5 : index
    %c0_93 = arith.constant 0 : index
    %141 = vector.load %arg2[%c5, %c0_93] : memref<8x128xf32, #tpu.memory_space<vmem>>, vector<1x128xf32>
    %142 = arith.truncf %129 : vector<2x128xf32> to vector<2x128xbf16>
    %cst_94 = arith.constant dense<0.000000e+00> : vector<2x128xf32>
    %143 = tpu.matmul %142, %140, %cst_94 {dimension_numbers = #tpu.dot_dimension_numbers<[1], [0], [0], [1], [0, 0, 1, 1], [], []>} : vector<2x128xbf16>, vector<128x128xbf16>, vector<2x128xf32> -> vector<2x128xf32>
    %144 = vector.broadcast %141 : vector<1x128xf32> to vector<2x128xf32>
    %145 = arith.addf %143, %144 : vector<2x128xf32>
    %146 = vector.extract_strided_slice %145 {offsets = [0, 0], sizes = [1, 128], strides = [1, 1]} : vector<2x128xf32> to vector<1x128xf32>
    %147 = vector.extract_strided_slice %145 {offsets = [1, 0], sizes = [1, 128], strides = [1, 1]} : vector<2x128xf32> to vector<1x128xf32>
    %148 = arith.mulf %146, %147 : vector<1x128xf32>
    %cst_95 = arith.constant dense<0.000000e+00> : vector<1xf32>
    %149 = vector.multi_reduction <add>, %148, %cst_95 [1] : vector<1x128xf32> to vector<1xf32>
    %150 = vector.shape_cast %149 : vector<1xf32> to vector<1x1xf32>
    %151 = arith.mulf %146, %146 : vector<1x128xf32>
    %cst_96 = arith.constant dense<0.000000e+00> : vector<1xf32>
    %152 = vector.multi_reduction <add>, %151, %cst_96 [1] : vector<1x128xf32> to vector<1xf32>
    %153 = vector.shape_cast %152 : vector<1xf32> to vector<1x1xf32>
    %154 = arith.mulf %147, %147 : vector<1x128xf32>
    %cst_97 = arith.constant dense<0.000000e+00> : vector<1xf32>
    %155 = vector.multi_reduction <add>, %154, %cst_97 [1] : vector<1x128xf32> to vector<1xf32>
    %156 = vector.shape_cast %155 : vector<1xf32> to vector<1x1xf32>
    %157 = arith.mulf %153, %156 : vector<1x1xf32>
    %cst_98 = arith.constant 1.000000e-16 : f32
    %158 = vector.broadcast %cst_98 : f32 to vector<1x1xf32>
    %159 = arith.maximumf %157, %158 : vector<1x1xf32>
    %160 = math.rsqrt %159 : vector<1x1xf32>
    %161 = arith.mulf %150, %160 : vector<1x1xf32>
    %cst_99 = arith.constant 1.000000e+00 : f32
    %162 = vector.broadcast %cst_99 : f32 to vector<1x1xf32>
    %163 = arith.subf %162, %161 : vector<1x1xf32>
    %164 = vector.shape_cast %163 : vector<1x1xf32> to vector<1x1x1xf32>
    %cst_100 = arith.constant dense<0.000000e+00> : vector<1xf32>
    %165 = vector.multi_reduction <add>, %164, %cst_100 [1, 2] : vector<1x1x1xf32> to vector<1xf32>
    %166 = vector.shape_cast %165 : vector<1xf32> to vector<1x1x1xf32>
    %167 = vector.extract %166[0, 0, 0] : f32 from vector<1x1x1xf32>
    %cst_101 = arith.constant 1.000000e+00 : f32
    %168 = arith.divf %167, %cst_101 : f32
    %c5_102 = arith.constant 5 : index
    %169 = memref.load %arg3[%c5_102] : memref<6xf32, #tpu.memory_space<smem>>
    memref.store %168, %arg3[%c5_102] : memref<6xf32, #tpu.memory_space<smem>>
    return
  }
}

</mosaic_0001>

<llo_original>
// kernel: loss_forward.1
$region0: #{loss_forward.1}
  #allocation0 [shape = 'u32[]', space=smem, size = 0x4, offset = 0x4, fixed_abs, tag = 'smem constant byte address 0x4 - core index']
  #allocation1 [shape = 'u32[144,128]{1,0:T(1,128)}', space=vmem, size = 0x12000, scoped, tag = 'internal scratch']
  #allocation2 [shape = 'f32[2048,128]{1,0:T(8,128)}', space=vmem, size = 0x100000, scoped, tag = 'scratch operand']
  %s0 = inlined_call_operand.vmem [shape: bf16[2048,16], index: 0, kind: input, shape index: {}]
  %s1 = inlined_call_operand.vmem [shape: bf16[656,128], index: 1, kind: input, shape index: {}]
  %s2 = inlined_call_operand.vmem [shape: f32[8,128], index: 2, kind: input, shape index: {}]
  %s3 = inlined_call_operand.vmem [shape: f32[6], index: 3, kind: output, shape index: {}]
  %s4 = sld [smem:[#allocation0]]
  $region22: #{loss_forward.1} parent=0
    _
  %s6 = ssub.s32 1, %s4
  %s7 = scalar_select 0, %s6, %s4
  $region1: #{loss_forward.1} parent=0
    #allocation3 [shape = 'u8[512]{0}', space=smem, size = 0x200, scoped, tag = 'output window, operand 0, single buffered']
    #allocation4 [shape = 's32[1]{0}', space=sflag, size = 0x4, scoped, tag = 'scoped memory for loss_forward.1']
    %8 = vsyncpa [#allocation4], 0
    // Predicated region
    $region2: #{loss_forward.1} parent=1 // pred_check
      _
    $region3: #{loss_forward.1} parent=1 // pred_check_branch
      %10 = sbr.rel (0) target = $region5
    $region4: #{loss_forward.1} parent=1 // pred_region
      _
    $region5: #{loss_forward.1} parent=1 // pred_fallthru
      _
    // Predicated region
    $region6: #{loss_forward.1} parent=1 // pred_check
      _
    $region7: #{loss_forward.1} parent=1 // pred_check_branch
      %12 = sbr.rel (0) target = $region9
    $region8: #{loss_forward.1} parent=1 // pred_region
      _
    $region9: #{loss_forward.1} parent=1 // pred_fallthru
      _
    // Predicated region
    $region10: #{loss_forward.1} parent=1 // pred_check
      _
    $region11: #{loss_forward.1} parent=1 // pred_check_branch
      %14 = sbr.rel (0) target = $region13
    $region12: #{loss_forward.1} parent=1 // pred_region
      _
    $region13: #{loss_forward.1} parent=1 // pred_fallthru
      _
    %v16 = vld [vmem:[%s0] sm:$0xf]
    %v17 = vld [vmem:[%s0 + $0x4] sm:$0xf]
    %v18 = vld [vmem:[%s0 + $0x8] sm:$0xf]
    %v19 = vld [vmem:[%s0 + $0xc] sm:$0xf]
    %v20 = vld [vmem:[%s0 + $0x10] sm:$0xf]
    %v21 = vld [vmem:[%s0 + $0x14] sm:$0xf]
    %v22 = vld [vmem:[%s0 + $0x18] sm:$0xf]
    %v23 = vld [vmem:[%s0 + $0x1c] sm:$0xf]
    %v24 = vld [vmem:[%s0 + $0x20] sm:$0xf]
    %v25 = vld [vmem:[%s0 + $0x24] sm:$0xf]
    %v26 = vld [vmem:[%s0 + $0x28] sm:$0xf]
    %v27 = vld [vmem:[%s0 + $0x2c] sm:$0xf]
    %v28 = vld [vmem:[%s0 + $0x30] sm:$0xf]
    %v29 = vld [vmem:[%s0 + $0x34] sm:$0xf]
    %v30 = vld [vmem:[%s0 + $0x38] sm:$0xf]
    %v31 = vld [vmem:[%s0 + $0x3c] sm:$0xf]
    %v32 = vld [vmem:[%s0 + $0x40] sm:$0xf]
    %v33 = vld [vmem:[%s0 + $0x44] sm:$0xf]
    %v34 = vld [vmem:[%s0 + $0x48] sm:$0xf]
    %v35 = vld [vmem:[%s0 + $0x4c] sm:$0xf]
    %v36 = vld [vmem:[%s0 + $0x50] sm:$0xf]
    %v37 = vld [vmem:[%s0 + $0x54] sm:$0xf]
    %v38 = vld [vmem:[%s0 + $0x58] sm:$0xf]
    %v39 = vld [vmem:[%s0 + $0x5c] sm:$0xf]
    %v40 = vld [vmem:[%s0 + $0x60] sm:$0xf]
    %v41 = vld [vmem:[%s0 + $0x64] sm:$0xf]
    %v42 = vld [vmem:[%s0 + $0x68] sm:$0xf]
    %v43 = vld [vmem:[%s0 + $0x6c] sm:$0xf]
    %v44 = vld [vmem:[%s0 + $0x70] sm:$0xf]
    %v45 = vld [vmem:[%s0 + $0x74] sm:$0xf]
    %v46 = vld [vmem:[%s0 + $0x78] sm:$0xf]
    %v47 = vld [vmem:[%s0 + $0x7c] sm:$0xf]
    %v48 = vld [vmem:[%s0 + $0x80] sm:$0xf]
    %v49 = vld [vmem:[%s0 + $0x84] sm:$0xf]
    %v50 = vld [vmem:[%s0 + $0x88] sm:$0xf]
    %v51 = vld [vmem:[%s0 + $0x8c] sm:$0xf]
    %v52 = vld [vmem:[%s0 + $0x90] sm:$0xf]
    %v53 = vld [vmem:[%s0 + $0x94] sm:$0xf]
    %v54 = vld [vmem:[%s0 + $0x98] sm:$0xf]
    %v55 = vld [vmem:[%s0 + $0x9c] sm:$0xf]
    %v56 = vld [vmem:[%s0 + $0xa0] sm:$0xf]
    %v57 = vld [vmem:[%s0 + $0xa4] sm:$0xf]
    %v58 = vld [vmem:[%s0 + $0xa8] sm:$0xf]
    %v59 = vld [vmem:[%s0 + $0xac] sm:$0xf]
    %v60 = vld [vmem:[%s0 + $0xb0] sm:$0xf]
    %v61 = vld [vmem:[%s0 + $0xb4] sm:$0xf]
    %v62 = vld [vmem:[%s0 + $0xb8] sm:$0xf]
    %v63 = vld [vmem:[%s0 + $0xbc] sm:$0xf]
    %v64 = vld [vmem:[%s0 + $0xc0] sm:$0xf]
    %v65 = vld [vmem:[%s0 + $0xc4] sm:$0xf]
    %v66 = vld [vmem:[%s0 + $0xc8] sm:$0xf]
    %v67 = vld [vmem:[%s0 + $0xcc] sm:$0xf]
    %v68 = vld [vmem:[%s0 + $0xd0] sm:$0xf]
    %v69 = vld [vmem:[%s0 + $0xd4] sm:$0xf]
    %v70 = vld [vmem:[%s0 + $0xd8] sm:$0xf]
    %v71 = vld [vmem:[%s0 + $0xdc] sm:$0xf]
    %v72 = vld [vmem:[%s0 + $0xe0] sm:$0xf]
    %v73 = vld [vmem:[%s0 + $0xe4] sm:$0xf]
    %v74 = vld [vmem:[%s0 + $0xe8] sm:$0xf]
    %v75 = vld [vmem:[%s0 + $0xec] sm:$0xf]
    %v76 = vld [vmem:[%s0 + $0xf0] sm:$0xf]
    %v77 = vld [vmem:[%s0 + $0xf4] sm:$0xf]
    %v78 = vld [vmem:[%s0 + $0xf8] sm:$0xf]
    %v79 = vld [vmem:[%s0 + $0xfc] sm:$0xf]
    %v80 = vld [vmem:[%s0 + $0x100] sm:$0xf]
    %v81 = vld [vmem:[%s0 + $0x104] sm:$0xf]
    %v82 = vld [vmem:[%s0 + $0x108] sm:$0xf]
    %v83 = vld [vmem:[%s0 + $0x10c] sm:$0xf]
    %v84 = vld [vmem:[%s0 + $0x110] sm:$0xf]
    %v85 = vld [vmem:[%s0 + $0x114] sm:$0xf]
    %v86 = vld [vmem:[%s0 + $0x118] sm:$0xf]
    %v87 = vld [vmem:[%s0 + $0x11c] sm:$0xf]
    %v88 = vld [vmem:[%s0 + $0x120] sm:$0xf]
    %v89 = vld [vmem:[%s0 + $0x124] sm:$0xf]
    %v90 = vld [vmem:[%s0 + $0x128] sm:$0xf]
    %v91 = vld [vmem:[%s0 + $0x12c] sm:$0xf]
    %v92 = vld [vmem:[%s0 + $0x130] sm:$0xf]
    %v93 = vld [vmem:[%s0 + $0x134] sm:$0xf]
    %v94 = vld [vmem:[%s0 + $0x138] sm:$0xf]
    %v95 = vld [vmem:[%s0 + $0x13c] sm:$0xf]
    %v96 = vld [vmem:[%s0 + $0x140] sm:$0xf]
    %v97 = vld [vmem:[%s0 + $0x144] sm:$0xf]
    %v98 = vld [vmem:[%s0 + $0x148] sm:$0xf]
    %v99 = vld [vmem:[%s0 + $0x14c] sm:$0xf]
    %v100 = vld [vmem:[%s0 + $0x150] sm:$0xf]
    %v101 = vld [vmem:[%s0 + $0x154] sm:$0xf]
    %v102 = vld [vmem:[%s0 + $0x158] sm:$0xf]
    %v103 = vld [vmem:[%s0 + $0x15c] sm:$0xf]
    %v104 = vld [vmem:[%s0 + $0x160] sm:$0xf]
    %v105 = vld [vmem:[%s0 + $0x164] sm:$0xf]
    %v106 = vld [vmem:[%s0 + $0x168] sm:$0xf]
    %v107 = vld [vmem:[%s0 + $0x16c] sm:$0xf]
    %v108 = vld [vmem:[%s0 + $0x170] sm:$0xf]
    %v109 = vld [vmem:[%s0 + $0x174] sm:$0xf]
    %v110 = vld [vmem:[%s0 + $0x178] sm:$0xf]
    %v111 = vld [vmem:[%s0 + $0x17c] sm:$0xf]
    %v112 = vld [vmem:[%s0 + $0x180] sm:$0xf]
    %v113 = vld [vmem:[%s0 + $0x184] sm:$0xf]
    %v114 = vld [vmem:[%s0 + $0x188] sm:$0xf]
    %v115 = vld [vmem:[%s0 + $0x18c] sm:$0xf]
    %v116 = vld [vmem:[%s0 + $0x190] sm:$0xf]
    %v117 = vld [vmem:[%s0 + $0x194] sm:$0xf]
    %v118 = vld [vmem:[%s0 + $0x198] sm:$0xf]
    %v119 = vld [vmem:[%s0 + $0x19c] sm:$0xf]
    %v120 = vld [vmem:[%s0 + $0x1a0] sm:$0xf]
    %v121 = vld [vmem:[%s0 + $0x1a4] sm:$0xf]
    %v122 = vld [vmem:[%s0 + $0x1a8] sm:$0xf]
    %v123 = vld [vmem:[%s0 + $0x1ac] sm:$0xf]
    %v124 = vld [vmem:[%s0 + $0x1b0] sm:$0xf]
    %v125 = vld [vmem:[%s0 + $0x1b4] sm:$0xf]
    %v126 = vld [vmem:[%s0 + $0x1b8] sm:$0xf]
    %v127 = vld [vmem:[%s0 + $0x1bc] sm:$0xf]
    %v128 = vld [vmem:[%s0 + $0x1c0] sm:$0xf]
    %v129 = vld [vmem:[%s0 + $0x1c4] sm:$0xf]
    %v130 = vld [vmem:[%s0 + $0x1c8] sm:$0xf]
    %v131 = vld [vmem:[%s0 + $0x1cc] sm:$0xf]
    %v132 = vld [vmem:[%s0 + $0x1d0] sm:$0xf]
    %v133 = vld [vmem:[%s0 + $0x1d4] sm:$0xf]
    %v134 = vld [vmem:[%s0 + $0x1d8] sm:$0xf]
    %v135 = vld [vmem:[%s0 + $0x1dc] sm:$0xf]
    %v136 = vld [vmem:[%s0 + $0x1e0] sm:$0xf]
    %v137 = vld [vmem:[%s0 + $0x1e4] sm:$0xf]
    %v138 = vld [vmem:[%s0 + $0x1e8] sm:$0xf]
    %v139 = vld [vmem:[%s0 + $0x1ec] sm:$0xf]
    %v140 = vld [vmem:[%s0 + $0x1f0] sm:$0xf]
    %v141 = vld [vmem:[%s0 + $0x1f4] sm:$0xf]
    %v142 = vld [vmem:[%s0 + $0x1f8] sm:$0xf]
    %v143 = vld [vmem:[%s0 + $0x1fc] sm:$0xf]
    %v144 = vld [vmem:[%s0 + $0x200] sm:$0xf]
    %v145 = vld [vmem:[%s0 + $0x204] sm:$0xf]
    %v146 = vld [vmem:[%s0 + $0x208] sm:$0xf]
    %v147 = vld [vmem:[%s0 + $0x20c] sm:$0xf]
    %v148 = vld [vmem:[%s0 + $0x210] sm:$0xf]
    %v149 = vld [vmem:[%s0 + $0x214] sm:$0xf]
    %v150 = vld [vmem:[%s0 + $0x218] sm:$0xf]
    %v151 = vld [vmem:[%s0 + $0x21c] sm:$0xf]
    %v152 = vld [vmem:[%s0 + $0x220] sm:$0xf]
    %v153 = vld [vmem:[%s0 + $0x224] sm:$0xf]
    %v154 = vld [vmem:[%s0 + $0x228] sm:$0xf]
    %v155 = vld [vmem:[%s0 + $0x22c] sm:$0xf]
    %v156 = vld [vmem:[%s0 + $0x230] sm:$0xf]
    %v157 = vld [vmem:[%s0 + $0x234] sm:$0xf]
    %v158 = vld [vmem:[%s0 + $0x238] sm:$0xf]
    %v159 = vld [vmem:[%s0 + $0x23c] sm:$0xf]
    %v160 = vld [vmem:[%s0 + $0x240] sm:$0xf]
    %v161 = vld [vmem:[%s0 + $0x244] sm:$0xf]
    %v162 = vld [vmem:[%s0 + $0x248] sm:$0xf]
    %v163 = vld [vmem:[%s0 + $0x24c] sm:$0xf]
    %v164 = vld [vmem:[%s0 + $0x250] sm:$0xf]
    %v165 = vld [vmem:[%s0 + $0x254] sm:$0xf]
    %v166 = vld [vmem:[%s0 + $0x258] sm:$0xf]
    %v167 = vld [vmem:[%s0 + $0x25c] sm:$0xf]
    %v168 = vld [vmem:[%s0 + $0x260] sm:$0xf]
    %v169 = vld [vmem:[%s0 + $0x264] sm:$0xf]
    %v170 = vld [vmem:[%s0 + $0x268] sm:$0xf]
    %v171 = vld [vmem:[%s0 + $0x26c] sm:$0xf]
    %v172 = vld [vmem:[%s0 + $0x270] sm:$0xf]
    %v173 = vld [vmem:[%s0 + $0x274] sm:$0xf]
    %v174 = vld [vmem:[%s0 + $0x278] sm:$0xf]
    %v175 = vld [vmem:[%s0 + $0x27c] sm:$0xf]
    %v176 = vld [vmem:[%s0 + $0x280] sm:$0xf]
    %v177 = vld [vmem:[%s0 + $0x284] sm:$0xf]
    %v178 = vld [vmem:[%s0 + $0x288] sm:$0xf]
    %v179 = vld [vmem:[%s0 + $0x28c] sm:$0xf]
    %v180 = vld [vmem:[%s0 + $0x290] sm:$0xf]
    %v181 = vld [vmem:[%s0 + $0x294] sm:$0xf]
    %v182 = vld [vmem:[%s0 + $0x298] sm:$0xf]
    %v183 = vld [vmem:[%s0 + $0x29c] sm:$0xf]
    %v184 = vld [vmem:[%s0 + $0x2a0] sm:$0xf]
    %v185 = vld [vmem:[%s0 + $0x2a4] sm:$0xf]
    %v186 = vld [vmem:[%s0 + $0x2a8] sm:$0xf]
    %v187 = vld [vmem:[%s0 + $0x2ac] sm:$0xf]
    %v188 = vld [vmem:[%s0 + $0x2b0] sm:$0xf]
    %v189 = vld [vmem:[%s0 + $0x2b4] sm:$0xf]
    %v190 = vld [vmem:[%s0 + $0x2b8] sm:$0xf]
    %v191 = vld [vmem:[%s0 + $0x2bc] sm:$0xf]
    %v192 = vld [vmem:[%s0 + $0x2c0] sm:$0xf]
    %v193 = vld [vmem:[%s0 + $0x2c4] sm:$0xf]
    %v194 = vld [vmem:[%s0 + $0x2c8] sm:$0xf]
    %v195 = vld [vmem:[%s0 + $0x2cc] sm:$0xf]
    %v196 = vld [vmem:[%s0 + $0x2d0] sm:$0xf]
    %v197 = vld [vmem:[%s0 + $0x2d4] sm:$0xf]
    %v198 = vld [vmem:[%s0 + $0x2d8] sm:$0xf]
    %v199 = vld [vmem:[%s0 + $0x2dc] sm:$0xf]
    %v200 = vld [vmem:[%s0 + $0x2e0] sm:$0xf]
    %v201 = vld [vmem:[%s0 + $0x2e4] sm:$0xf]
    %v202 = vld [vmem:[%s0 + $0x2e8] sm:$0xf]
    %v203 = vld [vmem:[%s0 + $0x2ec] sm:$0xf]
    %v204 = vld [vmem:[%s0 + $0x2f0] sm:$0xf]
    %v205 = vld [vmem:[%s0 + $0x2f4] sm:$0xf]
    %v206 = vld [vmem:[%s0 + $0x2f8] sm:$0xf]
    %v207 = vld [vmem:[%s0 + $0x2fc] sm:$0xf]
    %v208 = vld [vmem:[%s0 + $0x300] sm:$0xf]
    %v209 = vld [vmem:[%s0 + $0x304] sm:$0xf]
    %v210 = vld [vmem:[%s0 + $0x308] sm:$0xf]
    %v211 = vld [vmem:[%s0 + $0x30c] sm:$0xf]
    %v212 = vld [vmem:[%s0 + $0x310] sm:$0xf]
    %v213 = vld [vmem:[%s0 + $0x314] sm:$0xf]
    %v214 = vld [vmem:[%s0 + $0x318] sm:$0xf]
    %v215 = vld [vmem:[%s0 + $0x31c] sm:$0xf]
    %v216 = vld [vmem:[%s0 + $0x320] sm:$0xf]
    %v217 = vld [vmem:[%s0 + $0x324] sm:$0xf]
    %v218 = vld [vmem:[%s0 + $0x328] sm:$0xf]
    %v219 = vld [vmem:[%s0 + $0x32c] sm:$0xf]
    %v220 = vld [vmem:[%s0 + $0x330] sm:$0xf]
    %v221 = vld [vmem:[%s0 + $0x334] sm:$0xf]
    %v222 = vld [vmem:[%s0 + $0x338] sm:$0xf]
    %v223 = vld [vmem:[%s0 + $0x33c] sm:$0xf]
    %v224 = vld [vmem:[%s0 + $0x340] sm:$0xf]
    %v225 = vld [vmem:[%s0 + $0x344] sm:$0xf]
    %v226 = vld [vmem:[%s0 + $0x348] sm:$0xf]
    %v227 = vld [vmem:[%s0 + $0x34c] sm:$0xf]
    %v228 = vld [vmem:[%s0 + $0x350] sm:$0xf]
    %v229 = vld [vmem:[%s0 + $0x354] sm:$0xf]
    %v230 = vld [vmem:[%s0 + $0x358] sm:$0xf]
    %v231 = vld [vmem:[%s0 + $0x35c] sm:$0xf]
    %v232 = vld [vmem:[%s0 + $0x360] sm:$0xf]
    %v233 = vld [vmem:[%s0 + $0x364] sm:$0xf]
    %v234 = vld [vmem:[%s0 + $0x368] sm:$0xf]
    %v235 = vld [vmem:[%s0 + $0x36c] sm:$0xf]
    %v236 = vld [vmem:[%s0 + $0x370] sm:$0xf]
    %v237 = vld [vmem:[%s0 + $0x374] sm:$0xf]
    %v238 = vld [vmem:[%s0 + $0x378] sm:$0xf]
    %v239 = vld [vmem:[%s0 + $0x37c] sm:$0xf]
    %v240 = vld [vmem:[%s0 + $0x380] sm:$0xf]
    %v241 = vld [vmem:[%s0 + $0x384] sm:$0xf]
    %v242 = vld [vmem:[%s0 + $0x388] sm:$0xf]
    %v243 = vld [vmem:[%s0 + $0x38c] sm:$0xf]
    %v244 = vld [vmem:[%s0 + $0x390] sm:$0xf]
    %v245 = vld [vmem:[%s0 + $0x394] sm:$0xf]
    %v246 = vld [vmem:[%s0 + $0x398] sm:$0xf]
    %v247 = vld [vmem:[%s0 + $0x39c] sm:$0xf]
    %v248 = vld [vmem:[%s0 + $0x3a0] sm:$0xf]
    %v249 = vld [vmem:[%s0 + $0x3a4] sm:$0xf]
    %v250 = vld [vmem:[%s0 + $0x3a8] sm:$0xf]
    %v251 = vld [vmem:[%s0 + $0x3ac] sm:$0xf]
    %v252 = vld [vmem:[%s0 + $0x3b0] sm:$0xf]
    %v253 = vld [vmem:[%s0 + $0x3b4] sm:$0xf]
    %v254 = vld [vmem:[%s0 + $0x3b8] sm:$0xf]
    %v255 = vld [vmem:[%s0 + $0x3bc] sm:$0xf]
    %v256 = vld [vmem:[%s0 + $0x3c0] sm:$0xf]
    %v257 = vld [vmem:[%s0 + $0x3c4] sm:$0xf]
    %v258 = vld [vmem:[%s0 + $0x3c8] sm:$0xf]
    %v259 = vld [vmem:[%s0 + $0x3cc] sm:$0xf]
    %v260 = vld [vmem:[%s0 + $0x3d0] sm:$0xf]
    %v261 = vld [vmem:[%s0 + $0x3d4] sm:$0xf]
    %v262 = vld [vmem:[%s0 + $0x3d8] sm:$0xf]
    %v263 = vld [vmem:[%s0 + $0x3dc] sm:$0xf]
    %v264 = vld [vmem:[%s0 + $0x3e0] sm:$0xf]
    %v265 = vld [vmem:[%s0 + $0x3e4] sm:$0xf]
    %v266 = vld [vmem:[%s0 + $0x3e8] sm:$0xf]
    %v267 = vld [vmem:[%s0 + $0x3ec] sm:$0xf]
    %v268 = vld [vmem:[%s0 + $0x3f0] sm:$0xf]
    %v269 = vld [vmem:[%s0 + $0x3f4] sm:$0xf]
    %v270 = vld [vmem:[%s0 + $0x3f8] sm:$0xf]
    %v271 = vld [vmem:[%s0 + $0x3fc] sm:$0xf]
    %v272 = vld [vmem:[%s1] sm:$0xf]
    %v273 = vld [vmem:[%s1 + $0x4] sm:$0xf]
    %v274 = vld [vmem:[%s2] sm:$0x1]
    %v275 = vlaneseq
    %v276 = vshrl.u32 %v275, 7
    %v277 = vsub.s32 0, %v276
    %v278 = vrot.slane %v274, %v277
    %v535 = vunpack.c.l.b16 %v16
    %v536 = vunpack.c.l.b16 %v17
    %v537 = vunpack.c.l.b16 %v18
    %v538 = vunpack.c.l.b16 %v19
    %v539 = vunpack.c.l.b16 %v20
    %v540 = vunpack.c.l.b16 %v21
    %v541 = vunpack.c.l.b16 %v22
    %v542 = vunpack.c.l.b16 %v23
    %v543 = vunpack.c.l.b16 %v24
    %v544 = vunpack.c.l.b16 %v25
    %v545 = vunpack.c.l.b16 %v26
    %v546 = vunpack.c.l.b16 %v27
    %v547 = vunpack.c.l.b16 %v28
    %v548 = vunpack.c.l.b16 %v29
    %v549 = vunpack.c.l.b16 %v30
    %v550 = vunpack.c.l.b16 %v31
    %v551 = vunpack.c.l.b16 %v32
    %v552 = vunpack.c.l.b16 %v33
    %v553 = vunpack.c.l.b16 %v34
    %v554 = vunpack.c.l.b16 %v35
    %v555 = vunpack.c.l.b16 %v36
    %v556 = vunpack.c.l.b16 %v37
    %v557 = vunpack.c.l.b16 %v38
    %v558 = vunpack.c.l.b16 %v39
    %v559 = vunpack.c.l.b16 %v40
    %v560 = vunpack.c.l.b16 %v41
    %v561 = vunpack.c.l.b16 %v42
    %v562 = vunpack.c.l.b16 %v43
    %v563 = vunpack.c.l.b16 %v44
    %v564 = vunpack.c.l.b16 %v45
    %v565 = vunpack.c.l.b16 %v46
    %v566 = vunpack.c.l.b16 %v47
    %v567 = vunpack.c.l.b16 %v48
    %v568 = vunpack.c.l.b16 %v49
    %v569 = vunpack.c.l.b16 %v50
    %v570 = vunpack.c.l.b16 %v51
    %v571 = vunpack.c.l.b16 %v52
    %v572 = vunpack.c.l.b16 %v53
    %v573 = vunpack.c.l.b16 %v54
    %v574 = vunpack.c.l.b16 %v55
    %v575 = vunpack.c.l.b16 %v56
    %v576 = vunpack.c.l.b16 %v57
    %v577 = vunpack.c.l.b16 %v58
    %v578 = vunpack.c.l.b16 %v59
    %v579 = vunpack.c.l.b16 %v60
    %v580 = vunpack.c.l.b16 %v61
    %v581 = vunpack.c.l.b16 %v62
    %v582 = vunpack.c.l.b16 %v63
    %v583 = vunpack.c.l.b16 %v64
    %v584 = vunpack.c.l.b16 %v65
    %v585 = vunpack.c.l.b16 %v66
    %v586 = vunpack.c.l.b16 %v67
    %v587 = vunpack.c.l.b16 %v68
    %v588 = vunpack.c.l.b16 %v69
    %v589 = vunpack.c.l.b16 %v70
    %v590 = vunpack.c.l.b16 %v71
    %v591 = vunpack.c.l.b16 %v72
    %v592 = vunpack.c.l.b16 %v73
    %v593 = vunpack.c.l.b16 %v74
    %v594 = vunpack.c.l.b16 %v75
    %v595 = vunpack.c.l.b16 %v76
    %v596 = vunpack.c.l.b16 %v77
    %v597 = vunpack.c.l.b16 %v78
    %v598 = vunpack.c.l.b16 %v79
    %v599 = vunpack.c.l.b16 %v80
    %v600 = vunpack.c.l.b16 %v81
    %v601 = vunpack.c.l.b16 %v82
    %v602 = vunpack.c.l.b16 %v83
    %v603 = vunpack.c.l.b16 %v84
    %v604 = vunpack.c.l.b16 %v85
    %v605 = vunpack.c.l.b16 %v86
    %v606 = vunpack.c.l.b16 %v87
    %v607 = vunpack.c.l.b16 %v88
    %v608 = vunpack.c.l.b16 %v89
    %v609 = vunpack.c.l.b16 %v90
    %v610 = vunpack.c.l.b16 %v91
    %v611 = vunpack.c.l.b16 %v92
    %v612 = vunpack.c.l.b16 %v93
    %v613 = vunpack.c.l.b16 %v94
    %v614 = vunpack.c.l.b16 %v95
    %v615 = vunpack.c.l.b16 %v96
    %v616 = vunpack.c.l.b16 %v97
    %v617 = vunpack.c.l.b16 %v98
    %v618 = vunpack.c.l.b16 %v99
    %v619 = vunpack.c.l.b16 %v100
    %v620 = vunpack.c.l.b16 %v101
    %v621 = vunpack.c.l.b16 %v102
    %v622 = vunpack.c.l.b16 %v103
    %v623 = vunpack.c.l.b16 %v104
    %v624 = vunpack.c.l.b16 %v105
    %v625 = vunpack.c.l.b16 %v106
    %v626 = vunpack.c.l.b16 %v107
    %v627 = vunpack.c.l.b16 %v108
    %v628 = vunpack.c.l.b16 %v109
    %v629 = vunpack.c.l.b16 %v110
    %v630 = vunpack.c.l.b16 %v111
    %v631 = vunpack.c.l.b16 %v112
    %v632 = vunpack.c.l.b16 %v113
    %v633 = vunpack.c.l.b16 %v114
    %v634 = vunpack.c.l.b16 %v115
    %v635 = vunpack.c.l.b16 %v116
    %v636 = vunpack.c.l.b16 %v117
    %v637 = vunpack.c.l.b16 %v118
    %v638 = vunpack.c.l.b16 %v119
    %v639 = vunpack.c.l.b16 %v120
    %v640 = vunpack.c.l.b16 %v121
    %v641 = vunpack.c.l.b16 %v122
    %v642 = vunpack.c.l.b16 %v123
    %v643 = vunpack.c.l.b16 %v124
    %v644 = vunpack.c.l.b16 %v125
    %v645 = vunpack.c.l.b16 %v126
    %v646 = vunpack.c.l.b16 %v127
    %v647 = vunpack.c.l.b16 %v128
    %v648 = vunpack.c.l.b16 %v129
    %v649 = vunpack.c.l.b16 %v130
    %v650 = vunpack.c.l.b16 %v131
    %v651 = vunpack.c.l.b16 %v132
    %v652 = vunpack.c.l.b16 %v133
    %v653 = vunpack.c.l.b16 %v134
    %v654 = vunpack.c.l.b16 %v135
    %v655 = vunpack.c.l.b16 %v136
    %v656 = vunpack.c.l.b16 %v137
    %v657 = vunpack.c.l.b16 %v138
    %v658 = vunpack.c.l.b16 %v139
    %v659 = vunpack.c.l.b16 %v140
    %v660 = vunpack.c.l.b16 %v141
    %v661 = vunpack.c.l.b16 %v142
    %v662 = vunpack.c.l.b16 %v143
    %v663 = vunpack.c.l.b16 %v144
    %v664 = vunpack.c.l.b16 %v145
    %v665 = vunpack.c.l.b16 %v146
    %v666 = vunpack.c.l.b16 %v147
    %v667 = vunpack.c.l.b16 %v148
    %v668 = vunpack.c.l.b16 %v149
    %v669 = vunpack.c.l.b16 %v150
    %v670 = vunpack.c.l.b16 %v151
    %v671 = vunpack.c.l.b16 %v152
    %v672 = vunpack.c.l.b16 %v153
    %v673 = vunpack.c.l.b16 %v154
    %v674 = vunpack.c.l.b16 %v155
    %v675 = vunpack.c.l.b16 %v156
    %v676 = vunpack.c.l.b16 %v157
    %v677 = vunpack.c.l.b16 %v158
    %v678 = vunpack.c.l.b16 %v159
    %v679 = vunpack.c.l.b16 %v160
    %v680 = vunpack.c.l.b16 %v161
    %v681 = vunpack.c.l.b16 %v162
    %v682 = vunpack.c.l.b16 %v163
    %v683 = vunpack.c.l.b16 %v164
    %v684 = vunpack.c.l.b16 %v165
    %v685 = vunpack.c.l.b16 %v166
    %v686 = vunpack.c.l.b16 %v167
    %v687 = vunpack.c.l.b16 %v168
    %v688 = vunpack.c.l.b16 %v169
    %v689 = vunpack.c.l.b16 %v170
    %v690 = vunpack.c.l.b16 %v171
    %v691 = vunpack.c.l.b16 %v172
    %v692 = vunpack.c.l.b16 %v173
    %v693 = vunpack.c.l.b16 %v174
    %v694 = vunpack.c.l.b16 %v175
    %v695 = vunpack.c.l.b16 %v176
    %v696 = vunpack.c.l.b16 %v177
    %v697 = vunpack.c.l.b16 %v178
    %v698 = vunpack.c.l.b16 %v179
    %v699 = vunpack.c.l.b16 %v180
    %v700 = vunpack.c.l.b16 %v181
    %v701 = vunpack.c.l.b16 %v182
    %v702 = vunpack.c.l.b16 %v183
    %v703 = vunpack.c.l.b16 %v184
    %v704 = vunpack.c.l.b16 %v185
    %v705 = vunpack.c.l.b16 %v186
    %v706 = vunpack.c.l.b16 %v187
    %v707 = vunpack.c.l.b16 %v188
    %v708 = vunpack.c.l.b16 %v189
    %v709 = vunpack.c.l.b16 %v190
    %v710 = vunpack.c.l.b16 %v191
    %v711 = vunpack.c.l.b16 %v192
    %v712 = vunpack.c.l.b16 %v193
    %v713 = vunpack.c.l.b16 %v194
    %v714 = vunpack.c.l.b16 %v195
    %v715 = vunpack.c.l.b16 %v196
    %v716 = vunpack.c.l.b16 %v197
    %v717 = vunpack.c.l.b16 %v198
    %v718 = vunpack.c.l.b16 %v199
    %v719 = vunpack.c.l.b16 %v200
    %v720 = vunpack.c.l.b16 %v201
    %v721 = vunpack.c.l.b16 %v202
    %v722 = vunpack.c.l.b16 %v203
    %v723 = vunpack.c.l.b16 %v204
    %v724 = vunpack.c.l.b16 %v205
    %v725 = vunpack.c.l.b16 %v206
    %v726 = vunpack.c.l.b16 %v207
    %v727 = vunpack.c.l.b16 %v208
    %v728 = vunpack.c.l.b16 %v209
    %v729 = vunpack.c.l.b16 %v210
    %v730 = vunpack.c.l.b16 %v211
    %v731 = vunpack.c.l.b16 %v212
    %v732 = vunpack.c.l.b16 %v213
    %v733 = vunpack.c.l.b16 %v214
    %v734 = vunpack.c.l.b16 %v215
    %v735 = vunpack.c.l.b16 %v216
    %v736 = vunpack.c.l.b16 %v217
    %v737 = vunpack.c.l.b16 %v218
    %v738 = vunpack.c.l.b16 %v219
    %v739 = vunpack.c.l.b16 %v220
    %v740 = vunpack.c.l.b16 %v221
    %v741 = vunpack.c.l.b16 %v222
    %v742 = vunpack.c.l.b16 %v223
    %v743 = vunpack.c.l.b16 %v224
    %v744 = vunpack.c.l.b16 %v225
    %v745 = vunpack.c.l.b16 %v226
    %v746 = vunpack.c.l.b16 %v227
    %v747 = vunpack.c.l.b16 %v228
    %v748 = vunpack.c.l.b16 %v229
    %v749 = vunpack.c.l.b16 %v230
    %v750 = vunpack.c.l.b16 %v231
    %v751 = vunpack.c.l.b16 %v232
    %v752 = vunpack.c.l.b16 %v233
    %v753 = vunpack.c.l.b16 %v234
    %v754 = vunpack.c.l.b16 %v235
    %v755 = vunpack.c.l.b16 %v236
    %v756 = vunpack.c.l.b16 %v237
    %v757 = vunpack.c.l.b16 %v238
    %v758 = vunpack.c.l.b16 %v239
    %v759 = vunpack.c.l.b16 %v240
    %v760 = vunpack.c.l.b16 %v241
    %v761 = vunpack.c.l.b16 %v242
    %v762 = vunpack.c.l.b16 %v243
    %v763 = vunpack.c.l.b16 %v244
    %v764 = vunpack.c.l.b16 %v245
    %v765 = vunpack.c.l.b16 %v246
    %v766 = vunpack.c.l.b16 %v247
    %v767 = vunpack.c.l.b16 %v248
    %v768 = vunpack.c.l.b16 %v249
    %v769 = vunpack.c.l.b16 %v250
    %v770 = vunpack.c.l.b16 %v251
    %v771 = vunpack.c.l.b16 %v252
    %v772 = vunpack.c.l.b16 %v253
    %v773 = vunpack.c.l.b16 %v254
    %v774 = vunpack.c.l.b16 %v255
    %v775 = vunpack.c.l.b16 %v256
    %v776 = vunpack.c.l.b16 %v257
    %v777 = vunpack.c.l.b16 %v258
    %v778 = vunpack.c.l.b16 %v259
    %v779 = vunpack.c.l.b16 %v260
    %v780 = vunpack.c.l.b16 %v261
    %v781 = vunpack.c.l.b16 %v262
    %v782 = vunpack.c.l.b16 %v263
    %v783 = vunpack.c.l.b16 %v264
    %v784 = vunpack.c.l.b16 %v265
    %v785 = vunpack.c.l.b16 %v266
    %v786 = vunpack.c.l.b16 %v267
    %v787 = vunpack.c.l.b16 %v268
    %v788 = vunpack.c.l.b16 %v269
    %v789 = vunpack.c.l.b16 %v270
    %v790 = vunpack.c.l.b16 %v271
    %v791 = vpack.c.b16 %v536, %v535
    %v792 = vpack.c.b16 %v538, %v537
    %v793 = vpack.c.b16 %v540, %v539
    %v794 = vpack.c.b16 %v542, %v541
    %v795 = vpack.c.b16 %v544, %v543
    %v796 = vpack.c.b16 %v546, %v545
    %v797 = vpack.c.b16 %v548, %v547
    %v798 = vpack.c.b16 %v550, %v549
    %v799 = vpack.c.b16 %v552, %v551
    %v800 = vpack.c.b16 %v554, %v553
    %v801 = vpack.c.b16 %v556, %v555
    %v802 = vpack.c.b16 %v558, %v557
    %v803 = vpack.c.b16 %v560, %v559
    %v804 = vpack.c.b16 %v562, %v561
    %v805 = vpack.c.b16 %v564, %v563
    %v806 = vpack.c.b16 %v566, %v565
    %v807 = vpack.c.b16 %v568, %v567
    %v808 = vpack.c.b16 %v570, %v569
    %v809 = vpack.c.b16 %v572, %v571
    %v810 = vpack.c.b16 %v574, %v573
    %v811 = vpack.c.b16 %v576, %v575
    %v812 = vpack.c.b16 %v578, %v577
    %v813 = vpack.c.b16 %v580, %v579
    %v814 = vpack.c.b16 %v582, %v581
    %v815 = vpack.c.b16 %v584, %v583
    %v816 = vpack.c.b16 %v586, %v585
    %v817 = vpack.c.b16 %v588, %v587
    %v818 = vpack.c.b16 %v590, %v589
    %v819 = vpack.c.b16 %v592, %v591
    %v820 = vpack.c.b16 %v594, %v593
    %v821 = vpack.c.b16 %v596, %v595
    %v822 = vpack.c.b16 %v598, %v597
    %v823 = vpack.c.b16 %v600, %v599
    %v824 = vpack.c.b16 %v602, %v601
    %v825 = vpack.c.b16 %v604, %v603
    %v826 = vpack.c.b16 %v606, %v605
    %v827 = vpack.c.b16 %v608, %v607
    %v828 = vpack.c.b16 %v610, %v609
    %v829 = vpack.c.b16 %v612, %v611
    %v830 = vpack.c.b16 %v614, %v613
    %v831 = vpack.c.b16 %v616, %v615
    %v832 = vpack.c.b16 %v618, %v617
    %v833 = vpack.c.b16 %v620, %v619
    %v834 = vpack.c.b16 %v622, %v621
    %v835 = vpack.c.b16 %v624, %v623
    %v836 = vpack.c.b16 %v626, %v625
    %v837 = vpack.c.b16 %v628, %v627
    %v838 = vpack.c.b16 %v630, %v629
    %v839 = vpack.c.b16 %v632, %v631
    %v840 = vpack.c.b16 %v634, %v633
    %v841 = vpack.c.b16 %v636, %v635
    %v842 = vpack.c.b16 %v638, %v637
    %v843 = vpack.c.b16 %v640, %v639
    %v844 = vpack.c.b16 %v642, %v641
    %v845 = vpack.c.b16 %v644, %v643
    %v846 = vpack.c.b16 %v646, %v645
    %v847 = vpack.c.b16 %v648, %v647
    %v848 = vpack.c.b16 %v650, %v649
    %v849 = vpack.c.b16 %v652, %v651
    %v850 = vpack.c.b16 %v654, %v653
    %v851 = vpack.c.b16 %v656, %v655
    %v852 = vpack.c.b16 %v658, %v657
    %v853 = vpack.c.b16 %v660, %v659
    %v854 = vpack.c.b16 %v662, %v661
    %v855 = vpack.c.b16 %v664, %v663
    %v856 = vpack.c.b16 %v666, %v665
    %v857 = vpack.c.b16 %v668, %v667
    %v858 = vpack.c.b16 %v670, %v669
    %v859 = vpack.c.b16 %v672, %v671
    %v860 = vpack.c.b16 %v674, %v673
    %v861 = vpack.c.b16 %v676, %v675
    %v862 = vpack.c.b16 %v678, %v677
    %v863 = vpack.c.b16 %v680, %v679
    %v864 = vpack.c.b16 %v682, %v681
    %v865 = vpack.c.b16 %v684, %v683
    %v866 = vpack.c.b16 %v686, %v685
    %v867 = vpack.c.b16 %v688, %v687
    %v868 = vpack.c.b16 %v690, %v689
    %v869 = vpack.c.b16 %v692, %v691
    %v870 = vpack.c.b16 %v694, %v693
    %v871 = vpack.c.b16 %v696, %v695
    %v872 = vpack.c.b16 %v698, %v697
    %v873 = vpack.c.b16 %v700, %v699
    %v874 = vpack.c.b16 %v702, %v701
    %v875 = vpack.c.b16 %v704, %v703
    %v876 = vpack.c.b16 %v706, %v705
    %v877 = vpack.c.b16 %v708, %v707
    %v878 = vpack.c.b16 %v710, %v709
    %v879 = vpack.c.b16 %v712, %v711
    %v880 = vpack.c.b16 %v714, %v713
    %v881 = vpack.c.b16 %v716, %v715
    %v882 = vpack.c.b16 %v718, %v717
    %v883 = vpack.c.b16 %v720, %v719
    %v884 = vpack.c.b16 %v722, %v721
    %v885 = vpack.c.b16 %v724, %v723
    %v886 = vpack.c.b16 %v726, %v725
    %v887 = vpack.c.b16 %v728, %v727
    %v888 = vpack.c.b16 %v730, %v729
    %v889 = vpack.c.b16 %v732, %v731
    %v890 = vpack.c.b16 %v734, %v733
    %v891 = vpack.c.b16 %v736, %v735
    %v892 = vpack.c.b16 %v738, %v737
    %v893 = vpack.c.b16 %v740, %v739
    %v894 = vpack.c.b16 %v742, %v741
    %v895 = vpack.c.b16 %v744, %v743
    %v896 = vpack.c.b16 %v746, %v745
    %v897 = vpack.c.b16 %v748, %v747
    %v898 = vpack.c.b16 %v750, %v749
    %v899 = vpack.c.b16 %v752, %v751
    %v900 = vpack.c.b16 %v754, %v753
    %v901 = vpack.c.b16 %v756, %v755
    %v902 = vpack.c.b16 %v758, %v757
    %v903 = vpack.c.b16 %v760, %v759
    %v904 = vpack.c.b16 %v762, %v761
    %v905 = vpack.c.b16 %v764, %v763
    %v906 = vpack.c.b16 %v766, %v765
    %v907 = vpack.c.b16 %v768, %v767
    %v908 = vpack.c.b16 %v770, %v769
    %v909 = vpack.c.b16 %v772, %v771
    %v910 = vpack.c.b16 %v774, %v773
    %v911 = vpack.c.b16 %v776, %v775
    %v912 = vpack.c.b16 %v778, %v777
    %v913 = vpack.c.b16 %v780, %v779
    %v914 = vpack.c.b16 %v782, %v781
    %v915 = vpack.c.b16 %v784, %v783
    %v916 = vpack.c.b16 %v786, %v785
    %v917 = vpack.c.b16 %v788, %v787
    %v918 = vpack.c.b16 %v790, %v789
    %v921 = vunpack.c.l.b16 %v272
    %v922 = vunpack.c.l.b16 %v273
    %v923 = vpack.c.b16 %v922, %v921
    %vm925 = vcmask 130048
    %v927 = vsel %vm925, %v791, 0
    %v930 = vsel %vm925, %v792, 0
    %v933 = vsel %vm925, %v793, 0
    %v936 = vsel %vm925, %v794, 0
    %v939 = vsel %vm925, %v795, 0
    %v942 = vsel %vm925, %v796, 0
    %v945 = vsel %vm925, %v797, 0
    %v948 = vsel %vm925, %v798, 0
    %v951 = vsel %vm925, %v799, 0
    %v954 = vsel %vm925, %v800, 0
    %v957 = vsel %vm925, %v801, 0
    %v960 = vsel %vm925, %v802, 0
    %v963 = vsel %vm925, %v803, 0
    %v966 = vsel %vm925, %v804, 0
    %v969 = vsel %vm925, %v805, 0
    %v972 = vsel %vm925, %v806, 0
    %v975 = vsel %vm925, %v807, 0
    %v978 = vsel %vm925, %v808, 0
    %v981 = vsel %vm925, %v809, 0
    %v984 = vsel %vm925, %v810, 0
    %v987 = vsel %vm925, %v811, 0
    %v990 = vsel %vm925, %v812, 0
    %v993 = vsel %vm925, %v813, 0
    %v996 = vsel %vm925, %v814, 0
    %v999 = vsel %vm925, %v815, 0
    %v1002 = vsel %vm925, %v816, 0
    %v1005 = vsel %vm925, %v817, 0
    %v1008 = vsel %vm925, %v818, 0
    %v1011 = vsel %vm925, %v819, 0
    %v1014 = vsel %vm925, %v820, 0
    %v1017 = vsel %vm925, %v821, 0
    %v1020 = vsel %vm925, %v822, 0
    %v1023 = vsel %vm925, %v823, 0
    %v1026 = vsel %vm925, %v824, 0
    %v1029 = vsel %vm925, %v825, 0
    %v1032 = vsel %vm925, %v826, 0
    %v1035 = vsel %vm925, %v827, 0
    %v1038 = vsel %vm925, %v828, 0
    %v1041 = vsel %vm925, %v829, 0
    %v1044 = vsel %vm925, %v830, 0
    %v1047 = vsel %vm925, %v831, 0
    %v1050 = vsel %vm925, %v832, 0
    %v1053 = vsel %vm925, %v833, 0
    %v1056 = vsel %vm925, %v834, 0
    %v1059 = vsel %vm925, %v835, 0
    %v1062 = vsel %vm925, %v836, 0
    %v1065 = vsel %vm925, %v837, 0
    %v1068 = vsel %vm925, %v838, 0
    %v1071 = vsel %vm925, %v839, 0
    %v1074 = vsel %vm925, %v840, 0
    %v1077 = vsel %vm925, %v841, 0
    %v1080 = vsel %vm925, %v842, 0
    %v1083 = vsel %vm925, %v843, 0
    %v1086 = vsel %vm925, %v844, 0
    %v1089 = vsel %vm925, %v845, 0
    %v1092 = vsel %vm925, %v846, 0
    %v1095 = vsel %vm925, %v847, 0
    %v1098 = vsel %vm925, %v848, 0
    %v1101 = vsel %vm925, %v849, 0
    %v1104 = vsel %vm925, %v850, 0
    %v1107 = vsel %vm925, %v851, 0
    %v1110 = vsel %vm925, %v852, 0
    %v1113 = vsel %vm925, %v853, 0
    %v1116 = vsel %vm925, %v854, 0
    %v1119 = vsel %vm925, %v855, 0
    %v1122 = vsel %vm925, %v856, 0
    %v1125 = vsel %vm925, %v857, 0
    %v1128 = vsel %vm925, %v858, 0
    %v1131 = vsel %vm925, %v859, 0
    %v1134 = vsel %vm925, %v860, 0
    %v1137 = vsel %vm925, %v861, 0
    %v1140 = vsel %vm925, %v862, 0
    %v1143 = vsel %vm925, %v863, 0
    %v1146 = vsel %vm925, %v864, 0
    %v1149 = vsel %vm925, %v865, 0
    %v1152 = vsel %vm925, %v866, 0
    %v1155 = vsel %vm925, %v867, 0
    %v1158 = vsel %vm925, %v868, 0
    %v1161 = vsel %vm925, %v869, 0
    %v1164 = vsel %vm925, %v870, 0
    %v1167 = vsel %vm925, %v871, 0
    %v1170 = vsel %vm925, %v872, 0
    %v1173 = vsel %vm925, %v873, 0
    %v1176 = vsel %vm925, %v874, 0
    %v1179 = vsel %vm925, %v875, 0
    %v1182 = vsel %vm925, %v876, 0
    %v1185 = vsel %vm925, %v877, 0
    %v1188 = vsel %vm925, %v878, 0
    %v1191 = vsel %vm925, %v879, 0
    %v1194 = vsel %vm925, %v880, 0
    %v1197 = vsel %vm925, %v881, 0
    %v1200 = vsel %vm925, %v882, 0
    %v1203 = vsel %vm925, %v883, 0
    %v1206 = vsel %vm925, %v884, 0
    %v1209 = vsel %vm925, %v885, 0
    %v1212 = vsel %vm925, %v886, 0
    %v1215 = vsel %vm925, %v887, 0
    %v1218 = vsel %vm925, %v888, 0
    %v1221 = vsel %vm925, %v889, 0
    %v1224 = vsel %vm925, %v890, 0
    %v1227 = vsel %vm925, %v891, 0
    %v1230 = vsel %vm925, %v892, 0
    %v1233 = vsel %vm925, %v893, 0
    %v1236 = vsel %vm925, %v894, 0
    %v1239 = vsel %vm925, %v895, 0
    %v1242 = vsel %vm925, %v896, 0
    %v1245 = vsel %vm925, %v897, 0
    %v1248 = vsel %vm925, %v898, 0
    %v1251 = vsel %vm925, %v899, 0
    %v1254 = vsel %vm925, %v900, 0
    %v1257 = vsel %vm925, %v901, 0
    %v1260 = vsel %vm925, %v902, 0
    %v1263 = vsel %vm925, %v903, 0
    %v1266 = vsel %vm925, %v904, 0
    %v1269 = vsel %vm925, %v905, 0
    %v1272 = vsel %vm925, %v906, 0
    %v1275 = vsel %vm925, %v907, 0
    %v1278 = vsel %vm925, %v908, 0
    %v1281 = vsel %vm925, %v909, 0
    %v1284 = vsel %vm925, %v910, 0
    %v1287 = vsel %vm925, %v911, 0
    %v1290 = vsel %vm925, %v912, 0
    %v1293 = vsel %vm925, %v913, 0
    %v1296 = vsel %vm925, %v914, 0
    %v1299 = vsel %vm925, %v915, 0
    %v1302 = vsel %vm925, %v916, 0
    %v1305 = vsel %vm925, %v917, 0
    %v1308 = vsel %vm925, %v918, 0
    %1310 = vmatprep.subr.bf16.mxu0 0
    %1311 = vmatpush1.bf16.msra.mxu0 %v923
    %1312 = vmatprep.subr.bf16.mxu0 0
    %1313 = vmatpush1.bf16.msra.mxu0 0
    %1314 = vmatprep.subr.bf16.mxu0 0
    %1315 = vmatpush1.bf16.msra.mxu0 0
    %1316 = vmatprep.subr.bf16.mxu0 0
    %1317 = vmatpush1.bf16.msra.mxu0 0
    %1318 = vmatprep.subr.bf16.mxu0 0
    %1319 = vmatpush1.bf16.msra.mxu0 0
    %1320 = vmatprep.subr.bf16.mxu0 0
    %1321 = vmatpush1.bf16.msra.mxu0 0
    %1322 = vmatprep.subr.bf16.mxu0 0
    %1323 = vmatpush1.bf16.msra.mxu0 0
    %1324 = vmatprep.subr.bf16.mxu0 0
    %1325 = vmatpush1.bf16.msra.mxu0 0
    %1326 = vmatprep.subr.bf16.mxu0 0
    %1327 = vmatpush1.bf16.msra.mxu0 0
    %1328 = vmatprep.subr.bf16.mxu0 0
    %1329 = vmatpush1.bf16.msra.mxu0 0
    %1330 = vmatprep.subr.bf16.mxu0 0
    %1331 = vmatpush1.bf16.msra.mxu0 0
    %1332 = vmatprep.subr.bf16.mxu0 0
    %1333 = vmatpush1.bf16.msra.mxu0 0
    %1334 = vmatprep.subr.bf16.mxu0 0
    %1335 = vmatpush1.bf16.msra.mxu0 0
    %1336 = vmatprep.subr.bf16.mxu0 0
    %1337 = vmatpush1.bf16.msra.mxu0 0
    %1338 = vmatprep.subr.bf16.mxu0 0
    %1339 = vmatpush1.bf16.msra.mxu0 0
    %1340 = vmatprep.subr.bf16.mxu0 0
    %1341 = vmatpush1.bf16.msra.mxu0 0
    %1342 = vmatprep.mubr.bf16.mxu0 0
    %1343 = vmatmul.mubr.bf16.gmra.mrb[0].mxu0 %v927
    %v1344 = vpop.f32.mrb[0].mxu0
    %v1345 = vadd.f32 %v278, %v1344
    %v1346 = vpop.f32.mrb[0].mxu0
    %v1347 = vpop.f32.mrb[0].mxu0
    %v1348 = vadd.f32 %v278, %v1347
    %v1349 = vpop.f32.mrb[0].mxu0
    %1350 = vmatprep.mubr.bf16.mxu0 0
    %1351 = vmatmul.mubr.bf16.gmra.mrb[0].mxu0 %v930
    %v1352 = vpop.f32.mrb[0].mxu0
    %v1353 = vadd.f32 %v278, %v1352
    %v1354 = vpop.f32.mrb[0].mxu0
    %v1355 = vpop.f32.mrb[0].mxu0
    %v1356 = vadd.f32 %v278, %v1355
    %v1357 = vpop.f32.mrb[0].mxu0
    %1358 = vmatprep.mubr.bf16.mxu0 0
    %1359 = vmatmul.mubr.bf16.gmra.mrb[0].mxu0 %v933
    %v1360 = vpop.f32.mrb[0].mxu0
    %v1361 = vadd.f32 %v278, %v1360
    %v1362 = vpop.f32.mrb[0].mxu0
    %v1363 = vpop.f32.mrb[0].mxu0
    %v1364 = vadd.f32 %v278, %v1363
    %v1365 = vpop.f32.mrb[0].mxu0
    %1366 = vmatprep.mubr.bf16.mxu0 0
    %1367 = vmatmul.mubr.bf16.gmra.mrb[0].mxu0 %v936
    %v1368 = vpop.f32.mrb[0].mxu0
    %v1369 = vadd.f32 %v278, %v1368
    %v1370 = vpop.f32.mrb[0].mxu0
    %v1371 = vpop.f32.mrb[0].mxu0
    %v1372 = vadd.f32 %v278, %v1371
    %v1373 = vpop.f32.mrb[0].mxu0
    %1374 = vmatprep.mubr.bf16.mxu0 0
    %1375 = vmatmul.mubr.bf16.gmra.mrb[0].mxu0 %v939
    %v1376 = vpop.f32.mrb[0].mxu0
    %v1377 = vadd.f32 %v278, %v1376
    %v1378 = vpop.f32.mrb[0].mxu0
    %v1379 = vpop.f32.mrb[0].mxu0
    %v1380 = vadd.f32 %v278, %v1379
    %v1381 = vpop.f32.mrb[0].mxu0
    %1382 = vmatprep.mubr.bf16.mxu0 0
    %1383 = vmatmul.mubr.bf16.gmra.mrb[0].mxu0 %v942
    %v1384 = vpop.f32.mrb[0].mxu0
    %v1385 = vadd.f32 %v278, %v1384
    %v1386 = vpop.f32.mrb[0].mxu0
    %v1387 = vpop.f32.mrb[0].mxu0
    %v1388 = vadd.f32 %v278, %v1387
    %v1389 = vpop.f32.mrb[0].mxu0
    %1390 = vmatprep.mubr.bf16.mxu0 0
    %1391 = vmatmul.mubr.bf16.gmra.mrb[0].mxu0 %v945
    %v1392 = vpop.f32.mrb[0].mxu0
    %v1393 = vadd.f32 %v278, %v1392
    %v1394 = vpop.f32.mrb[0].mxu0
    %v1395 = vpop.f32.mrb[0].mxu0
    %v1396 = vadd.f32 %v278, %v1395
    %v1397 = vpop.f32.mrb[0].mxu0
    %1398 = vmatprep.mubr.bf16.mxu0 0
    %1399 = vmatmul.mubr.bf16.gmra.mrb[0].mxu0 %v948
    %v1400 = vpop.f32.mrb[0].mxu0
    %v1401 = vadd.f32 %v278, %v1400
    %v1402 = vpop.f32.mrb[0].mxu0
    %v1403 = vpop.f32.mrb[0].mxu0
    %v1404 = vadd.f32 %v278, %v1403
    %v1405 = vpop.f32.mrb[0].mxu0
    %1406 = vmatprep.mubr.bf16.mxu0 0
    %1407 = vmatmul.mubr.bf16.gmra.mrb[0].mxu0 %v951
    %v1408 = vpop.f32.mrb[0].mxu0
    %v1409 = vadd.f32 %v278, %v1408
    %v1410 = vpop.f32.mrb[0].mxu0
    %v1411 = vpop.f32.mrb[0].mxu0
    %v1412 = vadd.f32 %v278, %v1411
    %v1413 = vpop.f32.mrb[0].mxu0
    %1414 = vmatprep.mubr.bf16.mxu0 0
    %1415 = vmatmul.mubr.bf16.gmra.mrb[0].mxu0 %v954
    %v1416 = vpop.f32.mrb[0].mxu0
    %v1417 = vadd.f32 %v278, %v1416
    %v1418 = vpop.f32.mrb[0].mxu0
    %v1419 = vpop.f32.mrb[0].mxu0
    %v1420 = vadd.f32 %v278, %v1419
    %v1421 = vpop.f32.mrb[0].mxu0
    %1422 = vmatprep.mubr.bf16.mxu0 0
    %1423 = vmatmul.mubr.bf16.gmra.mrb[0].mxu0 %v957
    %v1424 = vpop.f32.mrb[0].mxu0
    %v1425 = vadd.f32 %v278, %v1424
    %v1426 = vpop.f32.mrb[0].mxu0
    %v1427 = vpop.f32.mrb[0].mxu0
    %v1428 = vadd.f32 %v278, %v1427
    %v1429 = vpop.f32.mrb[0].mxu0
    %1430 = vmatprep.mubr.bf16.mxu0 0
    %1431 = vmatmul.mubr.bf16.gmra.mrb[0].mxu0 %v960
    %v1432 = vpop.f32.mrb[0].mxu0
    %v1433 = vadd.f32 %v278, %v1432
    %v1434 = vpop.f32.mrb[0].mxu0
    %v1435 = vpop.f32.mrb[0].mxu0
    %v1436 = vadd.f32 %v278, %v1435
    %v1437 = vpop.f32.mrb[0].mxu0
    %1438 = vmatprep.mubr.bf16.mxu0 0
    %1439 = vmatmul.mubr.bf16.gmra.mrb[0].mxu0 %v963
    %v1440 = vpop.f32.mrb[0].mxu0
    %v1441 = vadd.f32 %v278, %v1440
    %v1442 = vpop.f32.mrb[0].mxu0
    %v1443 = vpop.f32.mrb[0].mxu0
    %v1444 = vadd.f32 %v278, %v1443
    %v1445 = vpop.f32.mrb[0].mxu0
    %1446 = vmatprep.mubr.bf16.mxu0 0
    %1447 = vmatmul.mubr.bf16.gmra.mrb[0].mxu0 %v966
    %v1448 = vpop.f32.mrb[0].mxu0
    %v1449 = vadd.f32 %v278, %v1448
    %v1450 = vpop.f32.mrb[0].mxu0
    %v1451 = vpop.f32.mrb[0].mxu0
    %v1452 = vadd.f32 %v278, %v1451
    %v1453 = vpop.f32.mrb[0].mxu0
    %1454 = vmatprep.mubr.bf16.mxu0 0
    %1455 = vmatmul.mubr.bf16.gmra.mrb[0].mxu0 %v969
    %v1456 = vpop.f32.mrb[0].mxu0
    %v1457 = vadd.f32 %v278, %v1456
    %v1458 = vpop.f32.mrb[0].mxu0
    %v1459 = vpop.f32.mrb[0].mxu0
    %v1460 = vadd.f32 %v278, %v1459
    %v1461 = vpop.f32.mrb[0].mxu0
    %1462 = vmatprep.mubr.bf16.mxu0 0
    %1463 = vmatmul.mubr.bf16.gmra.mrb[0].mxu0 %v972
    %v1464 = vpop.f32.mrb[0].mxu0
    %v1465 = vadd.f32 %v278, %v1464
    %v1466 = vpop.f32.mrb[0].mxu0
    %v1467 = vpop.f32.mrb[0].mxu0
    %v1468 = vadd.f32 %v278, %v1467
    %v1469 = vpop.f32.mrb[0].mxu0
    %1470 = vmatprep.mubr.bf16.mxu0 0
    %1471 = vmatmul.mubr.bf16.gmra.mrb[0].mxu0 %v975
    %v1472 = vpop.f32.mrb[0].mxu0
    %v1473 = vadd.f32 %v278, %v1472
    %v1474 = vpop.f32.mrb[0].mxu0
    %v1475 = vpop.f32.mrb[0].mxu0
    %v1476 = vadd.f32 %v278, %v1475
    %v1477 = vpop.f32.mrb[0].mxu0
    %1478 = vmatprep.mubr.bf16.mxu0 0
    %1479 = vmatmul.mubr.bf16.gmra.mrb[0].mxu0 %v978
    %v1480 = vpop.f32.mrb[0].mxu0
    %v1481 = vadd.f32 %v278, %v1480
    %v1482 = vpop.f32.mrb[0].mxu0
    %v1483 = vpop.f32.mrb[0].mxu0
    %v1484 = vadd.f32 %v278, %v1483
    %v1485 = vpop.f32.mrb[0].mxu0
    %1486 = vmatprep.mubr.bf16.mxu0 0
    %1487 = vmatmul.mubr.bf16.gmra.mrb[0].mxu0 %v981
    %v1488 = vpop.f32.mrb[0].mxu0
    %v1489 = vadd.f32 %v278, %v1488
    %v1490 = vpop.f32.mrb[0].mxu0
    %v1491 = vpop.f32.mrb[0].mxu0
    %v1492 = vadd.f32 %v278, %v1491
    %v1493 = vpop.f32.mrb[0].mxu0
    %1494 = vmatprep.mubr.bf16.mxu0 0
    %1495 = vmatmul.mubr.bf16.gmra.mrb[0].mxu0 %v984
    %v1496 = vpop.f32.mrb[0].mxu0
    %v1497 = vadd.f32 %v278, %v1496
    %v1498 = vpop.f32.mrb[0].mxu0
    %v1499 = vpop.f32.mrb[0].mxu0
    %v1500 = vadd.f32 %v278, %v1499
    %v1501 = vpop.f32.mrb[0].mxu0
    %1502 = vmatprep.mubr.bf16.mxu0 0
    %1503 = vmatmul.mubr.bf16.gmra.mrb[0].mxu0 %v987
    %v1504 = vpop.f32.mrb[0].mxu0
    %v1505 = vadd.f32 %v278, %v1504
    %v1506 = vpop.f32.mrb[0].mxu0
    %v1507 = vpop.f32.mrb[0].mxu0
    %v1508 = vadd.f32 %v278, %v1507
    %v1509 = vpop.f32.mrb[0].mxu0
    %1510 = vmatprep.mubr.bf16.mxu0 0
    %1511 = vmatmul.mubr.bf16.gmra.mrb[0].mxu0 %v990
    %v1512 = vpop.f32.mrb[0].mxu0
    %v1513 = vadd.f32 %v278, %v1512
    %v1514 = vpop.f32.mrb[0].mxu0
    %v1515 = vpop.f32.mrb[0].mxu0
    %v1516 = vadd.f32 %v278, %v1515
    %v1517 = vpop.f32.mrb[0].mxu0
    %1518 = vmatprep.mubr.bf16.mxu0 0
    %1519 = vmatmul.mubr.bf16.gmra.mrb[0].mxu0 %v993
    %v1520 = vpop.f32.mrb[0].mxu0
    %v1521 = vadd.f32 %v278, %v1520
    %v1522 = vpop.f32.mrb[0].mxu0
    %v1523 = vpop.f32.mrb[0].mxu0
    %v1524 = vadd.f32 %v278, %v1523
    %v1525 = vpop.f32.mrb[0].mxu0
    %1526 = vmatprep.mubr.bf16.mxu0 0
    %1527 = vmatmul.mubr.bf16.gmra.mrb[0].mxu0 %v996
    %v1528 = vpop.f32.mrb[0].mxu0
    %v1529 = vadd.f32 %v278, %v1528
    %v1530 = vpop.f32.mrb[0].mxu0
    %v1531 = vpop.f32.mrb[0].mxu0
    %v1532 = vadd.f32 %v278, %v1531
    %v1533 = vpop.f32.mrb[0].mxu0
    %1534 = vmatprep.mubr.bf16.mxu0 0
    %1535 = vmatmul.mubr.bf16.gmra.mrb[0].mxu0 %v999
    %v1536 = vpop.f32.mrb[0].mxu0
    %v1537 = vadd.f32 %v278, %v1536
    %v1538 = vpop.f32.mrb[0].mxu0
    %v1539 = vpop.f32.mrb[0].mxu0
    %v1540 = vadd.f32 %v278, %v1539
    %v1541 = vpop.f32.mrb[0].mxu0
    %1542 = vmatprep.mubr.bf16.mxu0 0
    %1543 = vmatmul.mubr.bf16.gmra.mrb[0].mxu0 %v1002
    %v1544 = vpop.f32.mrb[0].mxu0
    %v1545 = vadd.f32 %v278, %v1544
    %v1546 = vpop.f32.mrb[0].mxu0
    %v1547 = vpop.f32.mrb[0].mxu0
    %v1548 = vadd.f32 %v278, %v1547
    %v1549 = vpop.f32.mrb[0].mxu0
    %1550 = vmatprep.mubr.bf16.mxu0 0
    %1551 = vmatmul.mubr.bf16.gmra.mrb[0].mxu0 %v1005
    %v1552 = vpop.f32.mrb[0].mxu0
    %v1553 = vadd.f32 %v278, %v1552
    %v1554 = vpop.f32.mrb[0].mxu0
    %v1555 = vpop.f32.mrb[0].mxu0
    %v1556 = vadd.f32 %v278, %v1555
    %v1557 = vpop.f32.mrb[0].mxu0
    %1558 = vmatprep.mubr.bf16.mxu0 0
    %1559 = vmatmul.mubr.bf16.gmra.mrb[0].mxu0 %v1008
    %v1560 = vpop.f32.mrb[0].mxu0
    %v1561 = vadd.f32 %v278, %v1560
    %v1562 = vpop.f32.mrb[0].mxu0
    %v1563 = vpop.f32.mrb[0].mxu0
    %v1564 = vadd.f32 %v278, %v1563
    %v1565 = vpop.f32.mrb[0].mxu0
    %1566 = vmatprep.mubr.bf16.mxu0 0
    %1567 = vmatmul.mubr.bf16.gmra.mrb[0].mxu0 %v1011
    %v1568 = vpop.f32.mrb[0].mxu0
    %v1569 = vadd.f32 %v278, %v1568
    %v1570 = vpop.f32.mrb[0].mxu0
    %v1571 = vpop.f32.mrb[0].mxu0
    %v1572 = vadd.f32 %v278, %v1571
    %v1573 = vpop.f32.mrb[0].mxu0
    %1574 = vmatprep.mubr.bf16.mxu0 0
    %1575 = vmatmul.mubr.bf16.gmra.mrb[0].mxu0 %v1014
    %v1576 = vpop.f32.mrb[0].mxu0
    %v1577 = vadd.f32 %v278, %v1576
    %v1578 = vpop.f32.mrb[0].mxu0
    %v1579 = vpop.f32.mrb[0].mxu0
    %v1580 = vadd.f32 %v278, %v1579
    %v1581 = vpop.f32.mrb[0].mxu0
    %1582 = vmatprep.mubr.bf16.mxu0 0
    %1583 = vmatmul.mubr.bf16.gmra.mrb[0].mxu0 %v1017
    %v1584 = vpop.f32.mrb[0].mxu0
    %v1585 = vadd.f32 %v278, %v1584
    %v1586 = vpop.f32.mrb[0].mxu0
    %v1587 = vpop.f32.mrb[0].mxu0
    %v1588 = vadd.f32 %v278, %v1587
    %v1589 = vpop.f32.mrb[0].mxu0
    %1590 = vmatprep.mubr.bf16.mxu0 0
    %1591 = vmatmul.mubr.bf16.gmra.mrb[0].mxu0 %v1020
    %v1592 = vpop.f32.mrb[0].mxu0
    %v1593 = vadd.f32 %v278, %v1592
    %v1594 = vpop.f32.mrb[0].mxu0
    %v1595 = vpop.f32.mrb[0].mxu0
    %v1596 = vadd.f32 %v278, %v1595
    %v1597 = vpop.f32.mrb[0].mxu0
    %1598 = vmatprep.mubr.bf16.mxu0 0
    %1599 = vmatmul.mubr.bf16.gmra.mrb[0].mxu0 %v1023
    %v1600 = vpop.f32.mrb[0].mxu0
    %v1601 = vadd.f32 %v278, %v1600
    %v1602 = vpop.f32.mrb[0].mxu0
    %v1603 = vpop.f32.mrb[0].mxu0
    %v1604 = vadd.f32 %v278, %v1603
    %v1605 = vpop.f32.mrb[0].mxu0
    %1606 = vmatprep.mubr.bf16.mxu0 0
    %1607 = vmatmul.mubr.bf16.gmra.mrb[0].mxu0 %v1026
    %v1608 = vpop.f32.mrb[0].mxu0
    %v1609 = vadd.f32 %v278, %v1608
    %v1610 = vpop.f32.mrb[0].mxu0
    %v1611 = vpop.f32.mrb[0].mxu0
    %v1612 = vadd.f32 %v278, %v1611
    %v1613 = vpop.f32.mrb[0].mxu0
    %1614 = vmatprep.mubr.bf16.mxu0 0
    %1615 = vmatmul.mubr.bf16.gmra.mrb[0].mxu0 %v1029
    %v1616 = vpop.f32.mrb[0].mxu0
    %v1617 = vadd.f32 %v278, %v1616
    %v1618 = vpop.f32.mrb[0].mxu0
    %v1619 = vpop.f32.mrb[0].mxu0
    %v1620 = vadd.f32 %v278, %v1619
    %v1621 = vpop.f32.mrb[0].mxu0
    %1622 = vmatprep.mubr.bf16.mxu0 0
    %1623 = vmatmul.mubr.bf16.gmra.mrb[0].mxu0 %v1032
    %v1624 = vpop.f32.mrb[0].mxu0
    %v1625 = vadd.f32 %v278, %v1624
    %v1626 = vpop.f32.mrb[0].mxu0
    %v1627 = vpop.f32.mrb[0].mxu0
    %v1628 = vadd.f32 %v278, %v1627
    %v1629 = vpop.f32.mrb[0].mxu0
    %1630 = vmatprep.mubr.bf16.mxu0 0
    %1631 = vmatmul.mubr.bf16.gmra.mrb[0].mxu0 %v1035
    %v1632 = vpop.f32.mrb[0].mxu0
    %v1633 = vadd.f32 %v278, %v1632
    %v1634 = vpop.f32.mrb[0].mxu0
    %v1635 = vpop.f32.mrb[0].mxu0
    %v1636 = vadd.f32 %v278, %v1635
    %v1637 = vpop.f32.mrb[0].mxu0
    %1638 = vmatprep.mubr.bf16.mxu0 0
    %1639 = vmatmul.mubr.bf16.gmra.mrb[0].mxu0 %v1038
    %v1640 = vpop.f32.mrb[0].mxu0
    %v1641 = vadd.f32 %v278, %v1640
    %v1642 = vpop.f32.mrb[0].mxu0
    %v1643 = vpop.f32.mrb[0].mxu0
    %v1644 = vadd.f32 %v278, %v1643
    %v1645 = vpop.f32.mrb[0].mxu0
    %1646 = vmatprep.mubr.bf16.mxu0 0
    %1647 = vmatmul.mubr.bf16.gmra.mrb[0].mxu0 %v1041
    %v1648 = vpop.f32.mrb[0].mxu0
    %v1649 = vadd.f32 %v278, %v1648
    %v1650 = vpop.f32.mrb[0].mxu0
    %v1651 = vpop.f32.mrb[0].mxu0
    %v1652 = vadd.f32 %v278, %v1651
    %v1653 = vpop.f32.mrb[0].mxu0
    %1654 = vmatprep.mubr.bf16.mxu0 0
    %1655 = vmatmul.mubr.bf16.gmra.mrb[0].mxu0 %v1044
    %v1656 = vpop.f32.mrb[0].mxu0
    %v1657 = vadd.f32 %v278, %v1656
    %v1658 = vpop.f32.mrb[0].mxu0
    %v1659 = vpop.f32.mrb[0].mxu0
    %v1660 = vadd.f32 %v278, %v1659
    %v1661 = vpop.f32.mrb[0].mxu0
    %1662 = vmatprep.mubr.bf16.mxu0 0
    %1663 = vmatmul.mubr.bf16.gmra.mrb[0].mxu0 %v1047
    %v1664 = vpop.f32.mrb[0].mxu0
    %v1665 = vadd.f32 %v278, %v1664
    %v1666 = vpop.f32.mrb[0].mxu0
    %v1667 = vpop.f32.mrb[0].mxu0
    %v1668 = vadd.f32 %v278, %v1667
    %v1669 = vpop.f32.mrb[0].mxu0
    %1670 = vmatprep.mubr.bf16.mxu0 0
    %1671 = vmatmul.mubr.bf16.gmra.mrb[0].mxu0 %v1050
    %v1672 = vpop.f32.mrb[0].mxu0
    %v1673 = vadd.f32 %v278, %v1672
    %v1674 = vpop.f32.mrb[0].mxu0
    %v1675 = vpop.f32.mrb[0].mxu0
    %v1676 = vadd.f32 %v278, %v1675
    %v1677 = vpop.f32.mrb[0].mxu0
    %1678 = vmatprep.mubr.bf16.mxu0 0
    %1679 = vmatmul.mubr.bf16.gmra.mrb[0].mxu0 %v1053
    %v1680 = vpop.f32.mrb[0].mxu0
    %v1681 = vadd.f32 %v278, %v1680
    %v1682 = vpop.f32.mrb[0].mxu0
    %v1683 = vpop.f32.mrb[0].mxu0
    %v1684 = vadd.f32 %v278, %v1683
    %v1685 = vpop.f32.mrb[0].mxu0
    %1686 = vmatprep.mubr.bf16.mxu0 0
    %1687 = vmatmul.mubr.bf16.gmra.mrb[0].mxu0 %v1056
    %v1688 = vpop.f32.mrb[0].mxu0
    %v1689 = vadd.f32 %v278, %v1688
    %v1690 = vpop.f32.mrb[0].mxu0
    %v1691 = vpop.f32.mrb[0].mxu0
    %v1692 = vadd.f32 %v278, %v1691
    %v1693 = vpop.f32.mrb[0].mxu0
    %1694 = vmatprep.mubr.bf16.mxu0 0
    %1695 = vmatmul.mubr.bf16.gmra.mrb[0].mxu0 %v1059
    %v1696 = vpop.f32.mrb[0].mxu0
    %v1697 = vadd.f32 %v278, %v1696
    %v1698 = vpop.f32.mrb[0].mxu0
    %v1699 = vpop.f32.mrb[0].mxu0
    %v1700 = vadd.f32 %v278, %v1699
    %v1701 = vpop.f32.mrb[0].mxu0
    %1702 = vmatprep.mubr.bf16.mxu0 0
    %1703 = vmatmul.mubr.bf16.gmra.mrb[0].mxu0 %v1062
    %v1704 = vpop.f32.mrb[0].mxu0
    %v1705 = vadd.f32 %v278, %v1704
    %v1706 = vpop.f32.mrb[0].mxu0
    %v1707 = vpop.f32.mrb[0].mxu0
    %v1708 = vadd.f32 %v278, %v1707
    %v1709 = vpop.f32.mrb[0].mxu0
    %1710 = vmatprep.mubr.bf16.mxu0 0
    %1711 = vmatmul.mubr.bf16.gmra.mrb[0].mxu0 %v1065
    %v1712 = vpop.f32.mrb[0].mxu0
    %v1713 = vadd.f32 %v278, %v1712
    %v1714 = vpop.f32.mrb[0].mxu0
    %v1715 = vpop.f32.mrb[0].mxu0
    %v1716 = vadd.f32 %v278, %v1715
    %v1717 = vpop.f32.mrb[0].mxu0
    %1718 = vmatprep.mubr.bf16.mxu0 0
    %1719 = vmatmul.mubr.bf16.gmra.mrb[0].mxu0 %v1068
    %v1720 = vpop.f32.mrb[0].mxu0
    %v1721 = vadd.f32 %v278, %v1720
    %v1722 = vpop.f32.mrb[0].mxu0
    %v1723 = vpop.f32.mrb[0].mxu0
    %v1724 = vadd.f32 %v278, %v1723
    %v1725 = vpop.f32.mrb[0].mxu0
    %1726 = vmatprep.mubr.bf16.mxu0 0
    %1727 = vmatmul.mubr.bf16.gmra.mrb[0].mxu0 %v1071
    %v1728 = vpop.f32.mrb[0].mxu0
    %v1729 = vadd.f32 %v278, %v1728
    %v1730 = vpop.f32.mrb[0].mxu0
    %v1731 = vpop.f32.mrb[0].mxu0
    %v1732 = vadd.f32 %v278, %v1731
    %v1733 = vpop.f32.mrb[0].mxu0
    %1734 = vmatprep.mubr.bf16.mxu0 0
    %1735 = vmatmul.mubr.bf16.gmra.mrb[0].mxu0 %v1074
    %v1736 = vpop.f32.mrb[0].mxu0
    %v1737 = vadd.f32 %v278, %v1736
    %v1738 = vpop.f32.mrb[0].mxu0
    %v1739 = vpop.f32.mrb[0].mxu0
    %v1740 = vadd.f32 %v278, %v1739
    %v1741 = vpop.f32.mrb[0].mxu0
    %1742 = vmatprep.mubr.bf16.mxu0 0
    %1743 = vmatmul.mubr.bf16.gmra.mrb[0].mxu0 %v1077
    %v1744 = vpop.f32.mrb[0].mxu0
    %v1745 = vadd.f32 %v278, %v1744
    %v1746 = vpop.f32.mrb[0].mxu0
    %v1747 = vpop.f32.mrb[0].mxu0
    %v1748 = vadd.f32 %v278, %v1747
    %v1749 = vpop.f32.mrb[0].mxu0
    %1750 = vmatprep.mubr.bf16.mxu0 0
    %1751 = vmatmul.mubr.bf16.gmra.mrb[0].mxu0 %v1080
    %v1752 = vpop.f32.mrb[0].mxu0
    %v1753 = vadd.f32 %v278, %v1752
    %v1754 = vpop.f32.mrb[0].mxu0
    %v1755 = vpop.f32.mrb[0].mxu0
    %v1756 = vadd.f32 %v278, %v1755
    %v1757 = vpop.f32.mrb[0].mxu0
    %1758 = vmatprep.mubr.bf16.mxu0 0
    %1759 = vmatmul.mubr.bf16.gmra.mrb[0].mxu0 %v1083
    %v1760 = vpop.f32.mrb[0].mxu0
    %v1761 = vadd.f32 %v278, %v1760
    %v1762 = vpop.f32.mrb[0].mxu0
    %v1763 = vpop.f32.mrb[0].mxu0
    %v1764 = vadd.f32 %v278, %v1763
    %v1765 = vpop.f32.mrb[0].mxu0
    %1766 = vmatprep.mubr.bf16.mxu0 0
    %1767 = vmatmul.mubr.bf16.gmra.mrb[0].mxu0 %v1086
    %v1768 = vpop.f32.mrb[0].mxu0
    %v1769 = vadd.f32 %v278, %v1768
    %v1770 = vpop.f32.mrb[0].mxu0
    %v1771 = vpop.f32.mrb[0].mxu0
    %v1772 = vadd.f32 %v278, %v1771
    %v1773 = vpop.f32.mrb[0].mxu0
    %1774 = vmatprep.mubr.bf16.mxu0 0
    %1775 = vmatmul.mubr.bf16.gmra.mrb[0].mxu0 %v1089
    %v1776 = vpop.f32.mrb[0].mxu0
    %v1777 = vadd.f32 %v278, %v1776
    %v1778 = vpop.f32.mrb[0].mxu0
    %v1779 = vpop.f32.mrb[0].mxu0
    %v1780 = vadd.f32 %v278, %v1779
    %v1781 = vpop.f32.mrb[0].mxu0
    %1782 = vmatprep.mubr.bf16.mxu0 0
    %1783 = vmatmul.mubr.bf16.gmra.mrb[0].mxu0 %v1092
    %v1784 = vpop.f32.mrb[0].mxu0
    %v1785 = vadd.f32 %v278, %v1784
    %v1786 = vpop.f32.mrb[0].mxu0
    %v1787 = vpop.f32.mrb[0].mxu0
    %v1788 = vadd.f32 %v278, %v1787
    %v1789 = vpop.f32.mrb[0].mxu0
    %1790 = vmatprep.mubr.bf16.mxu0 0
    %1791 = vmatmul.mubr.bf16.gmra.mrb[0].mxu0 %v1095
    %v1792 = vpop.f32.mrb[0].mxu0
    %v1793 = vadd.f32 %v278, %v1792
    %v1794 = vpop.f32.mrb[0].mxu0
    %v1795 = vpop.f32.mrb[0].mxu0
    %v1796 = vadd.f32 %v278, %v1795
    %v1797 = vpop.f32.mrb[0].mxu0
    %1798 = vmatprep.mubr.bf16.mxu0 0
    %1799 = vmatmul.mubr.bf16.gmra.mrb[0].mxu0 %v1098
    %v1800 = vpop.f32.mrb[0].mxu0
    %v1801 = vadd.f32 %v278, %v1800
    %v1802 = vpop.f32.mrb[0].mxu0
    %v1803 = vpop.f32.mrb[0].mxu0
    %v1804 = vadd.f32 %v278, %v1803
    %v1805 = vpop.f32.mrb[0].mxu0
    %1806 = vmatprep.mubr.bf16.mxu0 0
    %1807 = vmatmul.mubr.bf16.gmra.mrb[0].mxu0 %v1101
    %v1808 = vpop.f32.mrb[0].mxu0
    %v1809 = vadd.f32 %v278, %v1808
    %v1810 = vpop.f32.mrb[0].mxu0
    %v1811 = vpop.f32.mrb[0].mxu0
    %v1812 = vadd.f32 %v278, %v1811
    %v1813 = vpop.f32.mrb[0].mxu0
    %1814 = vmatprep.mubr.bf16.mxu0 0
    %1815 = vmatmul.mubr.bf16.gmra.mrb[0].mxu0 %v1104
    %v1816 = vpop.f32.mrb[0].mxu0
    %v1817 = vadd.f32 %v278, %v1816
    %v1818 = vpop.f32.mrb[0].mxu0
    %v1819 = vpop.f32.mrb[0].mxu0
    %v1820 = vadd.f32 %v278, %v1819
    %v1821 = vpop.f32.mrb[0].mxu0
    %1822 = vmatprep.mubr.bf16.mxu0 0
    %1823 = vmatmul.mubr.bf16.gmra.mrb[0].mxu0 %v1107
    %v1824 = vpop.f32.mrb[0].mxu0
    %v1825 = vadd.f32 %v278, %v1824
    %v1826 = vpop.f32.mrb[0].mxu0
    %v1827 = vpop.f32.mrb[0].mxu0
    %v1828 = vadd.f32 %v278, %v1827
    %v1829 = vpop.f32.mrb[0].mxu0
    %1830 = vmatprep.mubr.bf16.mxu0 0
    %1831 = vmatmul.mubr.bf16.gmra.mrb[0].mxu0 %v1110
    %v1832 = vpop.f32.mrb[0].mxu0
    %v1833 = vadd.f32 %v278, %v1832
    %v1834 = vpop.f32.mrb[0].mxu0
    %v1835 = vpop.f32.mrb[0].mxu0
    %v1836 = vadd.f32 %v278, %v1835
    %v1837 = vpop.f32.mrb[0].mxu0
    %1838 = vmatprep.mubr.bf16.mxu0 0
    %1839 = vmatmul.mubr.bf16.gmra.mrb[0].mxu0 %v1113
    %v1840 = vpop.f32.mrb[0].mxu0
    %v1841 = vadd.f32 %v278, %v1840
    %v1842 = vpop.f32.mrb[0].mxu0
    %v1843 = vpop.f32.mrb[0].mxu0
    %v1844 = vadd.f32 %v278, %v1843
    %v1845 = vpop.f32.mrb[0].mxu0
    %1846 = vmatprep.mubr.bf16.mxu0 0
    %1847 = vmatmul.mubr.bf16.gmra.mrb[0].mxu0 %v1116
    %v1848 = vpop.f32.mrb[0].mxu0
    %v1849 = vadd.f32 %v278, %v1848
    %v1850 = vpop.f32.mrb[0].mxu0
    %v1851 = vpop.f32.mrb[0].mxu0
    %v1852 = vadd.f32 %v278, %v1851
    %v1853 = vpop.f32.mrb[0].mxu0
    %1854 = vmatprep.mubr.bf16.mxu0 0
    %1855 = vmatmul.mubr.bf16.gmra.mrb[0].mxu0 %v1119
    %v1856 = vpop.f32.mrb[0].mxu0
    %v1857 = vadd.f32 %v278, %v1856
    %v1858 = vpop.f32.mrb[0].mxu0
    %v1859 = vpop.f32.mrb[0].mxu0
    %v1860 = vadd.f32 %v278, %v1859
    %v1861 = vpop.f32.mrb[0].mxu0
    %1862 = vmatprep.mubr.bf16.mxu0 0
    %1863 = vmatmul.mubr.bf16.gmra.mrb[0].mxu0 %v1122
    %v1864 = vpop.f32.mrb[0].mxu0
    %v1865 = vadd.f32 %v278, %v1864
    %v1866 = vpop.f32.mrb[0].mxu0
    %v1867 = vpop.f32.mrb[0].mxu0
    %v1868 = vadd.f32 %v278, %v1867
    %v1869 = vpop.f32.mrb[0].mxu0
    %1870 = vmatprep.mubr.bf16.mxu0 0
    %1871 = vmatmul.mubr.bf16.gmra.mrb[0].mxu0 %v1125
    %v1872 = vpop.f32.mrb[0].mxu0
    %v1873 = vadd.f32 %v278, %v1872
    %v1874 = vpop.f32.mrb[0].mxu0
    %v1875 = vpop.f32.mrb[0].mxu0
    %v1876 = vadd.f32 %v278, %v1875
    %v1877 = vpop.f32.mrb[0].mxu0
    %1878 = vmatprep.mubr.bf16.mxu0 0
    %1879 = vmatmul.mubr.bf16.gmra.mrb[0].mxu0 %v1128
    %v1880 = vpop.f32.mrb[0].mxu0
    %v1881 = vadd.f32 %v278, %v1880
    %v1882 = vpop.f32.mrb[0].mxu0
    %v1883 = vpop.f32.mrb[0].mxu0
    %v1884 = vadd.f32 %v278, %v1883
    %v1885 = vpop.f32.mrb[0].mxu0
    %1886 = vmatprep.mubr.bf16.mxu0 0
    %1887 = vmatmul.mubr.bf16.gmra.mrb[0].mxu0 %v1131
    %v1888 = vpop.f32.mrb[0].mxu0
    %v1889 = vadd.f32 %v278, %v1888
    %v1890 = vpop.f32.mrb[0].mxu0
    %v1891 = vpop.f32.mrb[0].mxu0
    %v1892 = vadd.f32 %v278, %v1891
    %v1893 = vpop.f32.mrb[0].mxu0
    %1894 = vmatprep.mubr.bf16.mxu0 0
    %1895 = vmatmul.mubr.bf16.gmra.mrb[0].mxu0 %v1134
    %v1896 = vpop.f32.mrb[0].mxu0
    %v1897 = vadd.f32 %v278, %v1896
    %v1898 = vpop.f32.mrb[0].mxu0
    %v1899 = vpop.f32.mrb[0].mxu0
    %v1900 = vadd.f32 %v278, %v1899
    %v1901 = vpop.f32.mrb[0].mxu0
    %1902 = vmatprep.mubr.bf16.mxu0 0
    %1903 = vmatmul.mubr.bf16.gmra.mrb[0].mxu0 %v1137
    %v1904 = vpop.f32.mrb[0].mxu0
    %v1905 = vadd.f32 %v278, %v1904
    %v1906 = vpop.f32.mrb[0].mxu0
    %v1907 = vpop.f32.mrb[0].mxu0
    %v1908 = vadd.f32 %v278, %v1907
    %v1909 = vpop.f32.mrb[0].mxu0
    %1910 = vmatprep.mubr.bf16.mxu0 0
    %1911 = vmatmul.mubr.bf16.gmra.mrb[0].mxu0 %v1140
    %v1912 = vpop.f32.mrb[0].mxu0
    %v1913 = vadd.f32 %v278, %v1912
    %v1914 = vpop.f32.mrb[0].mxu0
    %v1915 = vpop.f32.mrb[0].mxu0
    %v1916 = vadd.f32 %v278, %v1915
    %v1917 = vpop.f32.mrb[0].mxu0
    %1918 = vmatprep.mubr.bf16.mxu0 0
    %1919 = vmatmul.mubr.bf16.gmra.mrb[0].mxu0 %v1143
    %v1920 = vpop.f32.mrb[0].mxu0
    %v1921 = vadd.f32 %v278, %v1920
    %v1922 = vpop.f32.mrb[0].mxu0
    %v1923 = vpop.f32.mrb[0].mxu0
    %v1924 = vadd.f32 %v278, %v1923
    %v1925 = vpop.f32.mrb[0].mxu0
    %1926 = vmatprep.mubr.bf16.mxu0 0
    %1927 = vmatmul.mubr.bf16.gmra.mrb[0].mxu0 %v1146
    %v1928 = vpop.f32.mrb[0].mxu0
    %v1929 = vadd.f32 %v278, %v1928
    %v1930 = vpop.f32.mrb[0].mxu0
    %v1931 = vpop.f32.mrb[0].mxu0
    %v1932 = vadd.f32 %v278, %v1931
    %v1933 = vpop.f32.mrb[0].mxu0
    %1934 = vmatprep.mubr.bf16.mxu0 0
    %1935 = vmatmul.mubr.bf16.gmra.mrb[0].mxu0 %v1149
    %v1936 = vpop.f32.mrb[0].mxu0
    %v1937 = vadd.f32 %v278, %v1936
    %v1938 = vpop.f32.mrb[0].mxu0
    %v1939 = vpop.f32.mrb[0].mxu0
    %v1940 = vadd.f32 %v278, %v1939
    %v1941 = vpop.f32.mrb[0].mxu0
    %1942 = vmatprep.mubr.bf16.mxu0 0
    %1943 = vmatmul.mubr.bf16.gmra.mrb[0].mxu0 %v1152
    %v1944 = vpop.f32.mrb[0].mxu0
    %v1945 = vadd.f32 %v278, %v1944
    %v1946 = vpop.f32.mrb[0].mxu0
    %v1947 = vpop.f32.mrb[0].mxu0
    %v1948 = vadd.f32 %v278, %v1947
    %v1949 = vpop.f32.mrb[0].mxu0
    %1950 = vmatprep.mubr.bf16.mxu0 0
    %1951 = vmatmul.mubr.bf16.gmra.mrb[0].mxu0 %v1155
    %v1952 = vpop.f32.mrb[0].mxu0
    %v1953 = vadd.f32 %v278, %v1952
    %v1954 = vpop.f32.mrb[0].mxu0
    %v1955 = vpop.f32.mrb[0].mxu0
    %v1956 = vadd.f32 %v278, %v1955
    %v1957 = vpop.f32.mrb[0].mxu0
    %1958 = vmatprep.mubr.bf16.mxu0 0
    %1959 = vmatmul.mubr.bf16.gmra.mrb[0].mxu0 %v1158
    %v1960 = vpop.f32.mrb[0].mxu0
    %v1961 = vadd.f32 %v278, %v1960
    %v1962 = vpop.f32.mrb[0].mxu0
    %v1963 = vpop.f32.mrb[0].mxu0
    %v1964 = vadd.f32 %v278, %v1963
    %v1965 = vpop.f32.mrb[0].mxu0
    %1966 = vmatprep.mubr.bf16.mxu0 0
    %1967 = vmatmul.mubr.bf16.gmra.mrb[0].mxu0 %v1161
    %v1968 = vpop.f32.mrb[0].mxu0
    %v1969 = vadd.f32 %v278, %v1968
    %v1970 = vpop.f32.mrb[0].mxu0
    %v1971 = vpop.f32.mrb[0].mxu0
    %v1972 = vadd.f32 %v278, %v1971
    %v1973 = vpop.f32.mrb[0].mxu0
    %1974 = vmatprep.mubr.bf16.mxu0 0
    %1975 = vmatmul.mubr.bf16.gmra.mrb[0].mxu0 %v1164
    %v1976 = vpop.f32.mrb[0].mxu0
    %v1977 = vadd.f32 %v278, %v1976
    %v1978 = vpop.f32.mrb[0].mxu0
    %v1979 = vpop.f32.mrb[0].mxu0
    %v1980 = vadd.f32 %v278, %v1979
    %v1981 = vpop.f32.mrb[0].mxu0
    %1982 = vmatprep.mubr.bf16.mxu0 0
    %1983 = vmatmul.mubr.bf16.gmra.mrb[0].mxu0 %v1167
    %v1984 = vpop.f32.mrb[0].mxu0
    %v1985 = vadd.f32 %v278, %v1984
    %v1986 = vpop.f32.mrb[0].mxu0
    %v1987 = vpop.f32.mrb[0].mxu0
    %v1988 = vadd.f32 %v278, %v1987
    %v1989 = vpop.f32.mrb[0].mxu0
    %1990 = vmatprep.mubr.bf16.mxu0 0
    %1991 = vmatmul.mubr.bf16.gmra.mrb[0].mxu0 %v1170
    %v1992 = vpop.f32.mrb[0].mxu0
    %v1993 = vadd.f32 %v278, %v1992
    %v1994 = vpop.f32.mrb[0].mxu0
    %v1995 = vpop.f32.mrb[0].mxu0
    %v1996 = vadd.f32 %v278, %v1995
    %v1997 = vpop.f32.mrb[0].mxu0
    %1998 = vmatprep.mubr.bf16.mxu0 0
    %1999 = vmatmul.mubr.bf16.gmra.mrb[0].mxu0 %v1173
    %v2000 = vpop.f32.mrb[0].mxu0
    %v2001 = vadd.f32 %v278, %v2000
    %v2002 = vpop.f32.mrb[0].mxu0
    %v2003 = vpop.f32.mrb[0].mxu0
    %v2004 = vadd.f32 %v278, %v2003
    %v2005 = vpop.f32.mrb[0].mxu0
    %2006 = vmatprep.mubr.bf16.mxu0 0
    %2007 = vmatmul.mubr.bf16.gmra.mrb[0].mxu0 %v1176
    %v2008 = vpop.f32.mrb[0].mxu0
    %v2009 = vadd.f32 %v278, %v2008
    %v2010 = vpop.f32.mrb[0].mxu0
    %v2011 = vpop.f32.mrb[0].mxu0
    %v2012 = vadd.f32 %v278, %v2011
    %v2013 = vpop.f32.mrb[0].mxu0
    %2014 = vmatprep.mubr.bf16.mxu0 0
    %2015 = vmatmul.mubr.bf16.gmra.mrb[0].mxu0 %v1179
    %v2016 = vpop.f32.mrb[0].mxu0
    %v2017 = vadd.f32 %v278, %v2016
    %v2018 = vpop.f32.mrb[0].mxu0
    %v2019 = vpop.f32.mrb[0].mxu0
    %v2020 = vadd.f32 %v278, %v2019
    %v2021 = vpop.f32.mrb[0].mxu0
    %2022 = vmatprep.mubr.bf16.mxu0 0
    %2023 = vmatmul.mubr.bf16.gmra.mrb[0].mxu0 %v1182
    %v2024 = vpop.f32.mrb[0].mxu0
    %v2025 = vadd.f32 %v278, %v2024
    %v2026 = vpop.f32.mrb[0].mxu0
    %v2027 = vpop.f32.mrb[0].mxu0
    %v2028 = vadd.f32 %v278, %v2027
    %v2029 = vpop.f32.mrb[0].mxu0
    %2030 = vmatprep.mubr.bf16.mxu0 0
    %2031 = vmatmul.mubr.bf16.gmra.mrb[0].mxu0 %v1185
    %v2032 = vpop.f32.mrb[0].mxu0
    %v2033 = vadd.f32 %v278, %v2032
    %v2034 = vpop.f32.mrb[0].mxu0
    %v2035 = vpop.f32.mrb[0].mxu0
    %v2036 = vadd.f32 %v278, %v2035
    %v2037 = vpop.f32.mrb[0].mxu0
    %2038 = vmatprep.mubr.bf16.mxu0 0
    %2039 = vmatmul.mubr.bf16.gmra.mrb[0].mxu0 %v1188
    %v2040 = vpop.f32.mrb[0].mxu0
    %v2041 = vadd.f32 %v278, %v2040
    %v2042 = vpop.f32.mrb[0].mxu0
    %v2043 = vpop.f32.mrb[0].mxu0
    %v2044 = vadd.f32 %v278, %v2043
    %v2045 = vpop.f32.mrb[0].mxu0
    %2046 = vmatprep.mubr.bf16.mxu0 0
    %2047 = vmatmul.mubr.bf16.gmra.mrb[0].mxu0 %v1191
    %v2048 = vpop.f32.mrb[0].mxu0
    %v2049 = vadd.f32 %v278, %v2048
    %v2050 = vpop.f32.mrb[0].mxu0
    %v2051 = vpop.f32.mrb[0].mxu0
    %v2052 = vadd.f32 %v278, %v2051
    %v2053 = vpop.f32.mrb[0].mxu0
    %2054 = vmatprep.mubr.bf16.mxu0 0
    %2055 = vmatmul.mubr.bf16.gmra.mrb[0].mxu0 %v1194
    %v2056 = vpop.f32.mrb[0].mxu0
    %v2057 = vadd.f32 %v278, %v2056
    %v2058 = vpop.f32.mrb[0].mxu0
    %v2059 = vpop.f32.mrb[0].mxu0
    %v2060 = vadd.f32 %v278, %v2059
    %v2061 = vpop.f32.mrb[0].mxu0
    %2062 = vmatprep.mubr.bf16.mxu0 0
    %2063 = vmatmul.mubr.bf16.gmra.mrb[0].mxu0 %v1197
    %v2064 = vpop.f32.mrb[0].mxu0
    %v2065 = vadd.f32 %v278, %v2064
    %v2066 = vpop.f32.mrb[0].mxu0
    %v2067 = vpop.f32.mrb[0].mxu0
    %v2068 = vadd.f32 %v278, %v2067
    %v2069 = vpop.f32.mrb[0].mxu0
    %2070 = vmatprep.mubr.bf16.mxu0 0
    %2071 = vmatmul.mubr.bf16.gmra.mrb[0].mxu0 %v1200
    %v2072 = vpop.f32.mrb[0].mxu0
    %v2073 = vadd.f32 %v278, %v2072
    %v2074 = vpop.f32.mrb[0].mxu0
    %v2075 = vpop.f32.mrb[0].mxu0
    %v2076 = vadd.f32 %v278, %v2075
    %v2077 = vpop.f32.mrb[0].mxu0
    %2078 = vmatprep.mubr.bf16.mxu0 0
    %2079 = vmatmul.mubr.bf16.gmra.mrb[0].mxu0 %v1203
    %v2080 = vpop.f32.mrb[0].mxu0
    %v2081 = vadd.f32 %v278, %v2080
    %v2082 = vpop.f32.mrb[0].mxu0
    %v2083 = vpop.f32.mrb[0].mxu0
    %v2084 = vadd.f32 %v278, %v2083
    %v2085 = vpop.f32.mrb[0].mxu0
    %2086 = vmatprep.mubr.bf16.mxu0 0
    %2087 = vmatmul.mubr.bf16.gmra.mrb[0].mxu0 %v1206
    %v2088 = vpop.f32.mrb[0].mxu0
    %v2089 = vadd.f32 %v278, %v2088
    %v2090 = vpop.f32.mrb[0].mxu0
    %v2091 = vpop.f32.mrb[0].mxu0
    %v2092 = vadd.f32 %v278, %v2091
    %v2093 = vpop.f32.mrb[0].mxu0
    %2094 = vmatprep.mubr.bf16.mxu0 0
    %2095 = vmatmul.mubr.bf16.gmra.mrb[0].mxu0 %v1209
    %v2096 = vpop.f32.mrb[0].mxu0
    %v2097 = vadd.f32 %v278, %v2096
    %v2098 = vpop.f32.mrb[0].mxu0
    %v2099 = vpop.f32.mrb[0].mxu0
    %v2100 = vadd.f32 %v278, %v2099
    %v2101 = vpop.f32.mrb[0].mxu0
    %2102 = vmatprep.mubr.bf16.mxu0 0
    %2103 = vmatmul.mubr.bf16.gmra.mrb[0].mxu0 %v1212
    %v2104 = vpop.f32.mrb[0].mxu0
    %v2105 = vadd.f32 %v278, %v2104
    %v2106 = vpop.f32.mrb[0].mxu0
    %v2107 = vpop.f32.mrb[0].mxu0
    %v2108 = vadd.f32 %v278, %v2107
    %v2109 = vpop.f32.mrb[0].mxu0
    %2110 = vmatprep.mubr.bf16.mxu0 0
    %2111 = vmatmul.mubr.bf16.gmra.mrb[0].mxu0 %v1215
    %v2112 = vpop.f32.mrb[0].mxu0
    %v2113 = vadd.f32 %v278, %v2112
    %v2114 = vpop.f32.mrb[0].mxu0
    %v2115 = vpop.f32.mrb[0].mxu0
    %v2116 = vadd.f32 %v278, %v2115
    %v2117 = vpop.f32.mrb[0].mxu0
    %2118 = vmatprep.mubr.bf16.mxu0 0
    %2119 = vmatmul.mubr.bf16.gmra.mrb[0].mxu0 %v1218
    %v2120 = vpop.f32.mrb[0].mxu0
    %v2121 = vadd.f32 %v278, %v2120
    %v2122 = vpop.f32.mrb[0].mxu0
    %v2123 = vpop.f32.mrb[0].mxu0
    %v2124 = vadd.f32 %v278, %v2123
    %v2125 = vpop.f32.mrb[0].mxu0
    %2126 = vmatprep.mubr.bf16.mxu0 0
    %2127 = vmatmul.mubr.bf16.gmra.mrb[0].mxu0 %v1221
    %v2128 = vpop.f32.mrb[0].mxu0
    %v2129 = vadd.f32 %v278, %v2128
    %v2130 = vpop.f32.mrb[0].mxu0
    %v2131 = vpop.f32.mrb[0].mxu0
    %v2132 = vadd.f32 %v278, %v2131
    %v2133 = vpop.f32.mrb[0].mxu0
    %2134 = vmatprep.mubr.bf16.mxu0 0
    %2135 = vmatmul.mubr.bf16.gmra.mrb[0].mxu0 %v1224
    %v2136 = vpop.f32.mrb[0].mxu0
    %v2137 = vadd.f32 %v278, %v2136
    %v2138 = vpop.f32.mrb[0].mxu0
    %v2139 = vpop.f32.mrb[0].mxu0
    %v2140 = vadd.f32 %v278, %v2139
    %v2141 = vpop.f32.mrb[0].mxu0
    %2142 = vmatprep.mubr.bf16.mxu0 0
    %2143 = vmatmul.mubr.bf16.gmra.mrb[0].mxu0 %v1227
    %v2144 = vpop.f32.mrb[0].mxu0
    %v2145 = vadd.f32 %v278, %v2144
    %v2146 = vpop.f32.mrb[0].mxu0
    %v2147 = vpop.f32.mrb[0].mxu0
    %v2148 = vadd.f32 %v278, %v2147
    %v2149 = vpop.f32.mrb[0].mxu0
    %2150 = vmatprep.mubr.bf16.mxu0 0
    %2151 = vmatmul.mubr.bf16.gmra.mrb[0].mxu0 %v1230
    %v2152 = vpop.f32.mrb[0].mxu0
    %v2153 = vadd.f32 %v278, %v2152
    %v2154 = vpop.f32.mrb[0].mxu0
    %v2155 = vpop.f32.mrb[0].mxu0
    %v2156 = vadd.f32 %v278, %v2155
    %v2157 = vpop.f32.mrb[0].mxu0
    %2158 = vmatprep.mubr.bf16.mxu0 0
    %2159 = vmatmul.mubr.bf16.gmra.mrb[0].mxu0 %v1233
    %v2160 = vpop.f32.mrb[0].mxu0
    %v2161 = vadd.f32 %v278, %v2160
    %v2162 = vpop.f32.mrb[0].mxu0
    %v2163 = vpop.f32.mrb[0].mxu0
    %v2164 = vadd.f32 %v278, %v2163
    %v2165 = vpop.f32.mrb[0].mxu0
    %2166 = vmatprep.mubr.bf16.mxu0 0
    %2167 = vmatmul.mubr.bf16.gmra.mrb[0].mxu0 %v1236
    %v2168 = vpop.f32.mrb[0].mxu0
    %v2169 = vadd.f32 %v278, %v2168
    %v2170 = vpop.f32.mrb[0].mxu0
    %v2171 = vpop.f32.mrb[0].mxu0
    %v2172 = vadd.f32 %v278, %v2171
    %v2173 = vpop.f32.mrb[0].mxu0
    %2174 = vmatprep.mubr.bf16.mxu0 0
    %2175 = vmatmul.mubr.bf16.gmra.mrb[0].mxu0 %v1239
    %v2176 = vpop.f32.mrb[0].mxu0
    %v2177 = vadd.f32 %v278, %v2176
    %v2178 = vpop.f32.mrb[0].mxu0
    %v2179 = vpop.f32.mrb[0].mxu0
    %v2180 = vadd.f32 %v278, %v2179
    %v2181 = vpop.f32.mrb[0].mxu0
    %2182 = vmatprep.mubr.bf16.mxu0 0
    %2183 = vmatmul.mubr.bf16.gmra.mrb[0].mxu0 %v1242
    %v2184 = vpop.f32.mrb[0].mxu0
    %v2185 = vadd.f32 %v278, %v2184
    %v2186 = vpop.f32.mrb[0].mxu0
    %v2187 = vpop.f32.mrb[0].mxu0
    %v2188 = vadd.f32 %v278, %v2187
    %v2189 = vpop.f32.mrb[0].mxu0
    %2190 = vmatprep.mubr.bf16.mxu0 0
    %2191 = vmatmul.mubr.bf16.gmra.mrb[0].mxu0 %v1245
    %v2192 = vpop.f32.mrb[0].mxu0
    %v2193 = vadd.f32 %v278, %v2192
    %v2194 = vpop.f32.mrb[0].mxu0
    %v2195 = vpop.f32.mrb[0].mxu0
    %v2196 = vadd.f32 %v278, %v2195
    %v2197 = vpop.f32.mrb[0].mxu0
    %2198 = vmatprep.mubr.bf16.mxu0 0
    %2199 = vmatmul.mubr.bf16.gmra.mrb[0].mxu0 %v1248
    %v2200 = vpop.f32.mrb[0].mxu0
    %v2201 = vadd.f32 %v278, %v2200
    %v2202 = vpop.f32.mrb[0].mxu0
    %v2203 = vpop.f32.mrb[0].mxu0
    %v2204 = vadd.f32 %v278, %v2203
    %v2205 = vpop.f32.mrb[0].mxu0
    %2206 = vmatprep.mubr.bf16.mxu0 0
    %2207 = vmatmul.mubr.bf16.gmra.mrb[0].mxu0 %v1251
    %v2208 = vpop.f32.mrb[0].mxu0
    %v2209 = vadd.f32 %v278, %v2208
    %v2210 = vpop.f32.mrb[0].mxu0
    %v2211 = vpop.f32.mrb[0].mxu0
    %v2212 = vadd.f32 %v278, %v2211
    %v2213 = vpop.f32.mrb[0].mxu0
    %2214 = vmatprep.mubr.bf16.mxu0 0
    %2215 = vmatmul.mubr.bf16.gmra.mrb[0].mxu0 %v1254
    %v2216 = vpop.f32.mrb[0].mxu0
    %v2217 = vadd.f32 %v278, %v2216
    %v2218 = vpop.f32.mrb[0].mxu0
    %v2219 = vpop.f32.mrb[0].mxu0
    %v2220 = vadd.f32 %v278, %v2219
    %v2221 = vpop.f32.mrb[0].mxu0
    %2222 = vmatprep.mubr.bf16.mxu0 0
    %2223 = vmatmul.mubr.bf16.gmra.mrb[0].mxu0 %v1257
    %v2224 = vpop.f32.mrb[0].mxu0
    %v2225 = vadd.f32 %v278, %v2224
    %v2226 = vpop.f32.mrb[0].mxu0
    %v2227 = vpop.f32.mrb[0].mxu0
    %v2228 = vadd.f32 %v278, %v2227
    %v2229 = vpop.f32.mrb[0].mxu0
    %2230 = vmatprep.mubr.bf16.mxu0 0
    %2231 = vmatmul.mubr.bf16.gmra.mrb[0].mxu0 %v1260
    %v2232 = vpop.f32.mrb[0].mxu0
    %v2233 = vadd.f32 %v278, %v2232
    %v2234 = vpop.f32.mrb[0].mxu0
    %v2235 = vpop.f32.mrb[0].mxu0
    %v2236 = vadd.f32 %v278, %v2235
    %v2237 = vpop.f32.mrb[0].mxu0
    %2238 = vmatprep.mubr.bf16.mxu0 0
    %2239 = vmatmul.mubr.bf16.gmra.mrb[0].mxu0 %v1263
    %v2240 = vpop.f32.mrb[0].mxu0
    %v2241 = vadd.f32 %v278, %v2240
    %v2242 = vpop.f32.mrb[0].mxu0
    %v2243 = vpop.f32.mrb[0].mxu0
    %v2244 = vadd.f32 %v278, %v2243
    %v2245 = vpop.f32.mrb[0].mxu0
    %2246 = vmatprep.mubr.bf16.mxu0 0
    %2247 = vmatmul.mubr.bf16.gmra.mrb[0].mxu0 %v1266
    %v2248 = vpop.f32.mrb[0].mxu0
    %v2249 = vadd.f32 %v278, %v2248
    %v2250 = vpop.f32.mrb[0].mxu0
    %v2251 = vpop.f32.mrb[0].mxu0
    %v2252 = vadd.f32 %v278, %v2251
    %v2253 = vpop.f32.mrb[0].mxu0
    %2254 = vmatprep.mubr.bf16.mxu0 0
    %2255 = vmatmul.mubr.bf16.gmra.mrb[0].mxu0 %v1269
    %v2256 = vpop.f32.mrb[0].mxu0
    %v2257 = vadd.f32 %v278, %v2256
    %v2258 = vpop.f32.mrb[0].mxu0
    %v2259 = vpop.f32.mrb[0].mxu0
    %v2260 = vadd.f32 %v278, %v2259
    %v2261 = vpop.f32.mrb[0].mxu0
    %2262 = vmatprep.mubr.bf16.mxu0 0
    %2263 = vmatmul.mubr.bf16.gmra.mrb[0].mxu0 %v1272
    %v2264 = vpop.f32.mrb[0].mxu0
    %v2265 = vadd.f32 %v278, %v2264
    %v2266 = vpop.f32.mrb[0].mxu0
    %v2267 = vpop.f32.mrb[0].mxu0
    %v2268 = vadd.f32 %v278, %v2267
    %v2269 = vpop.f32.mrb[0].mxu0
    %2270 = vmatprep.mubr.bf16.mxu0 0
    %2271 = vmatmul.mubr.bf16.gmra.mrb[0].mxu0 %v1275
    %v2272 = vpop.f32.mrb[0].mxu0
    %v2273 = vadd.f32 %v278, %v2272
    %v2274 = vpop.f32.mrb[0].mxu0
    %v2275 = vpop.f32.mrb[0].mxu0
    %v2276 = vadd.f32 %v278, %v2275
    %v2277 = vpop.f32.mrb[0].mxu0
    %2278 = vmatprep.mubr.bf16.mxu0 0
    %2279 = vmatmul.mubr.bf16.gmra.mrb[0].mxu0 %v1278
    %v2280 = vpop.f32.mrb[0].mxu0
    %v2281 = vadd.f32 %v278, %v2280
    %v2282 = vpop.f32.mrb[0].mxu0
    %v2283 = vpop.f32.mrb[0].mxu0
    %v2284 = vadd.f32 %v278, %v2283
    %v2285 = vpop.f32.mrb[0].mxu0
    %2286 = vmatprep.mubr.bf16.mxu0 0
    %2287 = vmatmul.mubr.bf16.gmra.mrb[0].mxu0 %v1281
    %v2288 = vpop.f32.mrb[0].mxu0
    %v2289 = vadd.f32 %v278, %v2288
    %v2290 = vpop.f32.mrb[0].mxu0
    %v2291 = vpop.f32.mrb[0].mxu0
    %v2292 = vadd.f32 %v278, %v2291
    %v2293 = vpop.f32.mrb[0].mxu0
    %2294 = vmatprep.mubr.bf16.mxu0 0
    %2295 = vmatmul.mubr.bf16.gmra.mrb[0].mxu0 %v1284
    %v2296 = vpop.f32.mrb[0].mxu0
    %v2297 = vadd.f32 %v278, %v2296
    %v2298 = vpop.f32.mrb[0].mxu0
    %v2299 = vpop.f32.mrb[0].mxu0
    %v2300 = vadd.f32 %v278, %v2299
    %v2301 = vpop.f32.mrb[0].mxu0
    %2302 = vmatprep.mubr.bf16.mxu0 0
    %2303 = vmatmul.mubr.bf16.gmra.mrb[0].mxu0 %v1287
    %v2304 = vpop.f32.mrb[0].mxu0
    %v2305 = vadd.f32 %v278, %v2304
    %v2306 = vpop.f32.mrb[0].mxu0
    %v2307 = vpop.f32.mrb[0].mxu0
    %v2308 = vadd.f32 %v278, %v2307
    %v2309 = vpop.f32.mrb[0].mxu0
    %2310 = vmatprep.mubr.bf16.mxu0 0
    %2311 = vmatmul.mubr.bf16.gmra.mrb[0].mxu0 %v1290
    %v2312 = vpop.f32.mrb[0].mxu0
    %v2313 = vadd.f32 %v278, %v2312
    %v2314 = vpop.f32.mrb[0].mxu0
    %v2315 = vpop.f32.mrb[0].mxu0
    %v2316 = vadd.f32 %v278, %v2315
    %v2317 = vpop.f32.mrb[0].mxu0
    %2318 = vmatprep.mubr.bf16.mxu0 0
    %2319 = vmatmul.mubr.bf16.gmra.mrb[0].mxu0 %v1293
    %v2320 = vpop.f32.mrb[0].mxu0
    %v2321 = vadd.f32 %v278, %v2320
    %v2322 = vpop.f32.mrb[0].mxu0
    %v2323 = vpop.f32.mrb[0].mxu0
    %v2324 = vadd.f32 %v278, %v2323
    %v2325 = vpop.f32.mrb[0].mxu0
    %2326 = vmatprep.mubr.bf16.mxu0 0
    %2327 = vmatmul.mubr.bf16.gmra.mrb[0].mxu0 %v1296
    %v2328 = vpop.f32.mrb[0].mxu0
    %v2329 = vadd.f32 %v278, %v2328
    %v2330 = vpop.f32.mrb[0].mxu0
    %v2331 = vpop.f32.mrb[0].mxu0
    %v2332 = vadd.f32 %v278, %v2331
    %v2333 = vpop.f32.mrb[0].mxu0
    %2334 = vmatprep.mubr.bf16.mxu0 0
    %2335 = vmatmul.mubr.bf16.gmra.mrb[0].mxu0 %v1299
    %v2336 = vpop.f32.mrb[0].mxu0
    %v2337 = vadd.f32 %v278, %v2336
    %v2338 = vpop.f32.mrb[0].mxu0
    %v2339 = vpop.f32.mrb[0].mxu0
    %v2340 = vadd.f32 %v278, %v2339
    %v2341 = vpop.f32.mrb[0].mxu0
    %2342 = vmatprep.mubr.bf16.mxu0 0
    %2343 = vmatmul.mubr.bf16.gmra.mrb[0].mxu0 %v1302
    %v2344 = vpop.f32.mrb[0].mxu0
    %v2345 = vadd.f32 %v278, %v2344
    %v2346 = vpop.f32.mrb[0].mxu0
    %v2347 = vpop.f32.mrb[0].mxu0
    %v2348 = vadd.f32 %v278, %v2347
    %v2349 = vpop.f32.mrb[0].mxu0
    %2350 = vmatprep.mubr.bf16.mxu0 0
    %2351 = vmatmul.mubr.bf16.gmra.mrb[0].mxu0 %v1305
    %v2352 = vpop.f32.mrb[0].mxu0
    %v2353 = vadd.f32 %v278, %v2352
    %v2354 = vpop.f32.mrb[0].mxu0
    %v2355 = vpop.f32.mrb[0].mxu0
    %v2356 = vadd.f32 %v278, %v2355
    %v2357 = vpop.f32.mrb[0].mxu0
    %2358 = vmatprep.mubr.bf16.mxu0 0
    %2359 = vmatmul.mubr.bf16.gmra.mrb[0].mxu0 %v1308
    %v2360 = vpop.f32.mrb[0].mxu0
    %v2361 = vadd.f32 %v278, %v2360
    %v2362 = vpop.f32.mrb[0].mxu0
    %v2363 = vpop.f32.mrb[0].mxu0
    %v2364 = vadd.f32 %v278, %v2363
    %v2365 = vpop.f32.mrb[0].mxu0
    %2366 = vdwg.mxu0
    %v2367 = vmax.f32 %v1345, 0.0
    %v2368 = vmax.f32 %v1348, 0.0
    %v2369 = vmax.f32 %v1353, 0.0
    %v2370 = vmax.f32 %v1356, 0.0
    %v2371 = vmax.f32 %v1361, 0.0
    %v2372 = vmax.f32 %v1364, 0.0
    %v2373 = vmax.f32 %v1369, 0.0
    %v2374 = vmax.f32 %v1372, 0.0
    %v2375 = vmax.f32 %v1377, 0.0
    %v2376 = vmax.f32 %v1380, 0.0
    %v2377 = vmax.f32 %v1385, 0.0
    %v2378 = vmax.f32 %v1388, 0.0
    %v2379 = vmax.f32 %v1393, 0.0
    %v2380 = vmax.f32 %v1396, 0.0
    %v2381 = vmax.f32 %v1401, 0.0
    %v2382 = vmax.f32 %v1404, 0.0
    %v2383 = vmax.f32 %v1409, 0.0
    %v2384 = vmax.f32 %v1412, 0.0
    %v2385 = vmax.f32 %v1417, 0.0
    %v2386 = vmax.f32 %v1420, 0.0
    %v2387 = vmax.f32 %v1425, 0.0
    %v2388 = vmax.f32 %v1428, 0.0
    %v2389 = vmax.f32 %v1433, 0.0
    %v2390 = vmax.f32 %v1436, 0.0
    %v2391 = vmax.f32 %v1441, 0.0
    %v2392 = vmax.f32 %v1444, 0.0
    %v2393 = vmax.f32 %v1449, 0.0
    %v2394 = vmax.f32 %v1452, 0.0
    %v2395 = vmax.f32 %v1457, 0.0
    %v2396 = vmax.f32 %v1460, 0.0
    %v2397 = vmax.f32 %v1465, 0.0
    %v2398 = vmax.f32 %v1468, 0.0
    %v2399 = vmax.f32 %v1473, 0.0
    %v2400 = vmax.f32 %v1476, 0.0
    %v2401 = vmax.f32 %v1481, 0.0
    %v2402 = vmax.f32 %v1484, 0.0
    %v2403 = vmax.f32 %v1489, 0.0
    %v2404 = vmax.f32 %v1492, 0.0
    %v2405 = vmax.f32 %v1497, 0.0
    %v2406 = vmax.f32 %v1500, 0.0
    %v2407 = vmax.f32 %v1505, 0.0
    %v2408 = vmax.f32 %v1508, 0.0
    %v2409 = vmax.f32 %v1513, 0.0
    %v2410 = vmax.f32 %v1516, 0.0
    %v2411 = vmax.f32 %v1521, 0.0
    %v2412 = vmax.f32 %v1524, 0.0
    %v2413 = vmax.f32 %v1529, 0.0
    %v2414 = vmax.f32 %v1532, 0.0
    %v2415 = vmax.f32 %v1537, 0.0
    %v2416 = vmax.f32 %v1540, 0.0
    %v2417 = vmax.f32 %v1545, 0.0
    %v2418 = vmax.f32 %v1548, 0.0
    %v2419 = vmax.f32 %v1553, 0.0
    %v2420 = vmax.f32 %v1556, 0.0
    %v2421 = vmax.f32 %v1561, 0.0
    %v2422 = vmax.f32 %v1564, 0.0
    %v2423 = vmax.f32 %v1569, 0.0
    %v2424 = vmax.f32 %v1572, 0.0
    %v2425 = vmax.f32 %v1577, 0.0
    %v2426 = vmax.f32 %v1580, 0.0
    %v2427 = vmax.f32 %v1585, 0.0
    %v2428 = vmax.f32 %v1588, 0.0
    %v2429 = vmax.f32 %v1593, 0.0
    %v2430 = vmax.f32 %v1596, 0.0
    %v2431 = vmax.f32 %v1601, 0.0
    %v2432 = vmax.f32 %v1604, 0.0
    %v2433 = vmax.f32 %v1609, 0.0
    %v2434 = vmax.f32 %v1612, 0.0
    %v2435 = vmax.f32 %v1617, 0.0
    %v2436 = vmax.f32 %v1620, 0.0
    %v2437 = vmax.f32 %v1625, 0.0
    %v2438 = vmax.f32 %v1628, 0.0
    %v2439 = vmax.f32 %v1633, 0.0
    %v2440 = vmax.f32 %v1636, 0.0
    %v2441 = vmax.f32 %v1641, 0.0
    %v2442 = vmax.f32 %v1644, 0.0
    %v2443 = vmax.f32 %v1649, 0.0
    %v2444 = vmax.f32 %v1652, 0.0
    %v2445 = vmax.f32 %v1657, 0.0
    %v2446 = vmax.f32 %v1660, 0.0
    %v2447 = vmax.f32 %v1665, 0.0
    %v2448 = vmax.f32 %v1668, 0.0
    %v2449 = vmax.f32 %v1673, 0.0
    %v2450 = vmax.f32 %v1676, 0.0
    %v2451 = vmax.f32 %v1681, 0.0
    %v2452 = vmax.f32 %v1684, 0.0
    %v2453 = vmax.f32 %v1689, 0.0
    %v2454 = vmax.f32 %v1692, 0.0
    %v2455 = vmax.f32 %v1697, 0.0
    %v2456 = vmax.f32 %v1700, 0.0
    %v2457 = vmax.f32 %v1705, 0.0
    %v2458 = vmax.f32 %v1708, 0.0
    %v2459 = vmax.f32 %v1713, 0.0
    %v2460 = vmax.f32 %v1716, 0.0
    %v2461 = vmax.f32 %v1721, 0.0
    %v2462 = vmax.f32 %v1724, 0.0
    %v2463 = vmax.f32 %v1729, 0.0
    %v2464 = vmax.f32 %v1732, 0.0
    %v2465 = vmax.f32 %v1737, 0.0
    %v2466 = vmax.f32 %v1740, 0.0
    %v2467 = vmax.f32 %v1745, 0.0
    %v2468 = vmax.f32 %v1748, 0.0
    %v2469 = vmax.f32 %v1753, 0.0
    %v2470 = vmax.f32 %v1756, 0.0
    %v2471 = vmax.f32 %v1761, 0.0
    %v2472 = vmax.f32 %v1764, 0.0
    %v2473 = vmax.f32 %v1769, 0.0
    %v2474 = vmax.f32 %v1772, 0.0
    %v2475 = vmax.f32 %v1777, 0.0
    %v2476 = vmax.f32 %v1780, 0.0
    %v2477 = vmax.f32 %v1785, 0.0
    %v2478 = vmax.f32 %v1788, 0.0
    %v2479 = vmax.f32 %v1793, 0.0
    %v2480 = vmax.f32 %v1796, 0.0
    %v2481 = vmax.f32 %v1801, 0.0
    %v2482 = vmax.f32 %v1804, 0.0
    %v2483 = vmax.f32 %v1809, 0.0
    %v2484 = vmax.f32 %v1812, 0.0
    %v2485 = vmax.f32 %v1817, 0.0
    %v2486 = vmax.f32 %v1820, 0.0
    %v2487 = vmax.f32 %v1825, 0.0
    %v2488 = vmax.f32 %v1828, 0.0
    %v2489 = vmax.f32 %v1833, 0.0
    %v2490 = vmax.f32 %v1836, 0.0
    %v2491 = vmax.f32 %v1841, 0.0
    %v2492 = vmax.f32 %v1844, 0.0
    %v2493 = vmax.f32 %v1849, 0.0
    %v2494 = vmax.f32 %v1852, 0.0
    %v2495 = vmax.f32 %v1857, 0.0
    %v2496 = vmax.f32 %v1860, 0.0
    %v2497 = vmax.f32 %v1865, 0.0
    %v2498 = vmax.f32 %v1868, 0.0
    %v2499 = vmax.f32 %v1873, 0.0
    %v2500 = vmax.f32 %v1876, 0.0
    %v2501 = vmax.f32 %v1881, 0.0
    %v2502 = vmax.f32 %v1884, 0.0
    %v2503 = vmax.f32 %v1889, 0.0
    %v2504 = vmax.f32 %v1892, 0.0
    %v2505 = vmax.f32 %v1897, 0.0
    %v2506 = vmax.f32 %v1900, 0.0
    %v2507 = vmax.f32 %v1905, 0.0
    %v2508 = vmax.f32 %v1908, 0.0
    %v2509 = vmax.f32 %v1913, 0.0
    %v2510 = vmax.f32 %v1916, 0.0
    %v2511 = vmax.f32 %v1921, 0.0
    %v2512 = vmax.f32 %v1924, 0.0
    %v2513 = vmax.f32 %v1929, 0.0
    %v2514 = vmax.f32 %v1932, 0.0
    %v2515 = vmax.f32 %v1937, 0.0
    %v2516 = vmax.f32 %v1940, 0.0
    %v2517 = vmax.f32 %v1945, 0.0
    %v2518 = vmax.f32 %v1948, 0.0
    %v2519 = vmax.f32 %v1953, 0.0
    %v2520 = vmax.f32 %v1956, 0.0
    %v2521 = vmax.f32 %v1961, 0.0
    %v2522 = vmax.f32 %v1964, 0.0
    %v2523 = vmax.f32 %v1969, 0.0
    %v2524 = vmax.f32 %v1972, 0.0
    %v2525 = vmax.f32 %v1977, 0.0
    %v2526 = vmax.f32 %v1980, 0.0
    %v2527 = vmax.f32 %v1985, 0.0
    %v2528 = vmax.f32 %v1988, 0.0
    %v2529 = vmax.f32 %v1993, 0.0
    %v2530 = vmax.f32 %v1996, 0.0
    %v2531 = vmax.f32 %v2001, 0.0
    %v2532 = vmax.f32 %v2004, 0.0
    %v2533 = vmax.f32 %v2009, 0.0
    %v2534 = vmax.f32 %v2012, 0.0
    %v2535 = vmax.f32 %v2017, 0.0
    %v2536 = vmax.f32 %v2020, 0.0
    %v2537 = vmax.f32 %v2025, 0.0
    %v2538 = vmax.f32 %v2028, 0.0
    %v2539 = vmax.f32 %v2033, 0.0
    %v2540 = vmax.f32 %v2036, 0.0
    %v2541 = vmax.f32 %v2041, 0.0
    %v2542 = vmax.f32 %v2044, 0.0
    %v2543 = vmax.f32 %v2049, 0.0
    %v2544 = vmax.f32 %v2052, 0.0
    %v2545 = vmax.f32 %v2057, 0.0
    %v2546 = vmax.f32 %v2060, 0.0
    %v2547 = vmax.f32 %v2065, 0.0
    %v2548 = vmax.f32 %v2068, 0.0
    %v2549 = vmax.f32 %v2073, 0.0
    %v2550 = vmax.f32 %v2076, 0.0
    %v2551 = vmax.f32 %v2081, 0.0
    %v2552 = vmax.f32 %v2084, 0.0
    %v2553 = vmax.f32 %v2089, 0.0
    %v2554 = vmax.f32 %v2092, 0.0
    %v2555 = vmax.f32 %v2097, 0.0
    %v2556 = vmax.f32 %v2100, 0.0
    %v2557 = vmax.f32 %v2105, 0.0
    %v2558 = vmax.f32 %v2108, 0.0
    %v2559 = vmax.f32 %v2113, 0.0
    %v2560 = vmax.f32 %v2116, 0.0
    %v2561 = vmax.f32 %v2121, 0.0
    %v2562 = vmax.f32 %v2124, 0.0
    %v2563 = vmax.f32 %v2129, 0.0
    %v2564 = vmax.f32 %v2132, 0.0
    %v2565 = vmax.f32 %v2137, 0.0
    %v2566 = vmax.f32 %v2140, 0.0
    %v2567 = vmax.f32 %v2145, 0.0
    %v2568 = vmax.f32 %v2148, 0.0
    %v2569 = vmax.f32 %v2153, 0.0
    %v2570 = vmax.f32 %v2156, 0.0
    %v2571 = vmax.f32 %v2161, 0.0
    %v2572 = vmax.f32 %v2164, 0.0
    %v2573 = vmax.f32 %v2169, 0.0
    %v2574 = vmax.f32 %v2172, 0.0
    %v2575 = vmax.f32 %v2177, 0.0
    %v2576 = vmax.f32 %v2180, 0.0
    %v2577 = vmax.f32 %v2185, 0.0
    %v2578 = vmax.f32 %v2188, 0.0
    %v2579 = vmax.f32 %v2193, 0.0
    %v2580 = vmax.f32 %v2196, 0.0
    %v2581 = vmax.f32 %v2201, 0.0
    %v2582 = vmax.f32 %v2204, 0.0
    %v2583 = vmax.f32 %v2209, 0.0
    %v2584 = vmax.f32 %v2212, 0.0
    %v2585 = vmax.f32 %v2217, 0.0
    %v2586 = vmax.f32 %v2220, 0.0
    %v2587 = vmax.f32 %v2225, 0.0
    %v2588 = vmax.f32 %v2228, 0.0
    %v2589 = vmax.f32 %v2233, 0.0
    %v2590 = vmax.f32 %v2236, 0.0
    %v2591 = vmax.f32 %v2241, 0.0
    %v2592 = vmax.f32 %v2244, 0.0
    %v2593 = vmax.f32 %v2249, 0.0
    %v2594 = vmax.f32 %v2252, 0.0
    %v2595 = vmax.f32 %v2257, 0.0
    %v2596 = vmax.f32 %v2260, 0.0
    %v2597 = vmax.f32 %v2265, 0.0
    %v2598 = vmax.f32 %v2268, 0.0
    %v2599 = vmax.f32 %v2273, 0.0
    %v2600 = vmax.f32 %v2276, 0.0
    %v2601 = vmax.f32 %v2281, 0.0
    %v2602 = vmax.f32 %v2284, 0.0
    %v2603 = vmax.f32 %v2289, 0.0
    %v2604 = vmax.f32 %v2292, 0.0
    %v2605 = vmax.f32 %v2297, 0.0
    %v2606 = vmax.f32 %v2300, 0.0
    %v2607 = vmax.f32 %v2305, 0.0
    %v2608 = vmax.f32 %v2308, 0.0
    %v2609 = vmax.f32 %v2313, 0.0
    %v2610 = vmax.f32 %v2316, 0.0
    %v2611 = vmax.f32 %v2321, 0.0
    %v2612 = vmax.f32 %v2324, 0.0
    %v2613 = vmax.f32 %v2329, 0.0
    %v2614 = vmax.f32 %v2332, 0.0
    %v2615 = vmax.f32 %v2337, 0.0
    %v2616 = vmax.f32 %v2340, 0.0
    %v2617 = vmax.f32 %v2345, 0.0
    %v2618 = vmax.f32 %v2348, 0.0
    %v2619 = vmax.f32 %v2353, 0.0
    %v2620 = vmax.f32 %v2356, 0.0
    %v2621 = vmax.f32 %v2361, 0.0
    %v2622 = vmax.f32 %v2364, 0.0
    %2623 = vst [vmem:[#allocation2] sm:$0xff] %v2367
    %2624 = vst [vmem:[#allocation2 + $0x8] sm:$0xff] %v2368
    %2625 = vst [vmem:[#allocation2 + $0x10] sm:$0xff] %v2369
    %2626 = vst [vmem:[#allocation2 + $0x18] sm:$0xff] %v2370
    %2627 = vst [vmem:[#allocation2 + $0x20] sm:$0xff] %v2371
    %2628 = vst [vmem:[#allocation2 + $0x28] sm:$0xff] %v2372
    %2629 = vst [vmem:[#allocation2 + $0x30] sm:$0xff] %v2373
    %2630 = vst [vmem:[#allocation2 + $0x38] sm:$0xff] %v2374
    %2631 = vst [vmem:[#allocation2 + $0x40] sm:$0xff] %v2375
    %2632 = vst [vmem:[#allocation2 + $0x48] sm:$0xff] %v2376
    %2633 = vst [vmem:[#allocation2 + $0x50] sm:$0xff] %v2377
    %2634 = vst [vmem:[#allocation2 + $0x58] sm:$0xff] %v2378
    %2635 = vst [vmem:[#allocation2 + $0x60] sm:$0xff] %v2379
    %2636 = vst [vmem:[#allocation2 + $0x68] sm:$0xff] %v2380
    %2637 = vst [vmem:[#allocation2 + $0x70] sm:$0xff] %v2381
    %2638 = vst [vmem:[#allocation2 + $0x78] sm:$0xff] %v2382
    %2639 = vst [vmem:[#allocation2 + $0x80] sm:$0xff] %v2383
    %2640 = vst [vmem:[#allocation2 + $0x88] sm:$0xff] %v2384
    %2641 = vst [vmem:[#allocation2 + $0x90] sm:$0xff] %v2385
    %2642 = vst [vmem:[#allocation2 + $0x98] sm:$0xff] %v2386
    %2643 = vst [vmem:[#allocation2 + $0xa0] sm:$0xff] %v2387
    %2644 = vst [vmem:[#allocation2 + $0xa8] sm:$0xff] %v2388
    %2645 = vst [vmem:[#allocation2 + $0xb0] sm:$0xff] %v2389
    %2646 = vst [vmem:[#allocation2 + $0xb8] sm:$0xff] %v2390
    %2647 = vst [vmem:[#allocation2 + $0xc0] sm:$0xff] %v2391
    %2648 = vst [vmem:[#allocation2 + $0xc8] sm:$0xff] %v2392
    %2649 = vst [vmem:[#allocation2 + $0xd0] sm:$0xff] %v2393
    %2650 = vst [vmem:[#allocation2 + $0xd8] sm:$0xff] %v2394
    %2651 = vst [vmem:[#allocation2 + $0xe0] sm:$0xff] %v2395
    %2652 = vst [vmem:[#allocation2 + $0xe8] sm:$0xff] %v2396
    %2653 = vst [vmem:[#allocation2 + $0xf0] sm:$0xff] %v2397
    %2654 = vst [vmem:[#allocation2 + $0xf8] sm:$0xff] %v2398
    %2655 = vst [vmem:[#allocation2 + $0x100] sm:$0xff] %v2399
    %2656 = vst [vmem:[#allocation2 + $0x108] sm:$0xff] %v2400
    %2657 = vst [vmem:[#allocation2 + $0x110] sm:$0xff] %v2401
    %2658 = vst [vmem:[#allocation2 + $0x118] sm:$0xff] %v2402
    %2659 = vst [vmem:[#allocation2 + $0x120] sm:$0xff] %v2403
    %2660 = vst [vmem:[#allocation2 + $0x128] sm:$0xff] %v2404
    %2661 = vst [vmem:[#allocation2 + $0x130] sm:$0xff] %v2405
    %2662 = vst [vmem:[#allocation2 + $0x138] sm:$0xff] %v2406
    %2663 = vst [vmem:[#allocation2 + $0x140] sm:$0xff] %v2407
    %2664 = vst [vmem:[#allocation2 + $0x148] sm:$0xff] %v2408
    %2665 = vst [vmem:[#allocation2 + $0x150] sm:$0xff] %v2409
    %2666 = vst [vmem:[#allocation2 + $0x158] sm:$0xff] %v2410
    %2667 = vst [vmem:[#allocation2 + $0x160] sm:$0xff] %v2411
    %2668 = vst [vmem:[#allocation2 + $0x168] sm:$0xff] %v2412
    %2669 = vst [vmem:[#allocation2 + $0x170] sm:$0xff] %v2413
    %2670 = vst [vmem:[#allocation2 + $0x178] sm:$0xff] %v2414
    %2671 = vst [vmem:[#allocation2 + $0x180] sm:$0xff] %v2415
    %2672 = vst [vmem:[#allocation2 + $0x188] sm:$0xff] %v2416
    %2673 = vst [vmem:[#allocation2 + $0x190] sm:$0xff] %v2417
    %2674 = vst [vmem:[#allocation2 + $0x198] sm:$0xff] %v2418
    %2675 = vst [vmem:[#allocation2 + $0x1a0] sm:$0xff] %v2419
    %2676 = vst [vmem:[#allocation2 + $0x1a8] sm:$0xff] %v2420
    %2677 = vst [vmem:[#allocation2 + $0x1b0] sm:$0xff] %v2421
    %2678 = vst [vmem:[#allocation2 + $0x1b8] sm:$0xff] %v2422
    %2679 = vst [vmem:[#allocation2 + $0x1c0] sm:$0xff] %v2423
    %2680 = vst [vmem:[#allocation2 + $0x1c8] sm:$0xff] %v2424
    %2681 = vst [vmem:[#allocation2 + $0x1d0] sm:$0xff] %v2425
    %2682 = vst [vmem:[#allocation2 + $0x1d8] sm:$0xff] %v2426
    %2683 = vst [vmem:[#allocation2 + $0x1e0] sm:$0xff] %v2427
    %2684 = vst [vmem:[#allocation2 + $0x1e8] sm:$0xff] %v2428
    %2685 = vst [vmem:[#allocation2 + $0x1f0] sm:$0xff] %v2429
    %2686 = vst [vmem:[#allocation2 + $0x1f8] sm:$0xff] %v2430
    %2687 = vst [vmem:[#allocation2 + $0x200] sm:$0xff] %v2431
    %2688 = vst [vmem:[#allocation2 + $0x208] sm:$0xff] %v2432
    %2689 = vst [vmem:[#allocation2 + $0x210] sm:$0xff] %v2433
    %2690 = vst [vmem:[#allocation2 + $0x218] sm:$0xff] %v2434
    %2691 = vst [vmem:[#allocation2 + $0x220] sm:$0xff] %v2435
    %2692 = vst [vmem:[#allocation2 + $0x228] sm:$0xff] %v2436
    %2693 = vst [vmem:[#allocation2 + $0x230] sm:$0xff] %v2437
    %2694 = vst [vmem:[#allocation2 + $0x238] sm:$0xff] %v2438
    %2695 = vst [vmem:[#allocation2 + $0x240] sm:$0xff] %v2439
    %2696 = vst [vmem:[#allocation2 + $0x248] sm:$0xff] %v2440
    %2697 = vst [vmem:[#allocation2 + $0x250] sm:$0xff] %v2441
    %2698 = vst [vmem:[#allocation2 + $0x258] sm:$0xff] %v2442
    %2699 = vst [vmem:[#allocation2 + $0x260] sm:$0xff] %v2443
    %2700 = vst [vmem:[#allocation2 + $0x268] sm:$0xff] %v2444
    %2701 = vst [vmem:[#allocation2 + $0x270] sm:$0xff] %v2445
    %2702 = vst [vmem:[#allocation2 + $0x278] sm:$0xff] %v2446
    %2703 = vst [vmem:[#allocation2 + $0x280] sm:$0xff] %v2447
    %2704 = vst [vmem:[#allocation2 + $0x288] sm:$0xff] %v2448
    %2705 = vst [vmem:[#allocation2 + $0x290] sm:$0xff] %v2449
    %2706 = vst [vmem:[#allocation2 + $0x298] sm:$0xff] %v2450
    %2707 = vst [vmem:[#allocation2 + $0x2a0] sm:$0xff] %v2451
    %2708 = vst [vmem:[#allocation2 + $0x2a8] sm:$0xff] %v2452
    %2709 = vst [vmem:[#allocation2 + $0x2b0] sm:$0xff] %v2453
    %2710 = vst [vmem:[#allocation2 + $0x2b8] sm:$0xff] %v2454
    %2711 = vst [vmem:[#allocation2 + $0x2c0] sm:$0xff] %v2455
    %2712 = vst [vmem:[#allocation2 + $0x2c8] sm:$0xff] %v2456
    %2713 = vst [vmem:[#allocation2 + $0x2d0] sm:$0xff] %v2457
    %2714 = vst [vmem:[#allocation2 + $0x2d8] sm:$0xff] %v2458
    %2715 = vst [vmem:[#allocation2 + $0x2e0] sm:$0xff] %v2459
    %2716 = vst [vmem:[#allocation2 + $0x2e8] sm:$0xff] %v2460
    %2717 = vst [vmem:[#allocation2 + $0x2f0] sm:$0xff] %v2461
    %2718 = vst [vmem:[#allocation2 + $0x2f8] sm:$0xff] %v2462
    %2719 = vst [vmem:[#allocation2 + $0x300] sm:$0xff] %v2463
    %2720 = vst [vmem:[#allocation2 + $0x308] sm:$0xff] %v2464
    %2721 = vst [vmem:[#allocation2 + $0x310] sm:$0xff] %v2465
    %2722 = vst [vmem:[#allocation2 + $0x318] sm:$0xff] %v2466
    %2723 = vst [vmem:[#allocation2 + $0x320] sm:$0xff] %v2467
    %2724 = vst [vmem:[#allocation2 + $0x328] sm:$0xff] %v2468
    %2725 = vst [vmem:[#allocation2 + $0x330] sm:$0xff] %v2469
    %2726 = vst [vmem:[#allocation2 + $0x338] sm:$0xff] %v2470
    %2727 = vst [vmem:[#allocation2 + $0x340] sm:$0xff] %v2471
    %2728 = vst [vmem:[#allocation2 + $0x348] sm:$0xff] %v2472
    %2729 = vst [vmem:[#allocation2 + $0x350] sm:$0xff] %v2473
    %2730 = vst [vmem:[#allocation2 + $0x358] sm:$0xff] %v2474
    %2731 = vst [vmem:[#allocation2 + $0x360] sm:$0xff] %v2475
    %2732 = vst [vmem:[#allocation2 + $0x368] sm:$0xff] %v2476
    %2733 = vst [vmem:[#allocation2 + $0x370] sm:$0xff] %v2477
    %2734 = vst [vmem:[#allocation2 + $0x378] sm:$0xff] %v2478
    %2735 = vst [vmem:[#allocation2 + $0x380] sm:$0xff] %v2479
    %2736 = vst [vmem:[#allocation2 + $0x388] sm:$0xff] %v2480
    %2737 = vst [vmem:[#allocation2 + $0x390] sm:$0xff] %v2481
    %2738 = vst [vmem:[#allocation2 + $0x398] sm:$0xff] %v2482
    %2739 = vst [vmem:[#allocation2 + $0x3a0] sm:$0xff] %v2483
    %2740 = vst [vmem:[#allocation2 + $0x3a8] sm:$0xff] %v2484
    %2741 = vst [vmem:[#allocation2 + $0x3b0] sm:$0xff] %v2485
    %2742 = vst [vmem:[#allocation2 + $0x3b8] sm:$0xff] %v2486
    %2743 = vst [vmem:[#allocation2 + $0x3c0] sm:$0xff] %v2487
    %2744 = vst [vmem:[#allocation2 + $0x3c8] sm:$0xff] %v2488
    %2745 = vst [vmem:[#allocation2 + $0x3d0] sm:$0xff] %v2489
    %2746 = vst [vmem:[#allocation2 + $0x3d8] sm:$0xff] %v2490
    %2747 = vst [vmem:[#allocation2 + $0x3e0] sm:$0xff] %v2491
    %2748 = vst [vmem:[#allocation2 + $0x3e8] sm:$0xff] %v2492
    %2749 = vst [vmem:[#allocation2 + $0x3f0] sm:$0xff] %v2493
    %2750 = vst [vmem:[#allocation2 + $0x3f8] sm:$0xff] %v2494
    %2751 = vst [vmem:[#allocation2 + $0x400] sm:$0xff] %v2495
    %2752 = vst [vmem:[#allocation2 + $0x408] sm:$0xff] %v2496
    %2753 = vst [vmem:[#allocation2 + $0x410] sm:$0xff] %v2497
    %2754 = vst [vmem:[#allocation2 + $0x418] sm:$0xff] %v2498
    %2755 = vst [vmem:[#allocation2 + $0x420] sm:$0xff] %v2499
    %2756 = vst [vmem:[#allocation2 + $0x428] sm:$0xff] %v2500
    %2757 = vst [vmem:[#allocation2 + $0x430] sm:$0xff] %v2501
    %2758 = vst [vmem:[#allocation2 + $0x438] sm:$0xff] %v2502
    %2759 = vst [vmem:[#allocation2 + $0x440] sm:$0xff] %v2503
    %2760 = vst [vmem:[#allocation2 + $0x448] sm:$0xff] %v2504
    %2761 = vst [vmem:[#allocation2 + $0x450] sm:$0xff] %v2505
    %2762 = vst [vmem:[#allocation2 + $0x458] sm:$0xff] %v2506
    %2763 = vst [vmem:[#allocation2 + $0x460] sm:$0xff] %v2507
    %2764 = vst [vmem:[#allocation2 + $0x468] sm:$0xff] %v2508
    %2765 = vst [vmem:[#allocation2 + $0x470] sm:$0xff] %v2509
    %2766 = vst [vmem:[#allocation2 + $0x478] sm:$0xff] %v2510
    %2767 = vst [vmem:[#allocation2 + $0x480] sm:$0xff] %v2511
    %2768 = vst [vmem:[#allocation2 + $0x488] sm:$0xff] %v2512
    %2769 = vst [vmem:[#allocation2 + $0x490] sm:$0xff] %v2513
    %2770 = vst [vmem:[#allocation2 + $0x498] sm:$0xff] %v2514
    %2771 = vst [vmem:[#allocation2 + $0x4a0] sm:$0xff] %v2515
    %2772 = vst [vmem:[#allocation2 + $0x4a8] sm:$0xff] %v2516
    %2773 = vst [vmem:[#allocation2 + $0x4b0] sm:$0xff] %v2517
    %2774 = vst [vmem:[#allocation2 + $0x4b8] sm:$0xff] %v2518
    %2775 = vst [vmem:[#allocation2 + $0x4c0] sm:$0xff] %v2519
    %2776 = vst [vmem:[#allocation2 + $0x4c8] sm:$0xff] %v2520
    %2777 = vst [vmem:[#allocation2 + $0x4d0] sm:$0xff] %v2521
    %2778 = vst [vmem:[#allocation2 + $0x4d8] sm:$0xff] %v2522
    %2779 = vst [vmem:[#allocation2 + $0x4e0] sm:$0xff] %v2523
    %2780 = vst [vmem:[#allocation2 + $0x4e8] sm:$0xff] %v2524
    %2781 = vst [vmem:[#allocation2 + $0x4f0] sm:$0xff] %v2525
    %2782 = vst [vmem:[#allocation2 + $0x4f8] sm:$0xff] %v2526
    %2783 = vst [vmem:[#allocation2 + $0x500] sm:$0xff] %v2527
    %2784 = vst [vmem:[#allocation2 + $0x508] sm:$0xff] %v2528
    %2785 = vst [vmem:[#allocation2 + $0x510] sm:$0xff] %v2529
    %2786 = vst [vmem:[#allocation2 + $0x518] sm:$0xff] %v2530
    %2787 = vst [vmem:[#allocation2 + $0x520] sm:$0xff] %v2531
    %2788 = vst [vmem:[#allocation2 + $0x528] sm:$0xff] %v2532
    %2789 = vst [vmem:[#allocation2 + $0x530] sm:$0xff] %v2533
    %2790 = vst [vmem:[#allocation2 + $0x538] sm:$0xff] %v2534
    %2791 = vst [vmem:[#allocation2 + $0x540] sm:$0xff] %v2535
    %2792 = vst [vmem:[#allocation2 + $0x548] sm:$0xff] %v2536
    %2793 = vst [vmem:[#allocation2 + $0x550] sm:$0xff] %v2537
    %2794 = vst [vmem:[#allocation2 + $0x558] sm:$0xff] %v2538
    %2795 = vst [vmem:[#allocation2 + $0x560] sm:$0xff] %v2539
    %2796 = vst [vmem:[#allocation2 + $0x568] sm:$0xff] %v2540
    %2797 = vst [vmem:[#allocation2 + $0x570] sm:$0xff] %v2541
    %2798 = vst [vmem:[#allocation2 + $0x578] sm:$0xff] %v2542
    %2799 = vst [vmem:[#allocation2 + $0x580] sm:$0xff] %v2543
    %2800 = vst [vmem:[#allocation2 + $0x588] sm:$0xff] %v2544
    %2801 = vst [vmem:[#allocation2 + $0x590] sm:$0xff] %v2545
    %2802 = vst [vmem:[#allocation2 + $0x598] sm:$0xff] %v2546
    %2803 = vst [vmem:[#allocation2 + $0x5a0] sm:$0xff] %v2547
    %2804 = vst [vmem:[#allocation2 + $0x5a8] sm:$0xff] %v2548
    %2805 = vst [vmem:[#allocation2 + $0x5b0] sm:$0xff] %v2549
    %2806 = vst [vmem:[#allocation2 + $0x5b8] sm:$0xff] %v2550
    %2807 = vst [vmem:[#allocation2 + $0x5c0] sm:$0xff] %v2551
    %2808 = vst [vmem:[#allocation2 + $0x5c8] sm:$0xff] %v2552
    %2809 = vst [vmem:[#allocation2 + $0x5d0] sm:$0xff] %v2553
    %2810 = vst [vmem:[#allocation2 + $0x5d8] sm:$0xff] %v2554
    %2811 = vst [vmem:[#allocation2 + $0x5e0] sm:$0xff] %v2555
    %2812 = vst [vmem:[#allocation2 + $0x5e8] sm:$0xff] %v2556
    %2813 = vst [vmem:[#allocation2 + $0x5f0] sm:$0xff] %v2557
    %2814 = vst [vmem:[#allocation2 + $0x5f8] sm:$0xff] %v2558
    %2815 = vst [vmem:[#allocation2 + $0x600] sm:$0xff] %v2559
    %2816 = vst [vmem:[#allocation2 + $0x608] sm:$0xff] %v2560
    %2817 = vst [vmem:[#allocation2 + $0x610] sm:$0xff] %v2561
    %2818 = vst [vmem:[#allocation2 + $0x618] sm:$0xff] %v2562
    %2819 = vst [vmem:[#allocation2 + $0x620] sm:$0xff] %v2563
    %2820 = vst [vmem:[#allocation2 + $0x628] sm:$0xff] %v2564
    %2821 = vst [vmem:[#allocation2 + $0x630] sm:$0xff] %v2565
    %2822 = vst [vmem:[#allocation2 + $0x638] sm:$0xff] %v2566
    %2823 = vst [vmem:[#allocation2 + $0x640] sm:$0xff] %v2567
    %2824 = vst [vmem:[#allocation2 + $0x648] sm:$0xff] %v2568
    %2825 = vst [vmem:[#allocation2 + $0x650] sm:$0xff] %v2569
    %2826 = vst [vmem:[#allocation2 + $0x658] sm:$0xff] %v2570
    %2827 = vst [vmem:[#allocation2 + $0x660] sm:$0xff] %v2571
    %2828 = vst [vmem:[#allocation2 + $0x668] sm:$0xff] %v2572
    %2829 = vst [vmem:[#allocation2 + $0x670] sm:$0xff] %v2573
    %2830 = vst [vmem:[#allocation2 + $0x678] sm:$0xff] %v2574
    %2831 = vst [vmem:[#allocation2 + $0x680] sm:$0xff] %v2575
    %2832 = vst [vmem:[#allocation2 + $0x688] sm:$0xff] %v2576
    %2833 = vst [vmem:[#allocation2 + $0x690] sm:$0xff] %v2577
    %2834 = vst [vmem:[#allocation2 + $0x698] sm:$0xff] %v2578
    %2835 = vst [vmem:[#allocation2 + $0x6a0] sm:$0xff] %v2579
    %2836 = vst [vmem:[#allocation2 + $0x6a8] sm:$0xff] %v2580
    %2837 = vst [vmem:[#allocation2 + $0x6b0] sm:$0xff] %v2581
    %2838 = vst [vmem:[#allocation2 + $0x6b8] sm:$0xff] %v2582
    %2839 = vst [vmem:[#allocation2 + $0x6c0] sm:$0xff] %v2583
    %2840 = vst [vmem:[#allocation2 + $0x6c8] sm:$0xff] %v2584
    %2841 = vst [vmem:[#allocation2 + $0x6d0] sm:$0xff] %v2585
    %2842 = vst [vmem:[#allocation2 + $0x6d8] sm:$0xff] %v2586
    %2843 = vst [vmem:[#allocation2 + $0x6e0] sm:$0xff] %v2587
    %2844 = vst [vmem:[#allocation2 + $0x6e8] sm:$0xff] %v2588
    %2845 = vst [vmem:[#allocation2 + $0x6f0] sm:$0xff] %v2589
    %2846 = vst [vmem:[#allocation2 + $0x6f8] sm:$0xff] %v2590
    %2847 = vst [vmem:[#allocation2 + $0x700] sm:$0xff] %v2591
    %2848 = vst [vmem:[#allocation2 + $0x708] sm:$0xff] %v2592
    %2849 = vst [vmem:[#allocation2 + $0x710] sm:$0xff] %v2593
    %2850 = vst [vmem:[#allocation2 + $0x718] sm:$0xff] %v2594
    %2851 = vst [vmem:[#allocation2 + $0x720] sm:$0xff] %v2595
    %2852 = vst [vmem:[#allocation2 + $0x728] sm:$0xff] %v2596
    %2853 = vst [vmem:[#allocation2 + $0x730] sm:$0xff] %v2597
    %2854 = vst [vmem:[#allocation2 + $0x738] sm:$0xff] %v2598
    %2855 = vst [vmem:[#allocation2 + $0x740] sm:$0xff] %v2599
    %2856 = vst [vmem:[#allocation2 + $0x748] sm:$0xff] %v2600
    %2857 = vst [vmem:[#allocation2 + $0x750] sm:$0xff] %v2601
    %2858 = vst [vmem:[#allocation2 + $0x758] sm:$0xff] %v2602
    %2859 = vst [vmem:[#allocation2 + $0x760] sm:$0xff] %v2603
    %2860 = vst [vmem:[#allocation2 + $0x768] sm:$0xff] %v2604
    %2861 = vst [vmem:[#allocation2 + $0x770] sm:$0xff] %v2605
    %2862 = vst [vmem:[#allocation2 + $0x778] sm:$0xff] %v2606
    %2863 = vst [vmem:[#allocation2 + $0x780] sm:$0xff] %v2607
    %2864 = vst [vmem:[#allocation2 + $0x788] sm:$0xff] %v2608
    %2865 = vst [vmem:[#allocation2 + $0x790] sm:$0xff] %v2609
    %2866 = vst [vmem:[#allocation2 + $0x798] sm:$0xff] %v2610
    %2867 = vst [vmem:[#allocation2 + $0x7a0] sm:$0xff] %v2611
    %2868 = vst [vmem:[#allocation2 + $0x7a8] sm:$0xff] %v2612
    %2869 = vst [vmem:[#allocation2 + $0x7b0] sm:$0xff] %v2613
    %2870 = vst [vmem:[#allocation2 + $0x7b8] sm:$0xff] %v2614
    %2871 = vst [vmem:[#allocation2 + $0x7c0] sm:$0xff] %v2615
    %2872 = vst [vmem:[#allocation2 + $0x7c8] sm:$0xff] %v2616
    %2873 = vst [vmem:[#allocation2 + $0x7d0] sm:$0xff] %v2617
    %2874 = vst [vmem:[#allocation2 + $0x7d8] sm:$0xff] %v2618
    %2875 = vst [vmem:[#allocation2 + $0x7e0] sm:$0xff] %v2619
    %2876 = vst [vmem:[#allocation2 + $0x7e8] sm:$0xff] %v2620
    %2877 = vst [vmem:[#allocation2 + $0x7f0] sm:$0xff] %v2621
    %2878 = vst [vmem:[#allocation2 + $0x7f8] sm:$0xff] %v2622
    %v2879 = vld [vmem:[#allocation2] ss:$4 sm:$0xff]
    %s2880 = scalar_lea.vmem [#allocation2], 32
    %v2881 = vld [vmem:[%s2880] ss:$4 sm:$0xff]
    %s2882 = scalar_lea.vmem [#allocation2], 64
    %v2883 = vld [vmem:[%s2882] ss:$4 sm:$0xff]
    %s2884 = scalar_lea.vmem [#allocation2], 96
    %v2885 = vld [vmem:[%s2884] ss:$4 sm:$0xff]
    %s2886 = scalar_lea.vmem [#allocation2], 128
    %v2887 = vld [vmem:[%s2886] ss:$4 sm:$0xff]
    %s2888 = scalar_lea.vmem [#allocation2], 160
    %v2889 = vld [vmem:[%s2888] ss:$4 sm:$0xff]
    %s2890 = scalar_lea.vmem [#allocation2], 192
    %v2891 = vld [vmem:[%s2890] ss:$4 sm:$0xff]
    %s2892 = scalar_lea.vmem [#allocation2], 224
    %v2893 = vld [vmem:[%s2892] ss:$4 sm:$0xff]
    %s2894 = scalar_lea.vmem [#allocation2], 256
    %v2895 = vld [vmem:[%s2894] ss:$4 sm:$0xff]
    %s2896 = scalar_lea.vmem [#allocation2], 288
    %v2897 = vld [vmem:[%s2896] ss:$4 sm:$0xff]
    %s2898 = scalar_lea.vmem [#allocation2], 320
    %v2899 = vld [vmem:[%s2898] ss:$4 sm:$0xff]
    %s2900 = scalar_lea.vmem [#allocation2], 352
    %v2901 = vld [vmem:[%s2900] ss:$4 sm:$0xff]
    %s2902 = scalar_lea.vmem [#allocation2], 384
    %v2903 = vld [vmem:[%s2902] ss:$4 sm:$0xff]
    %s2904 = scalar_lea.vmem [#allocation2], 416
    %v2905 = vld [vmem:[%s2904] ss:$4 sm:$0xff]
    %s2906 = scalar_lea.vmem [#allocation2], 448
    %v2907 = vld [vmem:[%s2906] ss:$4 sm:$0xff]
    %s2908 = scalar_lea.vmem [#allocation2], 480
    %v2909 = vld [vmem:[%s2908] ss:$4 sm:$0xff]
    %s2910 = scalar_lea.vmem [#allocation2], 512
    %v2911 = vld [vmem:[%s2910] ss:$4 sm:$0xff]
    %s2912 = scalar_lea.vmem [#allocation2], 544
    %v2913 = vld [vmem:[%s2912] ss:$4 sm:$0xff]
    %s2914 = scalar_lea.vmem [#allocation2], 576
    %v2915 = vld [vmem:[%s2914] ss:$4 sm:$0xff]
    %s2916 = scalar_lea.vmem [#allocation2], 608
    %v2917 = vld [vmem:[%s2916] ss:$4 sm:$0xff]
    %s2918 = scalar_lea.vmem [#allocation2], 640
    %v2919 = vld [vmem:[%s2918] ss:$4 sm:$0xff]
    %s2920 = scalar_lea.vmem [#allocation2], 672
    %v2921 = vld [vmem:[%s2920] ss:$4 sm:$0xff]
    %s2922 = scalar_lea.vmem [#allocation2], 704
    %v2923 = vld [vmem:[%s2922] ss:$4 sm:$0xff]
    %s2924 = scalar_lea.vmem [#allocation2], 736
    %v2925 = vld [vmem:[%s2924] ss:$4 sm:$0xff]
    %s2926 = scalar_lea.vmem [#allocation2], 768
    %v2927 = vld [vmem:[%s2926] ss:$4 sm:$0xff]
    %s2928 = scalar_lea.vmem [#allocation2], 800
    %v2929 = vld [vmem:[%s2928] ss:$4 sm:$0xff]
    %s2930 = scalar_lea.vmem [#allocation2], 832
    %v2931 = vld [vmem:[%s2930] ss:$4 sm:$0xff]
    %s2932 = scalar_lea.vmem [#allocation2], 864
    %v2933 = vld [vmem:[%s2932] ss:$4 sm:$0xff]
    %s2934 = scalar_lea.vmem [#allocation2], 896
    %v2935 = vld [vmem:[%s2934] ss:$4 sm:$0xff]
    %s2936 = scalar_lea.vmem [#allocation2], 928
    %v2937 = vld [vmem:[%s2936] ss:$4 sm:$0xff]
    %s2938 = scalar_lea.vmem [#allocation2], 960
    %v2939 = vld [vmem:[%s2938] ss:$4 sm:$0xff]
    %s2940 = scalar_lea.vmem [#allocation2], 992
    %v2941 = vld [vmem:[%s2940] ss:$4 sm:$0xff]
    %s2942 = scalar_lea.vmem [#allocation2], 1024
    %v2943 = vld [vmem:[%s2942] ss:$4 sm:$0xff]
    %s2944 = scalar_lea.vmem [#allocation2], 1056
    %v2945 = vld [vmem:[%s2944] ss:$4 sm:$0xff]
    %s2946 = scalar_lea.vmem [#allocation2], 1088
    %v2947 = vld [vmem:[%s2946] ss:$4 sm:$0xff]
    %s2948 = scalar_lea.vmem [#allocation2], 1120
    %v2949 = vld [vmem:[%s2948] ss:$4 sm:$0xff]
    %s2950 = scalar_lea.vmem [#allocation2], 1152
    %v2951 = vld [vmem:[%s2950] ss:$4 sm:$0xff]
    %s2952 = scalar_lea.vmem [#allocation2], 1184
    %v2953 = vld [vmem:[%s2952] ss:$4 sm:$0xff]
    %s2954 = scalar_lea.vmem [#allocation2], 1216
    %v2955 = vld [vmem:[%s2954] ss:$4 sm:$0xff]
    %s2956 = scalar_lea.vmem [#allocation2], 1248
    %v2957 = vld [vmem:[%s2956] ss:$4 sm:$0xff]
    %s2958 = scalar_lea.vmem [#allocation2], 1280
    %v2959 = vld [vmem:[%s2958] ss:$4 sm:$0xff]
    %s2960 = scalar_lea.vmem [#allocation2], 1312
    %v2961 = vld [vmem:[%s2960] ss:$4 sm:$0xff]
    %s2962 = scalar_lea.vmem [#allocation2], 1344
    %v2963 = vld [vmem:[%s2962] ss:$4 sm:$0xff]
    %s2964 = scalar_lea.vmem [#allocation2], 1376
    %v2965 = vld [vmem:[%s2964] ss:$4 sm:$0xff]
    %s2966 = scalar_lea.vmem [#allocation2], 1408
    %v2967 = vld [vmem:[%s2966] ss:$4 sm:$0xff]
    %s2968 = scalar_lea.vmem [#allocation2], 1440
    %v2969 = vld [vmem:[%s2968] ss:$4 sm:$0xff]
    %s2970 = scalar_lea.vmem [#allocation2], 1472
    %v2971 = vld [vmem:[%s2970] ss:$4 sm:$0xff]
    %s2972 = scalar_lea.vmem [#allocation2], 1504
    %v2973 = vld [vmem:[%s2972] ss:$4 sm:$0xff]
    %s2974 = scalar_lea.vmem [#allocation2], 1536
    %v2975 = vld [vmem:[%s2974] ss:$4 sm:$0xff]
    %s2976 = scalar_lea.vmem [#allocation2], 1568
    %v2977 = vld [vmem:[%s2976] ss:$4 sm:$0xff]
    %s2978 = scalar_lea.vmem [#allocation2], 1600
    %v2979 = vld [vmem:[%s2978] ss:$4 sm:$0xff]
    %s2980 = scalar_lea.vmem [#allocation2], 1632
    %v2981 = vld [vmem:[%s2980] ss:$4 sm:$0xff]
    %s2982 = scalar_lea.vmem [#allocation2], 1664
    %v2983 = vld [vmem:[%s2982] ss:$4 sm:$0xff]
    %s2984 = scalar_lea.vmem [#allocation2], 1696
    %v2985 = vld [vmem:[%s2984] ss:$4 sm:$0xff]
    %s2986 = scalar_lea.vmem [#allocation2], 1728
    %v2987 = vld [vmem:[%s2986] ss:$4 sm:$0xff]
    %s2988 = scalar_lea.vmem [#allocation2], 1760
    %v2989 = vld [vmem:[%s2988] ss:$4 sm:$0xff]
    %s2990 = scalar_lea.vmem [#allocation2], 1792
    %v2991 = vld [vmem:[%s2990] ss:$4 sm:$0xff]
    %s2992 = scalar_lea.vmem [#allocation2], 1824
    %v2993 = vld [vmem:[%s2992] ss:$4 sm:$0xff]
    %s2994 = scalar_lea.vmem [#allocation2], 1856
    %v2995 = vld [vmem:[%s2994] ss:$4 sm:$0xff]
    %s2996 = scalar_lea.vmem [#allocation2], 1888
    %v2997 = vld [vmem:[%s2996] ss:$4 sm:$0xff]
    %s2998 = scalar_lea.vmem [#allocation2], 1920
    %v2999 = vld [vmem:[%s2998] ss:$4 sm:$0xff]
    %s3000 = scalar_lea.vmem [#allocation2], 1952
    %v3001 = vld [vmem:[%s3000] ss:$4 sm:$0xff]
    %s3002 = scalar_lea.vmem [#allocation2], 1984
    %v3003 = vld [vmem:[%s3002] ss:$4 sm:$0xff]
    %s3004 = scalar_lea.vmem [#allocation2], 2016
    %v3005 = vld [vmem:[%s3004] ss:$4 sm:$0xff]
    %s3006 = scalar_lea.vmem [#allocation2], 1
    %v3007 = vld [vmem:[%s3006] ss:$4 sm:$0xff]
    %s3008 = scalar_lea.vmem [#allocation2], 33
    %v3009 = vld [vmem:[%s3008] ss:$4 sm:$0xff]
    %s3010 = scalar_lea.vmem [#allocation2], 65
    %v3011 = vld [vmem:[%s3010] ss:$4 sm:$0xff]
    %s3012 = scalar_lea.vmem [#allocation2], 97
    %v3013 = vld [vmem:[%s3012] ss:$4 sm:$0xff]
    %s3014 = scalar_lea.vmem [#allocation2], 129
    %v3015 = vld [vmem:[%s3014] ss:$4 sm:$0xff]
    %s3016 = scalar_lea.vmem [#allocation2], 161
    %v3017 = vld [vmem:[%s3016] ss:$4 sm:$0xff]
    %s3018 = scalar_lea.vmem [#allocation2], 193
    %v3019 = vld [vmem:[%s3018] ss:$4 sm:$0xff]
    %s3020 = scalar_lea.vmem [#allocation2], 225
    %v3021 = vld [vmem:[%s3020] ss:$4 sm:$0xff]
    %s3022 = scalar_lea.vmem [#allocation2], 257
    %v3023 = vld [vmem:[%s3022] ss:$4 sm:$0xff]
    %s3024 = scalar_lea.vmem [#allocation2], 289
    %v3025 = vld [vmem:[%s3024] ss:$4 sm:$0xff]
    %s3026 = scalar_lea.vmem [#allocation2], 321
    %v3027 = vld [vmem:[%s3026] ss:$4 sm:$0xff]
    %s3028 = scalar_lea.vmem [#allocation2], 353
    %v3029 = vld [vmem:[%s3028] ss:$4 sm:$0xff]
    %s3030 = scalar_lea.vmem [#allocation2], 385
    %v3031 = vld [vmem:[%s3030] ss:$4 sm:$0xff]
    %s3032 = scalar_lea.vmem [#allocation2], 417
    %v3033 = vld [vmem:[%s3032] ss:$4 sm:$0xff]
    %s3034 = scalar_lea.vmem [#allocation2], 449
    %v3035 = vld [vmem:[%s3034] ss:$4 sm:$0xff]
    %s3036 = scalar_lea.vmem [#allocation2], 481
    %v3037 = vld [vmem:[%s3036] ss:$4 sm:$0xff]
    %s3038 = scalar_lea.vmem [#allocation2], 513
    %v3039 = vld [vmem:[%s3038] ss:$4 sm:$0xff]
    %s3040 = scalar_lea.vmem [#allocation2], 545
    %v3041 = vld [vmem:[%s3040] ss:$4 sm:$0xff]
    %s3042 = scalar_lea.vmem [#allocation2], 577
    %v3043 = vld [vmem:[%s3042] ss:$4 sm:$0xff]
    %s3044 = scalar_lea.vmem [#allocation2], 609
    %v3045 = vld [vmem:[%s3044] ss:$4 sm:$0xff]
    %s3046 = scalar_lea.vmem [#allocation2], 641
    %v3047 = vld [vmem:[%s3046] ss:$4 sm:$0xff]
    %s3048 = scalar_lea.vmem [#allocation2], 673
    %v3049 = vld [vmem:[%s3048] ss:$4 sm:$0xff]
    %s3050 = scalar_lea.vmem [#allocation2], 705
    %v3051 = vld [vmem:[%s3050] ss:$4 sm:$0xff]
    %s3052 = scalar_lea.vmem [#allocation2], 737
    %v3053 = vld [vmem:[%s3052] ss:$4 sm:$0xff]
    %s3054 = scalar_lea.vmem [#allocation2], 769
    %v3055 = vld [vmem:[%s3054] ss:$4 sm:$0xff]
    %s3056 = scalar_lea.vmem [#allocation2], 801
    %v3057 = vld [vmem:[%s3056] ss:$4 sm:$0xff]
    %s3058 = scalar_lea.vmem [#allocation2], 833
    %v3059 = vld [vmem:[%s3058] ss:$4 sm:$0xff]
    %s3060 = scalar_lea.vmem [#allocation2], 865
    %v3061 = vld [vmem:[%s3060] ss:$4 sm:$0xff]
    %s3062 = scalar_lea.vmem [#allocation2], 897
    %v3063 = vld [vmem:[%s3062] ss:$4 sm:$0xff]
    %s3064 = scalar_lea.vmem [#allocation2], 929
    %v3065 = vld [vmem:[%s3064] ss:$4 sm:$0xff]
    %s3066 = scalar_lea.vmem [#allocation2], 961
    %v3067 = vld [vmem:[%s3066] ss:$4 sm:$0xff]
    %s3068 = scalar_lea.vmem [#allocation2], 993
    %v3069 = vld [vmem:[%s3068] ss:$4 sm:$0xff]
    %s3070 = scalar_lea.vmem [#allocation2], 1025
    %v3071 = vld [vmem:[%s3070] ss:$4 sm:$0xff]
    %s3072 = scalar_lea.vmem [#allocation2], 1057
    %v3073 = vld [vmem:[%s3072] ss:$4 sm:$0xff]
    %s3074 = scalar_lea.vmem [#allocation2], 1089
    %v3075 = vld [vmem:[%s3074] ss:$4 sm:$0xff]
    %s3076 = scalar_lea.vmem [#allocation2], 1121
    %v3077 = vld [vmem:[%s3076] ss:$4 sm:$0xff]
    %s3078 = scalar_lea.vmem [#allocation2], 1153
    %v3079 = vld [vmem:[%s3078] ss:$4 sm:$0xff]
    %s3080 = scalar_lea.vmem [#allocation2], 1185
    %v3081 = vld [vmem:[%s3080] ss:$4 sm:$0xff]
    %s3082 = scalar_lea.vmem [#allocation2], 1217
    %v3083 = vld [vmem:[%s3082] ss:$4 sm:$0xff]
    %s3084 = scalar_lea.vmem [#allocation2], 1249
    %v3085 = vld [vmem:[%s3084] ss:$4 sm:$0xff]
    %s3086 = scalar_lea.vmem [#allocation2], 1281
    %v3087 = vld [vmem:[%s3086] ss:$4 sm:$0xff]
    %s3088 = scalar_lea.vmem [#allocation2], 1313
    %v3089 = vld [vmem:[%s3088] ss:$4 sm:$0xff]
    %s3090 = scalar_lea.vmem [#allocation2], 1345
    %v3091 = vld [vmem:[%s3090] ss:$4 sm:$0xff]
    %s3092 = scalar_lea.vmem [#allocation2], 1377
    %v3093 = vld [vmem:[%s3092] ss:$4 sm:$0xff]
    %s3094 = scalar_lea.vmem [#allocation2], 1409
    %v3095 = vld [vmem:[%s3094] ss:$4 sm:$0xff]
    %s3096 = scalar_lea.vmem [#allocation2], 1441
    %v3097 = vld [vmem:[%s3096] ss:$4 sm:$0xff]
    %s3098 = scalar_lea.vmem [#allocation2], 1473
    %v3099 = vld [vmem:[%s3098] ss:$4 sm:$0xff]
    %s3100 = scalar_lea.vmem [#allocation2], 1505
    %v3101 = vld [vmem:[%s3100] ss:$4 sm:$0xff]
    %s3102 = scalar_lea.vmem [#allocation2], 1537
    %v3103 = vld [vmem:[%s3102] ss:$4 sm:$0xff]
    %s3104 = scalar_lea.vmem [#allocation2], 1569
    %v3105 = vld [vmem:[%s3104] ss:$4 sm:$0xff]
    %s3106 = scalar_lea.vmem [#allocation2], 1601
    %v3107 = vld [vmem:[%s3106] ss:$4 sm:$0xff]
    %s3108 = scalar_lea.vmem [#allocation2], 1633
    %v3109 = vld [vmem:[%s3108] ss:$4 sm:$0xff]
    %s3110 = scalar_lea.vmem [#allocation2], 1665
    %v3111 = vld [vmem:[%s3110] ss:$4 sm:$0xff]
    %s3112 = scalar_lea.vmem [#allocation2], 1697
    %v3113 = vld [vmem:[%s3112] ss:$4 sm:$0xff]
    %s3114 = scalar_lea.vmem [#allocation2], 1729
    %v3115 = vld [vmem:[%s3114] ss:$4 sm:$0xff]
    %s3116 = scalar_lea.vmem [#allocation2], 1761
    %v3117 = vld [vmem:[%s3116] ss:$4 sm:$0xff]
    %s3118 = scalar_lea.vmem [#allocation2], 1793
    %v3119 = vld [vmem:[%s3118] ss:$4 sm:$0xff]
    %s3120 = scalar_lea.vmem [#allocation2], 1825
    %v3121 = vld [vmem:[%s3120] ss:$4 sm:$0xff]
    %s3122 = scalar_lea.vmem [#allocation2], 1857
    %v3123 = vld [vmem:[%s3122] ss:$4 sm:$0xff]
    %s3124 = scalar_lea.vmem [#allocation2], 1889
    %v3125 = vld [vmem:[%s3124] ss:$4 sm:$0xff]
    %s3126 = scalar_lea.vmem [#allocation2], 1921
    %v3127 = vld [vmem:[%s3126] ss:$4 sm:$0xff]
    %s3128 = scalar_lea.vmem [#allocation2], 1953
    %v3129 = vld [vmem:[%s3128] ss:$4 sm:$0xff]
    %s3130 = scalar_lea.vmem [#allocation2], 1985
    %v3131 = vld [vmem:[%s3130] ss:$4 sm:$0xff]
    %s3132 = scalar_lea.vmem [#allocation2], 2017
    %v3133 = vld [vmem:[%s3132] ss:$4 sm:$0xff]
    %v3134 = vadd.f32 %v2879, %v3007
    %v3135 = vadd.f32 %v2881, %v3009
    %v3136 = vadd.f32 %v2883, %v3011
    %v3137 = vadd.f32 %v2885, %v3013
    %v3138 = vadd.f32 %v2887, %v3015
    %v3139 = vadd.f32 %v2889, %v3017
    %v3140 = vadd.f32 %v2891, %v3019
    %v3141 = vadd.f32 %v2893, %v3021
    %v3142 = vadd.f32 %v2895, %v3023
    %v3143 = vadd.f32 %v2897, %v3025
    %v3144 = vadd.f32 %v2899, %v3027
    %v3145 = vadd.f32 %v2901, %v3029
    %v3146 = vadd.f32 %v2903, %v3031
    %v3147 = vadd.f32 %v2905, %v3033
    %v3148 = vadd.f32 %v2907, %v3035
    %v3149 = vadd.f32 %v2909, %v3037
    %v3150 = vadd.f32 %v2911, %v3039
    %v3151 = vadd.f32 %v2913, %v3041
    %v3152 = vadd.f32 %v2915, %v3043
    %v3153 = vadd.f32 %v2917, %v3045
    %v3154 = vadd.f32 %v2919, %v3047
    %v3155 = vadd.f32 %v2921, %v3049
    %v3156 = vadd.f32 %v2923, %v3051
    %v3157 = vadd.f32 %v2925, %v3053
    %v3158 = vadd.f32 %v2927, %v3055
    %v3159 = vadd.f32 %v2929, %v3057
    %v3160 = vadd.f32 %v2931, %v3059
    %v3161 = vadd.f32 %v2933, %v3061
    %v3162 = vadd.f32 %v2935, %v3063
    %v3163 = vadd.f32 %v2937, %v3065
    %v3164 = vadd.f32 %v2939, %v3067
    %v3165 = vadd.f32 %v2941, %v3069
    %v3166 = vadd.f32 %v2943, %v3071
    %v3167 = vadd.f32 %v2945, %v3073
    %v3168 = vadd.f32 %v2947, %v3075
    %v3169 = vadd.f32 %v2949, %v3077
    %v3170 = vadd.f32 %v2951, %v3079
    %v3171 = vadd.f32 %v2953, %v3081
    %v3172 = vadd.f32 %v2955, %v3083
    %v3173 = vadd.f32 %v2957, %v3085
    %v3174 = vadd.f32 %v2959, %v3087
    %v3175 = vadd.f32 %v2961, %v3089
    %v3176 = vadd.f32 %v2963, %v3091
    %v3177 = vadd.f32 %v2965, %v3093
    %v3178 = vadd.f32 %v2967, %v3095
    %v3179 = vadd.f32 %v2969, %v3097
    %v3180 = vadd.f32 %v2971, %v3099
    %v3181 = vadd.f32 %v2973, %v3101
    %v3182 = vadd.f32 %v2975, %v3103
    %v3183 = vadd.f32 %v2977, %v3105
    %v3184 = vadd.f32 %v2979, %v3107
    %v3185 = vadd.f32 %v2981, %v3109
    %v3186 = vadd.f32 %v2983, %v3111
    %v3187 = vadd.f32 %v2985, %v3113
    %v3188 = vadd.f32 %v2987, %v3115
    %v3189 = vadd.f32 %v2989, %v3117
    %v3190 = vadd.f32 %v2991, %v3119
    %v3191 = vadd.f32 %v2993, %v3121
    %v3192 = vadd.f32 %v2995, %v3123
    %v3193 = vadd.f32 %v2997, %v3125
    %v3194 = vadd.f32 %v2999, %v3127
    %v3195 = vadd.f32 %v3001, %v3129
    %v3196 = vadd.f32 %v3003, %v3131
    %v3197 = vadd.f32 %v3005, %v3133
    %s3198 = scalar_lea.vmem [#allocation2], 2
    %v3199 = vld [vmem:[%s3198] ss:$4 sm:$0xff]
    %s3200 = scalar_lea.vmem [#allocation2], 34
    %v3201 = vld [vmem:[%s3200] ss:$4 sm:$0xff]
    %s3202 = scalar_lea.vmem [#allocation2], 66
    %v3203 = vld [vmem:[%s3202] ss:$4 sm:$0xff]
    %s3204 = scalar_lea.vmem [#allocation2], 98
    %v3205 = vld [vmem:[%s3204] ss:$4 sm:$0xff]
    %s3206 = scalar_lea.vmem [#allocation2], 130
    %v3207 = vld [vmem:[%s3206] ss:$4 sm:$0xff]
    %s3208 = scalar_lea.vmem [#allocation2], 162
    %v3209 = vld [vmem:[%s3208] ss:$4 sm:$0xff]
    %s3210 = scalar_lea.vmem [#allocation2], 194
    %v3211 = vld [vmem:[%s3210] ss:$4 sm:$0xff]
    %s3212 = scalar_lea.vmem [#allocation2], 226
    %v3213 = vld [vmem:[%s3212] ss:$4 sm:$0xff]
    %s3214 = scalar_lea.vmem [#allocation2], 258
    %v3215 = vld [vmem:[%s3214] ss:$4 sm:$0xff]
    %s3216 = scalar_lea.vmem [#allocation2], 290
    %v3217 = vld [vmem:[%s3216] ss:$4 sm:$0xff]
    %s3218 = scalar_lea.vmem [#allocation2], 322
    %v3219 = vld [vmem:[%s3218] ss:$4 sm:$0xff]
    %s3220 = scalar_lea.vmem [#allocation2], 354
    %v3221 = vld [vmem:[%s3220] ss:$4 sm:$0xff]
    %s3222 = scalar_lea.vmem [#allocation2], 386
    %v3223 = vld [vmem:[%s3222] ss:$4 sm:$0xff]
    %s3224 = scalar_lea.vmem [#allocation2], 418
    %v3225 = vld [vmem:[%s3224] ss:$4 sm:$0xff]
    %s3226 = scalar_lea.vmem [#allocation2], 450
    %v3227 = vld [vmem:[%s3226] ss:$4 sm:$0xff]
    %s3228 = scalar_lea.vmem [#allocation2], 482
    %v3229 = vld [vmem:[%s3228] ss:$4 sm:$0xff]
    %s3230 = scalar_lea.vmem [#allocation2], 514
    %v3231 = vld [vmem:[%s3230] ss:$4 sm:$0xff]
    %s3232 = scalar_lea.vmem [#allocation2], 546
    %v3233 = vld [vmem:[%s3232] ss:$4 sm:$0xff]
    %s3234 = scalar_lea.vmem [#allocation2], 578
    %v3235 = vld [vmem:[%s3234] ss:$4 sm:$0xff]
    %s3236 = scalar_lea.vmem [#allocation2], 610
    %v3237 = vld [vmem:[%s3236] ss:$4 sm:$0xff]
    %s3238 = scalar_lea.vmem [#allocation2], 642
    %v3239 = vld [vmem:[%s3238] ss:$4 sm:$0xff]
    %s3240 = scalar_lea.vmem [#allocation2], 674
    %v3241 = vld [vmem:[%s3240] ss:$4 sm:$0xff]
    %s3242 = scalar_lea.vmem [#allocation2], 706
    %v3243 = vld [vmem:[%s3242] ss:$4 sm:$0xff]
    %s3244 = scalar_lea.vmem [#allocation2], 738
    %v3245 = vld [vmem:[%s3244] ss:$4 sm:$0xff]
    %s3246 = scalar_lea.vmem [#allocation2], 770
    %v3247 = vld [vmem:[%s3246] ss:$4 sm:$0xff]
    %s3248 = scalar_lea.vmem [#allocation2], 802
    %v3249 = vld [vmem:[%s3248] ss:$4 sm:$0xff]
    %s3250 = scalar_lea.vmem [#allocation2], 834
    %v3251 = vld [vmem:[%s3250] ss:$4 sm:$0xff]
    %s3252 = scalar_lea.vmem [#allocation2], 866
    %v3253 = vld [vmem:[%s3252] ss:$4 sm:$0xff]
    %s3254 = scalar_lea.vmem [#allocation2], 898
    %v3255 = vld [vmem:[%s3254] ss:$4 sm:$0xff]
    %s3256 = scalar_lea.vmem [#allocation2], 930
    %v3257 = vld [vmem:[%s3256] ss:$4 sm:$0xff]
    %s3258 = scalar_lea.vmem [#allocation2], 962
    %v3259 = vld [vmem:[%s3258] ss:$4 sm:$0xff]
    %s3260 = scalar_lea.vmem [#allocation2], 994
    %v3261 = vld [vmem:[%s3260] ss:$4 sm:$0xff]
    %s3262 = scalar_lea.vmem [#allocation2], 1026
    %v3263 = vld [vmem:[%s3262] ss:$4 sm:$0xff]
    %s3264 = scalar_lea.vmem [#allocation2], 1058
    %v3265 = vld [vmem:[%s3264] ss:$4 sm:$0xff]
    %s3266 = scalar_lea.vmem [#allocation2], 1090
    %v3267 = vld [vmem:[%s3266] ss:$4 sm:$0xff]
    %s3268 = scalar_lea.vmem [#allocation2], 1122
    %v3269 = vld [vmem:[%s3268] ss:$4 sm:$0xff]
    %s3270 = scalar_lea.vmem [#allocation2], 1154
    %v3271 = vld [vmem:[%s3270] ss:$4 sm:$0xff]
    %s3272 = scalar_lea.vmem [#allocation2], 1186
    %v3273 = vld [vmem:[%s3272] ss:$4 sm:$0xff]
    %s3274 = scalar_lea.vmem [#allocation2], 1218
    %v3275 = vld [vmem:[%s3274] ss:$4 sm:$0xff]
    %s3276 = scalar_lea.vmem [#allocation2], 1250
    %v3277 = vld [vmem:[%s3276] ss:$4 sm:$0xff]
    %s3278 = scalar_lea.vmem [#allocation2], 1282
    %v3279 = vld [vmem:[%s3278] ss:$4 sm:$0xff]
    %s3280 = scalar_lea.vmem [#allocation2], 1314
    %v3281 = vld [vmem:[%s3280] ss:$4 sm:$0xff]
    %s3282 = scalar_lea.vmem [#allocation2], 1346
    %v3283 = vld [vmem:[%s3282] ss:$4 sm:$0xff]
    %s3284 = scalar_lea.vmem [#allocation2], 1378
    %v3285 = vld [vmem:[%s3284] ss:$4 sm:$0xff]
    %s3286 = scalar_lea.vmem [#allocation2], 1410
    %v3287 = vld [vmem:[%s3286] ss:$4 sm:$0xff]
    %s3288 = scalar_lea.vmem [#allocation2], 1442
    %v3289 = vld [vmem:[%s3288] ss:$4 sm:$0xff]
    %s3290 = scalar_lea.vmem [#allocation2], 1474
    %v3291 = vld [vmem:[%s3290] ss:$4 sm:$0xff]
    %s3292 = scalar_lea.vmem [#allocation2], 1506
    %v3293 = vld [vmem:[%s3292] ss:$4 sm:$0xff]
    %s3294 = scalar_lea.vmem [#allocation2], 1538
    %v3295 = vld [vmem:[%s3294] ss:$4 sm:$0xff]
    %s3296 = scalar_lea.vmem [#allocation2], 1570
    %v3297 = vld [vmem:[%s3296] ss:$4 sm:$0xff]
    %s3298 = scalar_lea.vmem [#allocation2], 1602
    %v3299 = vld [vmem:[%s3298] ss:$4 sm:$0xff]
    %s3300 = scalar_lea.vmem [#allocation2], 1634
    %v3301 = vld [vmem:[%s3300] ss:$4 sm:$0xff]
    %s3302 = scalar_lea.vmem [#allocation2], 1666
    %v3303 = vld [vmem:[%s3302] ss:$4 sm:$0xff]
    %s3304 = scalar_lea.vmem [#allocation2], 1698
    %v3305 = vld [vmem:[%s3304] ss:$4 sm:$0xff]
    %s3306 = scalar_lea.vmem [#allocation2], 1730
    %v3307 = vld [vmem:[%s3306] ss:$4 sm:$0xff]
    %s3308 = scalar_lea.vmem [#allocation2], 1762
    %v3309 = vld [vmem:[%s3308] ss:$4 sm:$0xff]
    %s3310 = scalar_lea.vmem [#allocation2], 1794
    %v3311 = vld [vmem:[%s3310] ss:$4 sm:$0xff]
    %s3312 = scalar_lea.vmem [#allocation2], 1826
    %v3313 = vld [vmem:[%s3312] ss:$4 sm:$0xff]
    %s3314 = scalar_lea.vmem [#allocation2], 1858
    %v3315 = vld [vmem:[%s3314] ss:$4 sm:$0xff]
    %s3316 = scalar_lea.vmem [#allocation2], 1890
    %v3317 = vld [vmem:[%s3316] ss:$4 sm:$0xff]
    %s3318 = scalar_lea.vmem [#allocation2], 1922
    %v3319 = vld [vmem:[%s3318] ss:$4 sm:$0xff]
    %s3320 = scalar_lea.vmem [#allocation2], 1954
    %v3321 = vld [vmem:[%s3320] ss:$4 sm:$0xff]
    %s3322 = scalar_lea.vmem [#allocation2], 1986
    %v3323 = vld [vmem:[%s3322] ss:$4 sm:$0xff]
    %s3324 = scalar_lea.vmem [#allocation2], 2018
    %v3325 = vld [vmem:[%s3324] ss:$4 sm:$0xff]
    %v3326 = vadd.f32 %v3134, %v3199
    %v3327 = vadd.f32 %v3135, %v3201
    %v3328 = vadd.f32 %v3136, %v3203
    %v3329 = vadd.f32 %v3137, %v3205
    %v3330 = vadd.f32 %v3138, %v3207
    %v3331 = vadd.f32 %v3139, %v3209
    %v3332 = vadd.f32 %v3140, %v3211
    %v3333 = vadd.f32 %v3141, %v3213
    %v3334 = vadd.f32 %v3142, %v3215
    %v3335 = vadd.f32 %v3143, %v3217
    %v3336 = vadd.f32 %v3144, %v3219
    %v3337 = vadd.f32 %v3145, %v3221
    %v3338 = vadd.f32 %v3146, %v3223
    %v3339 = vadd.f32 %v3147, %v3225
    %v3340 = vadd.f32 %v3148, %v3227
    %v3341 = vadd.f32 %v3149, %v3229
    %v3342 = vadd.f32 %v3150, %v3231
    %v3343 = vadd.f32 %v3151, %v3233
    %v3344 = vadd.f32 %v3152, %v3235
    %v3345 = vadd.f32 %v3153, %v3237
    %v3346 = vadd.f32 %v3154, %v3239
    %v3347 = vadd.f32 %v3155, %v3241
    %v3348 = vadd.f32 %v3156, %v3243
    %v3349 = vadd.f32 %v3157, %v3245
    %v3350 = vadd.f32 %v3158, %v3247
    %v3351 = vadd.f32 %v3159, %v3249
    %v3352 = vadd.f32 %v3160, %v3251
    %v3353 = vadd.f32 %v3161, %v3253
    %v3354 = vadd.f32 %v3162, %v3255
    %v3355 = vadd.f32 %v3163, %v3257
    %v3356 = vadd.f32 %v3164, %v3259
    %v3357 = vadd.f32 %v3165, %v3261
    %v3358 = vadd.f32 %v3166, %v3263
    %v3359 = vadd.f32 %v3167, %v3265
    %v3360 = vadd.f32 %v3168, %v3267
    %v3361 = vadd.f32 %v3169, %v3269
    %v3362 = vadd.f32 %v3170, %v3271
    %v3363 = vadd.f32 %v3171, %v3273
    %v3364 = vadd.f32 %v3172, %v3275
    %v3365 = vadd.f32 %v3173, %v3277
    %v3366 = vadd.f32 %v3174, %v3279
    %v3367 = vadd.f32 %v3175, %v3281
    %v3368 = vadd.f32 %v3176, %v3283
    %v3369 = vadd.f32 %v3177, %v3285
    %v3370 = vadd.f32 %v3178, %v3287
    %v3371 = vadd.f32 %v3179, %v3289
    %v3372 = vadd.f32 %v3180, %v3291
    %v3373 = vadd.f32 %v3181, %v3293
    %v3374 = vadd.f32 %v3182, %v3295
    %v3375 = vadd.f32 %v3183, %v3297
    %v3376 = vadd.f32 %v3184, %v3299
    %v3377 = vadd.f32 %v3185, %v3301
    %v3378 = vadd.f32 %v3186, %v3303
    %v3379 = vadd.f32 %v3187, %v3305
    %v3380 = vadd.f32 %v3188, %v3307
    %v3381 = vadd.f32 %v3189, %v3309
    %v3382 = vadd.f32 %v3190, %v3311
    %v3383 = vadd.f32 %v3191, %v3313
    %v3384 = vadd.f32 %v3192, %v3315
    %v3385 = vadd.f32 %v3193, %v3317
    %v3386 = vadd.f32 %v3194, %v3319
    %v3387 = vadd.f32 %v3195, %v3321
    %v3388 = vadd.f32 %v3196, %v3323
    %v3389 = vadd.f32 %v3197, %v3325
    %s3390 = scalar_lea.vmem [#allocation2], 3
    %v3391 = vld [vmem:[%s3390] ss:$4 sm:$0xff]
    %s3392 = scalar_lea.vmem [#allocation2], 35
    %v3393 = vld [vmem:[%s3392] ss:$4 sm:$0xff]
    %s3394 = scalar_lea.vmem [#allocation2], 67
    %v3395 = vld [vmem:[%s3394] ss:$4 sm:$0xff]
    %s3396 = scalar_lea.vmem [#allocation2], 99
    %v3397 = vld [vmem:[%s3396] ss:$4 sm:$0xff]
    %s3398 = scalar_lea.vmem [#allocation2], 131
    %v3399 = vld [vmem:[%s3398] ss:$4 sm:$0xff]
    %s3400 = scalar_lea.vmem [#allocation2], 163
    %v3401 = vld [vmem:[%s3400] ss:$4 sm:$0xff]
    %s3402 = scalar_lea.vmem [#allocation2], 195
    %v3403 = vld [vmem:[%s3402] ss:$4 sm:$0xff]
    %s3404 = scalar_lea.vmem [#allocation2], 227
    %v3405 = vld [vmem:[%s3404] ss:$4 sm:$0xff]
    %s3406 = scalar_lea.vmem [#allocation2], 259
    %v3407 = vld [vmem:[%s3406] ss:$4 sm:$0xff]
    %s3408 = scalar_lea.vmem [#allocation2], 291
    %v3409 = vld [vmem:[%s3408] ss:$4 sm:$0xff]
    %s3410 = scalar_lea.vmem [#allocation2], 323
    %v3411 = vld [vmem:[%s3410] ss:$4 sm:$0xff]
    %s3412 = scalar_lea.vmem [#allocation2], 355
    %v3413 = vld [vmem:[%s3412] ss:$4 sm:$0xff]
    %s3414 = scalar_lea.vmem [#allocation2], 387
    %v3415 = vld [vmem:[%s3414] ss:$4 sm:$0xff]
    %s3416 = scalar_lea.vmem [#allocation2], 419
    %v3417 = vld [vmem:[%s3416] ss:$4 sm:$0xff]
    %s3418 = scalar_lea.vmem [#allocation2], 451
    %v3419 = vld [vmem:[%s3418] ss:$4 sm:$0xff]
    %s3420 = scalar_lea.vmem [#allocation2], 483
    %v3421 = vld [vmem:[%s3420] ss:$4 sm:$0xff]
    %s3422 = scalar_lea.vmem [#allocation2], 515
    %v3423 = vld [vmem:[%s3422] ss:$4 sm:$0xff]
    %s3424 = scalar_lea.vmem [#allocation2], 547
    %v3425 = vld [vmem:[%s3424] ss:$4 sm:$0xff]
    %s3426 = scalar_lea.vmem [#allocation2], 579
    %v3427 = vld [vmem:[%s3426] ss:$4 sm:$0xff]
    %s3428 = scalar_lea.vmem [#allocation2], 611
    %v3429 = vld [vmem:[%s3428] ss:$4 sm:$0xff]
    %s3430 = scalar_lea.vmem [#allocation2], 643
    %v3431 = vld [vmem:[%s3430] ss:$4 sm:$0xff]
    %s3432 = scalar_lea.vmem [#allocation2], 675
    %v3433 = vld [vmem:[%s3432] ss:$4 sm:$0xff]
    %s3434 = scalar_lea.vmem [#allocation2], 707
    %v3435 = vld [vmem:[%s3434] ss:$4 sm:$0xff]
    %s3436 = scalar_lea.vmem [#allocation2], 739
    %v3437 = vld [vmem:[%s3436] ss:$4 sm:$0xff]
    %s3438 = scalar_lea.vmem [#allocation2], 771
    %v3439 = vld [vmem:[%s3438] ss:$4 sm:$0xff]
    %s3440 = scalar_lea.vmem [#allocation2], 803
    %v3441 = vld [vmem:[%s3440] ss:$4 sm:$0xff]
    %s3442 = scalar_lea.vmem [#allocation2], 835
    %v3443 = vld [vmem:[%s3442] ss:$4 sm:$0xff]
    %s3444 = scalar_lea.vmem [#allocation2], 867
    %v3445 = vld [vmem:[%s3444] ss:$4 sm:$0xff]
    %s3446 = scalar_lea.vmem [#allocation2], 899
    %v3447 = vld [vmem:[%s3446] ss:$4 sm:$0xff]
    %s3448 = scalar_lea.vmem [#allocation2], 931
    %v3449 = vld [vmem:[%s3448] ss:$4 sm:$0xff]
    %s3450 = scalar_lea.vmem [#allocation2], 963
    %v3451 = vld [vmem:[%s3450] ss:$4 sm:$0xff]
    %s3452 = scalar_lea.vmem [#allocation2], 995
    %v3453 = vld [vmem:[%s3452] ss:$4 sm:$0xff]
    %s3454 = scalar_lea.vmem [#allocation2], 1027
    %v3455 = vld [vmem:[%s3454] ss:$4 sm:$0xff]
    %s3456 = scalar_lea.vmem [#allocation2], 1059
    %v3457 = vld [vmem:[%s3456] ss:$4 sm:$0xff]
    %s3458 = scalar_lea.vmem [#allocation2], 1091
    %v3459 = vld [vmem:[%s3458] ss:$4 sm:$0xff]
    %s3460 = scalar_lea.vmem [#allocation2], 1123
    %v3461 = vld [vmem:[%s3460] ss:$4 sm:$0xff]
    %s3462 = scalar_lea.vmem [#allocation2], 1155
    %v3463 = vld [vmem:[%s3462] ss:$4 sm:$0xff]
    %s3464 = scalar_lea.vmem [#allocation2], 1187
    %v3465 = vld [vmem:[%s3464] ss:$4 sm:$0xff]
    %s3466 = scalar_lea.vmem [#allocation2], 1219
    %v3467 = vld [vmem:[%s3466] ss:$4 sm:$0xff]
    %s3468 = scalar_lea.vmem [#allocation2], 1251
    %v3469 = vld [vmem:[%s3468] ss:$4 sm:$0xff]
    %s3470 = scalar_lea.vmem [#allocation2], 1283
    %v3471 = vld [vmem:[%s3470] ss:$4 sm:$0xff]
    %s3472 = scalar_lea.vmem [#allocation2], 1315
    %v3473 = vld [vmem:[%s3472] ss:$4 sm:$0xff]
    %s3474 = scalar_lea.vmem [#allocation2], 1347
    %v3475 = vld [vmem:[%s3474] ss:$4 sm:$0xff]
    %s3476 = scalar_lea.vmem [#allocation2], 1379
    %v3477 = vld [vmem:[%s3476] ss:$4 sm:$0xff]
    %s3478 = scalar_lea.vmem [#allocation2], 1411
    %v3479 = vld [vmem:[%s3478] ss:$4 sm:$0xff]
    %s3480 = scalar_lea.vmem [#allocation2], 1443
    %v3481 = vld [vmem:[%s3480] ss:$4 sm:$0xff]
    %s3482 = scalar_lea.vmem [#allocation2], 1475
    %v3483 = vld [vmem:[%s3482] ss:$4 sm:$0xff]
    %s3484 = scalar_lea.vmem [#allocation2], 1507
    %v3485 = vld [vmem:[%s3484] ss:$4 sm:$0xff]
    %s3486 = scalar_lea.vmem [#allocation2], 1539
    %v3487 = vld [vmem:[%s3486] ss:$4 sm:$0xff]
    %s3488 = scalar_lea.vmem [#allocation2], 1571
    %v3489 = vld [vmem:[%s3488] ss:$4 sm:$0xff]
    %s3490 = scalar_lea.vmem [#allocation2], 1603
    %v3491 = vld [vmem:[%s3490] ss:$4 sm:$0xff]
    %s3492 = scalar_lea.vmem [#allocation2], 1635
    %v3493 = vld [vmem:[%s3492] ss:$4 sm:$0xff]
    %s3494 = scalar_lea.vmem [#allocation2], 1667
    %v3495 = vld [vmem:[%s3494] ss:$4 sm:$0xff]
    %s3496 = scalar_lea.vmem [#allocation2], 1699
    %v3497 = vld [vmem:[%s3496] ss:$4 sm:$0xff]
    %s3498 = scalar_lea.vmem [#allocation2], 1731
    %v3499 = vld [vmem:[%s3498] ss:$4 sm:$0xff]
    %s3500 = scalar_lea.vmem [#allocation2], 1763
    %v3501 = vld [vmem:[%s3500] ss:$4 sm:$0xff]
    %s3502 = scalar_lea.vmem [#allocation2], 1795
    %v3503 = vld [vmem:[%s3502] ss:$4 sm:$0xff]
    %s3504 = scalar_lea.vmem [#allocation2], 1827
    %v3505 = vld [vmem:[%s3504] ss:$4 sm:$0xff]
    %s3506 = scalar_lea.vmem [#allocation2], 1859
    %v3507 = vld [vmem:[%s3506] ss:$4 sm:$0xff]
    %s3508 = scalar_lea.vmem [#allocation2], 1891
    %v3509 = vld [vmem:[%s3508] ss:$4 sm:$0xff]
    %s3510 = scalar_lea.vmem [#allocation2], 1923
    %v3511 = vld [vmem:[%s3510] ss:$4 sm:$0xff]
    %s3512 = scalar_lea.vmem [#allocation2], 1955
    %v3513 = vld [vmem:[%s3512] ss:$4 sm:$0xff]
    %s3514 = scalar_lea.vmem [#allocation2], 1987
    %v3515 = vld [vmem:[%s3514] ss:$4 sm:$0xff]
    %s3516 = scalar_lea.vmem [#allocation2], 2019
    %v3517 = vld [vmem:[%s3516] ss:$4 sm:$0xff]
    %v3518 = vadd.f32 %v3326, %v3391
    %v3519 = vadd.f32 %v3327, %v3393
    %v3520 = vadd.f32 %v3328, %v3395
    %v3521 = vadd.f32 %v3329, %v3397
    %v3522 = vadd.f32 %v3330, %v3399
    %v3523 = vadd.f32 %v3331, %v3401
    %v3524 = vadd.f32 %v3332, %v3403
    %v3525 = vadd.f32 %v3333, %v3405
    %v3526 = vadd.f32 %v3334, %v3407
    %v3527 = vadd.f32 %v3335, %v3409
    %v3528 = vadd.f32 %v3336, %v3411
    %v3529 = vadd.f32 %v3337, %v3413
    %v3530 = vadd.f32 %v3338, %v3415
    %v3531 = vadd.f32 %v3339, %v3417
    %v3532 = vadd.f32 %v3340, %v3419
    %v3533 = vadd.f32 %v3341, %v3421
    %v3534 = vadd.f32 %v3342, %v3423
    %v3535 = vadd.f32 %v3343, %v3425
    %v3536 = vadd.f32 %v3344, %v3427
    %v3537 = vadd.f32 %v3345, %v3429
    %v3538 = vadd.f32 %v3346, %v3431
    %v3539 = vadd.f32 %v3347, %v3433
    %v3540 = vadd.f32 %v3348, %v3435
    %v3541 = vadd.f32 %v3349, %v3437
    %v3542 = vadd.f32 %v3350, %v3439
    %v3543 = vadd.f32 %v3351, %v3441
    %v3544 = vadd.f32 %v3352, %v3443
    %v3545 = vadd.f32 %v3353, %v3445
    %v3546 = vadd.f32 %v3354, %v3447
    %v3547 = vadd.f32 %v3355, %v3449
    %v3548 = vadd.f32 %v3356, %v3451
    %v3549 = vadd.f32 %v3357, %v3453
    %v3550 = vadd.f32 %v3358, %v3455
    %v3551 = vadd.f32 %v3359, %v3457
    %v3552 = vadd.f32 %v3360, %v3459
    %v3553 = vadd.f32 %v3361, %v3461
    %v3554 = vadd.f32 %v3362, %v3463
    %v3555 = vadd.f32 %v3363, %v3465
    %v3556 = vadd.f32 %v3364, %v3467
    %v3557 = vadd.f32 %v3365, %v3469
    %v3558 = vadd.f32 %v3366, %v3471
    %v3559 = vadd.f32 %v3367, %v3473
    %v3560 = vadd.f32 %v3368, %v3475
    %v3561 = vadd.f32 %v3369, %v3477
    %v3562 = vadd.f32 %v3370, %v3479
    %v3563 = vadd.f32 %v3371, %v3481
    %v3564 = vadd.f32 %v3372, %v3483
    %v3565 = vadd.f32 %v3373, %v3485
    %v3566 = vadd.f32 %v3374, %v3487
    %v3567 = vadd.f32 %v3375, %v3489
    %v3568 = vadd.f32 %v3376, %v3491
    %v3569 = vadd.f32 %v3377, %v3493
    %v3570 = vadd.f32 %v3378, %v3495
    %v3571 = vadd.f32 %v3379, %v3497
    %v3572 = vadd.f32 %v3380, %v3499
    %v3573 = vadd.f32 %v3381, %v3501
    %v3574 = vadd.f32 %v3382, %v3503
    %v3575 = vadd.f32 %v3383, %v3505
    %v3576 = vadd.f32 %v3384, %v3507
    %v3577 = vadd.f32 %v3385, %v3509
    %v3578 = vadd.f32 %v3386, %v3511
    %v3579 = vadd.f32 %v3387, %v3513
    %v3580 = vadd.f32 %v3388, %v3515
    %v3581 = vadd.f32 %v3389, %v3517
    %v3582 = vmul.f32 %v3518, 0.25
    %v3583 = vmul.f32 %v3519, 0.25
    %v3584 = vmul.f32 %v3520, 0.25
    %v3585 = vmul.f32 %v3521, 0.25
    %v3586 = vmul.f32 %v3522, 0.25
    %v3587 = vmul.f32 %v3523, 0.25
    %v3588 = vmul.f32 %v3524, 0.25
    %v3589 = vmul.f32 %v3525, 0.25
    %v3590 = vmul.f32 %v3526, 0.25
    %v3591 = vmul.f32 %v3527, 0.25
    %v3592 = vmul.f32 %v3528, 0.25
    %v3593 = vmul.f32 %v3529, 0.25
    %v3594 = vmul.f32 %v3530, 0.25
    %v3595 = vmul.f32 %v3531, 0.25
    %v3596 = vmul.f32 %v3532, 0.25
    %v3597 = vmul.f32 %v3533, 0.25
    %v3598 = vmul.f32 %v3534, 0.25
    %v3599 = vmul.f32 %v3535, 0.25
    %v3600 = vmul.f32 %v3536, 0.25
    %v3601 = vmul.f32 %v3537, 0.25
    %v3602 = vmul.f32 %v3538, 0.25
    %v3603 = vmul.f32 %v3539, 0.25
    %v3604 = vmul.f32 %v3540, 0.25
    %v3605 = vmul.f32 %v3541, 0.25
    %v3606 = vmul.f32 %v3542, 0.25
    %v3607 = vmul.f32 %v3543, 0.25
    %v3608 = vmul.f32 %v3544, 0.25
    %v3609 = vmul.f32 %v3545, 0.25
    %v3610 = vmul.f32 %v3546, 0.25
    %v3611 = vmul.f32 %v3547, 0.25
    %v3612 = vmul.f32 %v3548, 0.25
    %v3613 = vmul.f32 %v3549, 0.25
    %v3614 = vmul.f32 %v3550, 0.25
    %v3615 = vmul.f32 %v3551, 0.25
    %v3616 = vmul.f32 %v3552, 0.25
    %v3617 = vmul.f32 %v3553, 0.25
    %v3618 = vmul.f32 %v3554, 0.25
    %v3619 = vmul.f32 %v3555, 0.25
    %v3620 = vmul.f32 %v3556, 0.25
    %v3621 = vmul.f32 %v3557, 0.25
    %v3622 = vmul.f32 %v3558, 0.25
    %v3623 = vmul.f32 %v3559, 0.25
    %v3624 = vmul.f32 %v3560, 0.25
    %v3625 = vmul.f32 %v3561, 0.25
    %v3626 = vmul.f32 %v3562, 0.25
    %v3627 = vmul.f32 %v3563, 0.25
    %v3628 = vmul.f32 %v3564, 0.25
    %v3629 = vmul.f32 %v3565, 0.25
    %v3630 = vmul.f32 %v3566, 0.25
    %v3631 = vmul.f32 %v3567, 0.25
    %v3632 = vmul.f32 %v3568, 0.25
    %v3633 = vmul.f32 %v3569, 0.25
    %v3634 = vmul.f32 %v3570, 0.25
    %v3635 = vmul.f32 %v3571, 0.25
    %v3636 = vmul.f32 %v3572, 0.25
    %v3637 = vmul.f32 %v3573, 0.25
    %v3638 = vmul.f32 %v3574, 0.25
    %v3639 = vmul.f32 %v3575, 0.25
    %v3640 = vmul.f32 %v3576, 0.25
    %v3641 = vmul.f32 %v3577, 0.25
    %v3642 = vmul.f32 %v3578, 0.25
    %v3643 = vmul.f32 %v3579, 0.25
    %v3644 = vmul.f32 %v3580, 0.25
    %v3645 = vmul.f32 %v3581, 0.25
    %v3646 = vsub.f32 %v3582, %v3614
    %v3647 = vsub.f32 %v3583, %v3615
    %v3648 = vsub.f32 %v3584, %v3616
    %v3649 = vsub.f32 %v3585, %v3617
    %v3650 = vsub.f32 %v3586, %v3618
    %v3651 = vsub.f32 %v3587, %v3619
    %v3652 = vsub.f32 %v3588, %v3620
    %v3653 = vsub.f32 %v3589, %v3621
    %v3654 = vsub.f32 %v3590, %v3622
    %v3655 = vsub.f32 %v3591, %v3623
    %v3656 = vsub.f32 %v3592, %v3624
    %v3657 = vsub.f32 %v3593, %v3625
    %v3658 = vsub.f32 %v3594, %v3626
    %v3659 = vsub.f32 %v3595, %v3627
    %v3660 = vsub.f32 %v3596, %v3628
    %v3661 = vsub.f32 %v3597, %v3629
    %v3662 = vsub.f32 %v3598, %v3630
    %v3663 = vsub.f32 %v3599, %v3631
    %v3664 = vsub.f32 %v3600, %v3632
    %v3665 = vsub.f32 %v3601, %v3633
    %v3666 = vsub.f32 %v3602, %v3634
    %v3667 = vsub.f32 %v3603, %v3635
    %v3668 = vsub.f32 %v3604, %v3636
    %v3669 = vsub.f32 %v3605, %v3637
    %v3670 = vsub.f32 %v3606, %v3638
    %v3671 = vsub.f32 %v3607, %v3639
    %v3672 = vsub.f32 %v3608, %v3640
    %v3673 = vsub.f32 %v3609, %v3641
    %v3674 = vsub.f32 %v3610, %v3642
    %v3675 = vsub.f32 %v3611, %v3643
    %v3676 = vsub.f32 %v3612, %v3644
    %v3677 = vsub.f32 %v3613, %v3645
    %v3678 = vmul.f32 %v3646, %v3646
    %v3679 = vmul.f32 %v3647, %v3647
    %v3680 = vmul.f32 %v3648, %v3648
    %v3681 = vmul.f32 %v3649, %v3649
    %v3682 = vmul.f32 %v3650, %v3650
    %v3683 = vmul.f32 %v3651, %v3651
    %v3684 = vmul.f32 %v3652, %v3652
    %v3685 = vmul.f32 %v3653, %v3653
    %v3686 = vmul.f32 %v3654, %v3654
    %v3687 = vmul.f32 %v3655, %v3655
    %v3688 = vmul.f32 %v3656, %v3656
    %v3689 = vmul.f32 %v3657, %v3657
    %v3690 = vmul.f32 %v3658, %v3658
    %v3691 = vmul.f32 %v3659, %v3659
    %v3692 = vmul.f32 %v3660, %v3660
    %v3693 = vmul.f32 %v3661, %v3661
    %v3694 = vmul.f32 %v3662, %v3662
    %v3695 = vmul.f32 %v3663, %v3663
    %v3696 = vmul.f32 %v3664, %v3664
    %v3697 = vmul.f32 %v3665, %v3665
    %v3698 = vmul.f32 %v3666, %v3666
    %v3699 = vmul.f32 %v3667, %v3667
    %v3700 = vmul.f32 %v3668, %v3668
    %v3701 = vmul.f32 %v3669, %v3669
    %v3702 = vmul.f32 %v3670, %v3670
    %v3703 = vmul.f32 %v3671, %v3671
    %v3704 = vmul.f32 %v3672, %v3672
    %v3705 = vmul.f32 %v3673, %v3673
    %v3706 = vmul.f32 %v3674, %v3674
    %v3707 = vmul.f32 %v3675, %v3675
    %v3708 = vmul.f32 %v3676, %v3676
    %v3709 = vmul.f32 %v3677, %v3677
    %v3710 = vadd.f32 %v3678, %v3679
    %v3711 = vadd.f32 %v3710, %v3680
    %v3712 = vadd.f32 %v3711, %v3681
    %v3713 = vadd.f32 %v3712, %v3682
    %v3714 = vadd.f32 %v3713, %v3683
    %v3715 = vadd.f32 %v3714, %v3684
    %v3716 = vadd.f32 %v3715, %v3685
    %v3717 = vadd.f32 %v3716, %v3686
    %v3718 = vadd.f32 %v3717, %v3687
    %v3719 = vadd.f32 %v3718, %v3688
    %v3720 = vadd.f32 %v3719, %v3689
    %v3721 = vadd.f32 %v3720, %v3690
    %v3722 = vadd.f32 %v3721, %v3691
    %v3723 = vadd.f32 %v3722, %v3692
    %v3724 = vadd.f32 %v3723, %v3693
    %v3725 = vadd.f32 %v3724, %v3694
    %v3726 = vadd.f32 %v3725, %v3695
    %v3727 = vadd.f32 %v3726, %v3696
    %v3728 = vadd.f32 %v3727, %v3697
    %v3729 = vadd.f32 %v3728, %v3698
    %v3730 = vadd.f32 %v3729, %v3699
    %v3731 = vadd.f32 %v3730, %v3700
    %v3732 = vadd.f32 %v3731, %v3701
    %v3733 = vadd.f32 %v3732, %v3702
    %v3734 = vadd.f32 %v3733, %v3703
    %v3735 = vadd.f32 %v3734, %v3704
    %v3736 = vadd.f32 %v3735, %v3705
    %v3737 = vadd.f32 %v3736, %v3706
    %v3738 = vadd.f32 %v3737, %v3707
    %v3739 = vadd.f32 %v3738, %v3708
    %v3740 = vadd.f32 %v3739, %v3709
    %3741 = vadd.xlane.f32.xlu0 %v3740
    %v3742 = vpop.xlane.xlu0 %3741
    %v3743 = vrot.slane %v3742, 4
    %v3744 = vadd.f32 %v3742, %v3743
    %v3745 = vrot.slane %v3744, 2
    %v3746 = vadd.f32 %v3744, %v3745
    %v3747 = vrot.slane %v3746, 1
    %v3748 = vadd.f32 %v3746, %v3747
    %s3749 = vtos %v3748
    %s3750 = smul.f32 %s3749, 0.00012207031
    %s3751 = scalar_lea.smem [#allocation3], 0
    %3752 = sst [smem:[%s3751]] %s3750
    %v3753 = vpack.c.bf16 %v3583, %v3582
    %v3754 = vpack.c.bf16 %v3585, %v3584
    %v3755 = vpack.c.bf16 %v3587, %v3586
    %v3756 = vpack.c.bf16 %v3589, %v3588
    %v3757 = vpack.c.bf16 %v3591, %v3590
    %v3758 = vpack.c.bf16 %v3593, %v3592
    %v3759 = vpack.c.bf16 %v3595, %v3594
    %v3760 = vpack.c.bf16 %v3597, %v3596
    %v3761 = vpack.c.bf16 %v3599, %v3598
    %v3762 = vpack.c.bf16 %v3601, %v3600
    %v3763 = vpack.c.bf16 %v3603, %v3602
    %v3764 = vpack.c.bf16 %v3605, %v3604
    %v3765 = vpack.c.bf16 %v3607, %v3606
    %v3766 = vpack.c.bf16 %v3609, %v3608
    %v3767 = vpack.c.bf16 %v3611, %v3610
    %v3768 = vpack.c.bf16 %v3613, %v3612
    %v3769 = vpack.c.bf16 %v3615, %v3614
    %v3770 = vpack.c.bf16 %v3617, %v3616
    %v3771 = vpack.c.bf16 %v3619, %v3618
    %v3772 = vpack.c.bf16 %v3621, %v3620
    %v3773 = vpack.c.bf16 %v3623, %v3622
    %v3774 = vpack.c.bf16 %v3625, %v3624
    %v3775 = vpack.c.bf16 %v3627, %v3626
    %v3776 = vpack.c.bf16 %v3629, %v3628
    %v3777 = vpack.c.bf16 %v3631, %v3630
    %v3778 = vpack.c.bf16 %v3633, %v3632
    %v3779 = vpack.c.bf16 %v3635, %v3634
    %v3780 = vpack.c.bf16 %v3637, %v3636
    %v3781 = vpack.c.bf16 %v3639, %v3638
    %v3782 = vpack.c.bf16 %v3641, %v3640
    %v3783 = vpack.c.bf16 %v3643, %v3642
    %v3784 = vpack.c.bf16 %v3645, %v3644
    %v3785 = vld [vmem:[%s1 + $0x8] sm:$0xf]
    %v3786 = vld [vmem:[%s1 + $0xc] sm:$0xf]
    %v3787 = vld [vmem:[%s1 + $0x10] sm:$0xf]
    %v3788 = vld [vmem:[%s1 + $0x14] sm:$0xf]
    %v3789 = vld [vmem:[%s1 + $0x18] sm:$0xf]
    %v3790 = vld [vmem:[%s1 + $0x1c] sm:$0xf]
    %v3791 = vld [vmem:[%s1 + $0x20] sm:$0xf]
    %v3792 = vld [vmem:[%s1 + $0x24] sm:$0xf]
    %v3793 = vld [vmem:[%s1 + $0x28] sm:$0xf]
    %v3794 = vld [vmem:[%s1 + $0x2c] sm:$0xf]
    %v3795 = vld [vmem:[%s1 + $0x30] sm:$0xf]
    %v3796 = vld [vmem:[%s1 + $0x34] sm:$0xf]
    %v3797 = vld [vmem:[%s1 + $0x38] sm:$0xf]
    %v3798 = vld [vmem:[%s1 + $0x3c] sm:$0xf]
    %v3799 = vld [vmem:[%s1 + $0x40] sm:$0xf]
    %v3800 = vld [vmem:[%s1 + $0x44] sm:$0xf]
    %v3801 = vld [vmem:[%s2 + $0x1] sm:$0x1]
    %v3802 = vlaneseq
    %v3803 = vshrl.u32 %v3802, 7
    %v3804 = vsub.s32 0, %v3803
    %v3805 = vrot.slane %v3801, %v3804
    %v3822 = vunpack.c.l.b16 %v3785
    %v3823 = vunpack.c.l.b16 %v3786
    %v3824 = vunpack.c.l.b16 %v3787
    %v3825 = vunpack.c.l.b16 %v3788
    %v3826 = vunpack.c.l.b16 %v3789
    %v3827 = vunpack.c.l.b16 %v3790
    %v3828 = vunpack.c.l.b16 %v3791
    %v3829 = vunpack.c.l.b16 %v3792
    %v3830 = vunpack.c.l.b16 %v3793
    %v3831 = vunpack.c.l.b16 %v3794
    %v3832 = vunpack.c.l.b16 %v3795
    %v3833 = vunpack.c.l.b16 %v3796
    %v3834 = vunpack.c.l.b16 %v3797
    %v3835 = vunpack.c.l.b16 %v3798
    %v3836 = vunpack.c.l.b16 %v3799
    %v3837 = vunpack.c.l.b16 %v3800
    %v3838 = vpack.c.b16 %v3823, %v3822
    %v3839 = vpack.c.b16 %v3825, %v3824
    %v3840 = vpack.c.b16 %v3827, %v3826
    %v3841 = vpack.c.b16 %v3829, %v3828
    %v3842 = vpack.c.b16 %v3831, %v3830
    %v3843 = vpack.c.b16 %v3833, %v3832
    %v3844 = vpack.c.b16 %v3835, %v3834
    %v3845 = vpack.c.b16 %v3837, %v3836
    %3854 = vmatprep.subr.bf16.mxu0 0
    %3855 = vmatpush1.bf16.msra.mxu0 %v3838
    %3856 = vmatprep.subr.bf16.mxu0 0
    %3857 = vmatpush1.bf16.msra.mxu0 %v3839
    %3858 = vmatprep.subr.bf16.mxu0 0
    %3859 = vmatpush1.bf16.msra.mxu0 %v3840
    %3860 = vmatprep.subr.bf16.mxu0 0
    %3861 = vmatpush1.bf16.msra.mxu0 %v3841
    %3862 = vmatprep.subr.bf16.mxu0 0
    %3863 = vmatpush1.bf16.msra.mxu0 %v3842
    %3864 = vmatprep.subr.bf16.mxu0 0
    %3865 = vmatpush1.bf16.msra.mxu0 %v3843
    %3866 = vmatprep.subr.bf16.mxu0 0
    %3867 = vmatpush1.bf16.msra.mxu0 %v3844
    %3868 = vmatprep.subr.bf16.mxu0 0
    %3869 = vmatpush1.bf16.msra.mxu0 %v3845
    %3870 = vmatprep.subr.bf16.mxu0 0
    %3871 = vmatpush1.bf16.msra.mxu0 0
    %3872 = vmatprep.subr.bf16.mxu0 0
    %3873 = vmatpush1.bf16.msra.mxu0 0
    %3874 = vmatprep.subr.bf16.mxu0 0
    %3875 = vmatpush1.bf16.msra.mxu0 0
    %3876 = vmatprep.subr.bf16.mxu0 0
    %3877 = vmatpush1.bf16.msra.mxu0 0
    %3878 = vmatprep.subr.bf16.mxu0 0
    %3879 = vmatpush1.bf16.msra.mxu0 0
    %3880 = vmatprep.subr.bf16.mxu0 0
    %3881 = vmatpush1.bf16.msra.mxu0 0
    %3882 = vmatprep.subr.bf16.mxu0 0
    %3883 = vmatpush1.bf16.msra.mxu0 0
    %3884 = vmatprep.subr.bf16.mxu0 0
    %3885 = vmatpush1.bf16.msra.mxu0 0
    %3886 = vmatprep.mubr.bf16.mxu0 0
    %3887 = vmatmul.mubr.bf16.gmra.mrb[0].mxu0 %v3753
    %v3888 = vpop.f32.mrb[0].mxu0
    %v3889 = vadd.f32 %v3805, %v3888
    %v3890 = vpop.f32.mrb[0].mxu0
    %v3891 = vpop.f32.mrb[0].mxu0
    %v3892 = vadd.f32 %v3805, %v3891
    %v3893 = vpop.f32.mrb[0].mxu0
    %3894 = vmatprep.mubr.bf16.mxu0 0
    %3895 = vmatmul.mubr.bf16.gmra.mrb[0].mxu0 %v3754
    %v3896 = vpop.f32.mrb[0].mxu0
    %v3897 = vadd.f32 %v3805, %v3896
    %v3898 = vpop.f32.mrb[0].mxu0
    %v3899 = vpop.f32.mrb[0].mxu0
    %v3900 = vadd.f32 %v3805, %v3899
    %v3901 = vpop.f32.mrb[0].mxu0
    %3902 = vmatprep.mubr.bf16.mxu0 0
    %3903 = vmatmul.mubr.bf16.gmra.mrb[0].mxu0 %v3755
    %v3904 = vpop.f32.mrb[0].mxu0
    %v3905 = vadd.f32 %v3805, %v3904
    %v3906 = vpop.f32.mrb[0].mxu0
    %v3907 = vpop.f32.mrb[0].mxu0
    %v3908 = vadd.f32 %v3805, %v3907
    %v3909 = vpop.f32.mrb[0].mxu0
    %3910 = vmatprep.mubr.bf16.mxu0 0
    %3911 = vmatmul.mubr.bf16.gmra.mrb[0].mxu0 %v3756
    %v3912 = vpop.f32.mrb[0].mxu0
    %v3913 = vadd.f32 %v3805, %v3912
    %v3914 = vpop.f32.mrb[0].mxu0
    %v3915 = vpop.f32.mrb[0].mxu0
    %v3916 = vadd.f32 %v3805, %v3915
    %v3917 = vpop.f32.mrb[0].mxu0
    %3918 = vmatprep.mubr.bf16.mxu0 0
    %3919 = vmatmul.mubr.bf16.gmra.mrb[0].mxu0 %v3757
    %v3920 = vpop.f32.mrb[0].mxu0
    %v3921 = vadd.f32 %v3805, %v3920
    %v3922 = vpop.f32.mrb[0].mxu0
    %v3923 = vpop.f32.mrb[0].mxu0
    %v3924 = vadd.f32 %v3805, %v3923
    %v3925 = vpop.f32.mrb[0].mxu0
    %3926 = vmatprep.mubr.bf16.mxu0 0
    %3927 = vmatmul.mubr.bf16.gmra.mrb[0].mxu0 %v3758
    %v3928 = vpop.f32.mrb[0].mxu0
    %v3929 = vadd.f32 %v3805, %v3928
    %v3930 = vpop.f32.mrb[0].mxu0
    %v3931 = vpop.f32.mrb[0].mxu0
    %v3932 = vadd.f32 %v3805, %v3931
    %v3933 = vpop.f32.mrb[0].mxu0
    %3934 = vmatprep.mubr.bf16.mxu0 0
    %3935 = vmatmul.mubr.bf16.gmra.mrb[0].mxu0 %v3759
    %v3936 = vpop.f32.mrb[0].mxu0
    %v3937 = vadd.f32 %v3805, %v3936
    %v3938 = vpop.f32.mrb[0].mxu0
    %v3939 = vpop.f32.mrb[0].mxu0
    %v3940 = vadd.f32 %v3805, %v3939
    %v3941 = vpop.f32.mrb[0].mxu0
    %3942 = vmatprep.mubr.bf16.mxu0 0
    %3943 = vmatmul.mubr.bf16.gmra.mrb[0].mxu0 %v3760
    %v3944 = vpop.f32.mrb[0].mxu0
    %v3945 = vadd.f32 %v3805, %v3944
    %v3946 = vpop.f32.mrb[0].mxu0
    %v3947 = vpop.f32.mrb[0].mxu0
    %v3948 = vadd.f32 %v3805, %v3947
    %v3949 = vpop.f32.mrb[0].mxu0
    %3950 = vmatprep.mubr.bf16.mxu0 0
    %3951 = vmatmul.mubr.bf16.gmra.mrb[0].mxu0 %v3761
    %v3952 = vpop.f32.mrb[0].mxu0
    %v3953 = vadd.f32 %v3805, %v3952
    %v3954 = vpop.f32.mrb[0].mxu0
    %v3955 = vpop.f32.mrb[0].mxu0
    %v3956 = vadd.f32 %v3805, %v3955
    %v3957 = vpop.f32.mrb[0].mxu0
    %3958 = vmatprep.mubr.bf16.mxu0 0
    %3959 = vmatmul.mubr.bf16.gmra.mrb[0].mxu0 %v3762
    %v3960 = vpop.f32.mrb[0].mxu0
    %v3961 = vadd.f32 %v3805, %v3960
    %v3962 = vpop.f32.mrb[0].mxu0
    %v3963 = vpop.f32.mrb[0].mxu0
    %v3964 = vadd.f32 %v3805, %v3963
    %v3965 = vpop.f32.mrb[0].mxu0
    %3966 = vmatprep.mubr.bf16.mxu0 0
    %3967 = vmatmul.mubr.bf16.gmra.mrb[0].mxu0 %v3763
    %v3968 = vpop.f32.mrb[0].mxu0
    %v3969 = vadd.f32 %v3805, %v3968
    %v3970 = vpop.f32.mrb[0].mxu0
    %v3971 = vpop.f32.mrb[0].mxu0
    %v3972 = vadd.f32 %v3805, %v3971
    %v3973 = vpop.f32.mrb[0].mxu0
    %3974 = vmatprep.mubr.bf16.mxu0 0
    %3975 = vmatmul.mubr.bf16.gmra.mrb[0].mxu0 %v3764
    %v3976 = vpop.f32.mrb[0].mxu0
    %v3977 = vadd.f32 %v3805, %v3976
    %v3978 = vpop.f32.mrb[0].mxu0
    %v3979 = vpop.f32.mrb[0].mxu0
    %v3980 = vadd.f32 %v3805, %v3979
    %v3981 = vpop.f32.mrb[0].mxu0
    %3982 = vmatprep.mubr.bf16.mxu0 0
    %3983 = vmatmul.mubr.bf16.gmra.mrb[0].mxu0 %v3765
    %v3984 = vpop.f32.mrb[0].mxu0
    %v3985 = vadd.f32 %v3805, %v3984
    %v3986 = vpop.f32.mrb[0].mxu0
    %v3987 = vpop.f32.mrb[0].mxu0
    %v3988 = vadd.f32 %v3805, %v3987
    %v3989 = vpop.f32.mrb[0].mxu0
    %3990 = vmatprep.mubr.bf16.mxu0 0
    %3991 = vmatmul.mubr.bf16.gmra.mrb[0].mxu0 %v3766
    %v3992 = vpop.f32.mrb[0].mxu0
    %v3993 = vadd.f32 %v3805, %v3992
    %v3994 = vpop.f32.mrb[0].mxu0
    %v3995 = vpop.f32.mrb[0].mxu0
    %v3996 = vadd.f32 %v3805, %v3995
    %v3997 = vpop.f32.mrb[0].mxu0
    %3998 = vmatprep.mubr.bf16.mxu0 0
    %3999 = vmatmul.mubr.bf16.gmra.mrb[0].mxu0 %v3767
    %v4000 = vpop.f32.mrb[0].mxu0
    %v4001 = vadd.f32 %v3805, %v4000
    %v4002 = vpop.f32.mrb[0].mxu0
    %v4003 = vpop.f32.mrb[0].mxu0
    %v4004 = vadd.f32 %v3805, %v4003
    %v4005 = vpop.f32.mrb[0].mxu0
    %4006 = vmatprep.mubr.bf16.mxu0 0
    %4007 = vmatmul.mubr.bf16.gmra.mrb[0].mxu0 %v3768
    %v4008 = vpop.f32.mrb[0].mxu0
    %v4009 = vadd.f32 %v3805, %v4008
    %v4010 = vpop.f32.mrb[0].mxu0
    %v4011 = vpop.f32.mrb[0].mxu0
    %v4012 = vadd.f32 %v3805, %v4011
    %v4013 = vpop.f32.mrb[0].mxu0
    %4014 = vmatprep.mubr.bf16.mxu0 0
    %4015 = vmatmul.mubr.bf16.gmra.mrb[0].mxu0 %v3769
    %v4016 = vpop.f32.mrb[0].mxu0
    %v4017 = vadd.f32 %v3805, %v4016
    %v4018 = vpop.f32.mrb[0].mxu0
    %v4019 = vpop.f32.mrb[0].mxu0
    %v4020 = vadd.f32 %v3805, %v4019
    %v4021 = vpop.f32.mrb[0].mxu0
    %4022 = vmatprep.mubr.bf16.mxu0 0
    %4023 = vmatmul.mubr.bf16.gmra.mrb[0].mxu0 %v3770
    %v4024 = vpop.f32.mrb[0].mxu0
    %v4025 = vadd.f32 %v3805, %v4024
    %v4026 = vpop.f32.mrb[0].mxu0
    %v4027 = vpop.f32.mrb[0].mxu0
    %v4028 = vadd.f32 %v3805, %v4027
    %v4029 = vpop.f32.mrb[0].mxu0
    %4030 = vmatprep.mubr.bf16.mxu0 0
    %4031 = vmatmul.mubr.bf16.gmra.mrb[0].mxu0 %v3771
    %v4032 = vpop.f32.mrb[0].mxu0
    %v4033 = vadd.f32 %v3805, %v4032
    %v4034 = vpop.f32.mrb[0].mxu0
    %v4035 = vpop.f32.mrb[0].mxu0
    %v4036 = vadd.f32 %v3805, %v4035
    %v4037 = vpop.f32.mrb[0].mxu0
    %4038 = vmatprep.mubr.bf16.mxu0 0
    %4039 = vmatmul.mubr.bf16.gmra.mrb[0].mxu0 %v3772
    %v4040 = vpop.f32.mrb[0].mxu0
    %v4041 = vadd.f32 %v3805, %v4040
    %v4042 = vpop.f32.mrb[0].mxu0
    %v4043 = vpop.f32.mrb[0].mxu0
    %v4044 = vadd.f32 %v3805, %v4043
    %v4045 = vpop.f32.mrb[0].mxu0
    %4046 = vmatprep.mubr.bf16.mxu0 0
    %4047 = vmatmul.mubr.bf16.gmra.mrb[0].mxu0 %v3773
    %v4048 = vpop.f32.mrb[0].mxu0
    %v4049 = vadd.f32 %v3805, %v4048
    %v4050 = vpop.f32.mrb[0].mxu0
    %v4051 = vpop.f32.mrb[0].mxu0
    %v4052 = vadd.f32 %v3805, %v4051
    %v4053 = vpop.f32.mrb[0].mxu0
    %4054 = vmatprep.mubr.bf16.mxu0 0
    %4055 = vmatmul.mubr.bf16.gmra.mrb[0].mxu0 %v3774
    %v4056 = vpop.f32.mrb[0].mxu0
    %v4057 = vadd.f32 %v3805, %v4056
    %v4058 = vpop.f32.mrb[0].mxu0
    %v4059 = vpop.f32.mrb[0].mxu0
    %v4060 = vadd.f32 %v3805, %v4059
    %v4061 = vpop.f32.mrb[0].mxu0
    %4062 = vmatprep.mubr.bf16.mxu0 0
    %4063 = vmatmul.mubr.bf16.gmra.mrb[0].mxu0 %v3775
    %v4064 = vpop.f32.mrb[0].mxu0
    %v4065 = vadd.f32 %v3805, %v4064
    %v4066 = vpop.f32.mrb[0].mxu0
    %v4067 = vpop.f32.mrb[0].mxu0
    %v4068 = vadd.f32 %v3805, %v4067
    %v4069 = vpop.f32.mrb[0].mxu0
    %4070 = vmatprep.mubr.bf16.mxu0 0
    %4071 = vmatmul.mubr.bf16.gmra.mrb[0].mxu0 %v3776
    %v4072 = vpop.f32.mrb[0].mxu0
    %v4073 = vadd.f32 %v3805, %v4072
    %v4074 = vpop.f32.mrb[0].mxu0
    %v4075 = vpop.f32.mrb[0].mxu0
    %v4076 = vadd.f32 %v3805, %v4075
    %v4077 = vpop.f32.mrb[0].mxu0
    %4078 = vmatprep.mubr.bf16.mxu0 0
    %4079 = vmatmul.mubr.bf16.gmra.mrb[0].mxu0 %v3777
    %v4080 = vpop.f32.mrb[0].mxu0
    %v4081 = vadd.f32 %v3805, %v4080
    %v4082 = vpop.f32.mrb[0].mxu0
    %v4083 = vpop.f32.mrb[0].mxu0
    %v4084 = vadd.f32 %v3805, %v4083
    %v4085 = vpop.f32.mrb[0].mxu0
    %4086 = vmatprep.mubr.bf16.mxu0 0
    %4087 = vmatmul.mubr.bf16.gmra.mrb[0].mxu0 %v3778
    %v4088 = vpop.f32.mrb[0].mxu0
    %v4089 = vadd.f32 %v3805, %v4088
    %v4090 = vpop.f32.mrb[0].mxu0
    %v4091 = vpop.f32.mrb[0].mxu0
    %v4092 = vadd.f32 %v3805, %v4091
    %v4093 = vpop.f32.mrb[0].mxu0
    %4094 = vmatprep.mubr.bf16.mxu0 0
    %4095 = vmatmul.mubr.bf16.gmra.mrb[0].mxu0 %v3779
    %v4096 = vpop.f32.mrb[0].mxu0
    %v4097 = vadd.f32 %v3805, %v4096
    %v4098 = vpop.f32.mrb[0].mxu0
    %v4099 = vpop.f32.mrb[0].mxu0
    %v4100 = vadd.f32 %v3805, %v4099
    %v4101 = vpop.f32.mrb[0].mxu0
    %4102 = vmatprep.mubr.bf16.mxu0 0
    %4103 = vmatmul.mubr.bf16.gmra.mrb[0].mxu0 %v3780
    %v4104 = vpop.f32.mrb[0].mxu0
    %v4105 = vadd.f32 %v3805, %v4104
    %v4106 = vpop.f32.mrb[0].mxu0
    %v4107 = vpop.f32.mrb[0].mxu0
    %v4108 = vadd.f32 %v3805, %v4107
    %v4109 = vpop.f32.mrb[0].mxu0
    %4110 = vmatprep.mubr.bf16.mxu0 0
    %4111 = vmatmul.mubr.bf16.gmra.mrb[0].mxu0 %v3781
    %v4112 = vpop.f32.mrb[0].mxu0
    %v4113 = vadd.f32 %v3805, %v4112
    %v4114 = vpop.f32.mrb[0].mxu0
    %v4115 = vpop.f32.mrb[0].mxu0
    %v4116 = vadd.f32 %v3805, %v4115
    %v4117 = vpop.f32.mrb[0].mxu0
    %4118 = vmatprep.mubr.bf16.mxu0 0
    %4119 = vmatmul.mubr.bf16.gmra.mrb[0].mxu0 %v3782
    %v4120 = vpop.f32.mrb[0].mxu0
    %v4121 = vadd.f32 %v3805, %v4120
    %v4122 = vpop.f32.mrb[0].mxu0
    %v4123 = vpop.f32.mrb[0].mxu0
    %v4124 = vadd.f32 %v3805, %v4123
    %v4125 = vpop.f32.mrb[0].mxu0
    %4126 = vmatprep.mubr.bf16.mxu0 0
    %4127 = vmatmul.mubr.bf16.gmra.mrb[0].mxu0 %v3783
    %v4128 = vpop.f32.mrb[0].mxu0
    %v4129 = vadd.f32 %v3805, %v4128
    %v4130 = vpop.f32.mrb[0].mxu0
    %v4131 = vpop.f32.mrb[0].mxu0
    %v4132 = vadd.f32 %v3805, %v4131
    %v4133 = vpop.f32.mrb[0].mxu0
    %4134 = vmatprep.mubr.bf16.mxu0 0
    %4135 = vmatmul.mubr.bf16.gmra.mrb[0].mxu0 %v3784
    %v4136 = vpop.f32.mrb[0].mxu0
    %v4137 = vadd.f32 %v3805, %v4136
    %v4138 = vpop.f32.mrb[0].mxu0
    %v4139 = vpop.f32.mrb[0].mxu0
    %v4140 = vadd.f32 %v3805, %v4139
    %v4141 = vpop.f32.mrb[0].mxu0
    %4142 = vdwg.mxu0
    %v4143 = vmax.f32 %v3889, 0.0
    %v4144 = vmax.f32 %v3892, 0.0
    %v4145 = vmax.f32 %v3897, 0.0
    %v4146 = vmax.f32 %v3900, 0.0
    %v4147 = vmax.f32 %v3905, 0.0
    %v4148 = vmax.f32 %v3908, 0.0
    %v4149 = vmax.f32 %v3913, 0.0
    %v4150 = vmax.f32 %v3916, 0.0
    %v4151 = vmax.f32 %v3921, 0.0
    %v4152 = vmax.f32 %v3924, 0.0
    %v4153 = vmax.f32 %v3929, 0.0
    %v4154 = vmax.f32 %v3932, 0.0
    %v4155 = vmax.f32 %v3937, 0.0
    %v4156 = vmax.f32 %v3940, 0.0
    %v4157 = vmax.f32 %v3945, 0.0
    %v4158 = vmax.f32 %v3948, 0.0
    %v4159 = vmax.f32 %v3953, 0.0
    %v4160 = vmax.f32 %v3956, 0.0
    %v4161 = vmax.f32 %v3961, 0.0
    %v4162 = vmax.f32 %v3964, 0.0
    %v4163 = vmax.f32 %v3969, 0.0
    %v4164 = vmax.f32 %v3972, 0.0
    %v4165 = vmax.f32 %v3977, 0.0
    %v4166 = vmax.f32 %v3980, 0.0
    %v4167 = vmax.f32 %v3985, 0.0
    %v4168 = vmax.f32 %v3988, 0.0
    %v4169 = vmax.f32 %v3993, 0.0
    %v4170 = vmax.f32 %v3996, 0.0
    %v4171 = vmax.f32 %v4001, 0.0
    %v4172 = vmax.f32 %v4004, 0.0
    %v4173 = vmax.f32 %v4009, 0.0
    %v4174 = vmax.f32 %v4012, 0.0
    %v4175 = vmax.f32 %v4017, 0.0
    %v4176 = vmax.f32 %v4020, 0.0
    %v4177 = vmax.f32 %v4025, 0.0
    %v4178 = vmax.f32 %v4028, 0.0
    %v4179 = vmax.f32 %v4033, 0.0
    %v4180 = vmax.f32 %v4036, 0.0
    %v4181 = vmax.f32 %v4041, 0.0
    %v4182 = vmax.f32 %v4044, 0.0
    %v4183 = vmax.f32 %v4049, 0.0
    %v4184 = vmax.f32 %v4052, 0.0
    %v4185 = vmax.f32 %v4057, 0.0
    %v4186 = vmax.f32 %v4060, 0.0
    %v4187 = vmax.f32 %v4065, 0.0
    %v4188 = vmax.f32 %v4068, 0.0
    %v4189 = vmax.f32 %v4073, 0.0
    %v4190 = vmax.f32 %v4076, 0.0
    %v4191 = vmax.f32 %v4081, 0.0
    %v4192 = vmax.f32 %v4084, 0.0
    %v4193 = vmax.f32 %v4089, 0.0
    %v4194 = vmax.f32 %v4092, 0.0
    %v4195 = vmax.f32 %v4097, 0.0
    %v4196 = vmax.f32 %v4100, 0.0
    %v4197 = vmax.f32 %v4105, 0.0
    %v4198 = vmax.f32 %v4108, 0.0
    %v4199 = vmax.f32 %v4113, 0.0
    %v4200 = vmax.f32 %v4116, 0.0
    %v4201 = vmax.f32 %v4121, 0.0
    %v4202 = vmax.f32 %v4124, 0.0
    %v4203 = vmax.f32 %v4129, 0.0
    %v4204 = vmax.f32 %v4132, 0.0
    %v4205 = vmax.f32 %v4137, 0.0
    %v4206 = vmax.f32 %v4140, 0.0
    %4207 = vst [vmem:[#allocation2] sm:$0xff] %v4143
    %4208 = vst [vmem:[#allocation2 + $0x8] sm:$0xff] %v4144
    %4209 = vst [vmem:[#allocation2 + $0x10] sm:$0xff] %v4145
    %4210 = vst [vmem:[#allocation2 + $0x18] sm:$0xff] %v4146
    %4211 = vst [vmem:[#allocation2 + $0x20] sm:$0xff] %v4147
    %4212 = vst [vmem:[#allocation2 + $0x28] sm:$0xff] %v4148
    %4213 = vst [vmem:[#allocation2 + $0x30] sm:$0xff] %v4149
    %4214 = vst [vmem:[#allocation2 + $0x38] sm:$0xff] %v4150
    %4215 = vst [vmem:[#allocation2 + $0x40] sm:$0xff] %v4151
    %4216 = vst [vmem:[#allocation2 + $0x48] sm:$0xff] %v4152
    %4217 = vst [vmem:[#allocation2 + $0x50] sm:$0xff] %v4153
    %4218 = vst [vmem:[#allocation2 + $0x58] sm:$0xff] %v4154
    %4219 = vst [vmem:[#allocation2 + $0x60] sm:$0xff] %v4155
    %4220 = vst [vmem:[#allocation2 + $0x68] sm:$0xff] %v4156
    %4221 = vst [vmem:[#allocation2 + $0x70] sm:$0xff] %v4157
    %4222 = vst [vmem:[#allocation2 + $0x78] sm:$0xff] %v4158
    %4223 = vst [vmem:[#allocation2 + $0x80] sm:$0xff] %v4159
    %4224 = vst [vmem:[#allocation2 + $0x88] sm:$0xff] %v4160
    %4225 = vst [vmem:[#allocation2 + $0x90] sm:$0xff] %v4161
    %4226 = vst [vmem:[#allocation2 + $0x98] sm:$0xff] %v4162
    %4227 = vst [vmem:[#allocation2 + $0xa0] sm:$0xff] %v4163
    %4228 = vst [vmem:[#allocation2 + $0xa8] sm:$0xff] %v4164
    %4229 = vst [vmem:[#allocation2 + $0xb0] sm:$0xff] %v4165
    %4230 = vst [vmem:[#allocation2 + $0xb8] sm:$0xff] %v4166
    %4231 = vst [vmem:[#allocation2 + $0xc0] sm:$0xff] %v4167
    %4232 = vst [vmem:[#allocation2 + $0xc8] sm:$0xff] %v4168
    %4233 = vst [vmem:[#allocation2 + $0xd0] sm:$0xff] %v4169
    %4234 = vst [vmem:[#allocation2 + $0xd8] sm:$0xff] %v4170
    %4235 = vst [vmem:[#allocation2 + $0xe0] sm:$0xff] %v4171
    %4236 = vst [vmem:[#allocation2 + $0xe8] sm:$0xff] %v4172
    %4237 = vst [vmem:[#allocation2 + $0xf0] sm:$0xff] %v4173
    %4238 = vst [vmem:[#allocation2 + $0xf8] sm:$0xff] %v4174
    %4239 = vst [vmem:[#allocation2 + $0x100] sm:$0xff] %v4175
    %4240 = vst [vmem:[#allocation2 + $0x108] sm:$0xff] %v4176
    %4241 = vst [vmem:[#allocation2 + $0x110] sm:$0xff] %v4177
    %4242 = vst [vmem:[#allocation2 + $0x118] sm:$0xff] %v4178
    %4243 = vst [vmem:[#allocation2 + $0x120] sm:$0xff] %v4179
    %4244 = vst [vmem:[#allocation2 + $0x128] sm:$0xff] %v4180
    %4245 = vst [vmem:[#allocation2 + $0x130] sm:$0xff] %v4181
    %4246 = vst [vmem:[#allocation2 + $0x138] sm:$0xff] %v4182
    %4247 = vst [vmem:[#allocation2 + $0x140] sm:$0xff] %v4183
    %4248 = vst [vmem:[#allocation2 + $0x148] sm:$0xff] %v4184
    %4249 = vst [vmem:[#allocation2 + $0x150] sm:$0xff] %v4185
    %4250 = vst [vmem:[#allocation2 + $0x158] sm:$0xff] %v4186
    %4251 = vst [vmem:[#allocation2 + $0x160] sm:$0xff] %v4187
    %4252 = vst [vmem:[#allocation2 + $0x168] sm:$0xff] %v4188
    %4253 = vst [vmem:[#allocation2 + $0x170] sm:$0xff] %v4189
    %4254 = vst [vmem:[#allocation2 + $0x178] sm:$0xff] %v4190
    %4255 = vst [vmem:[#allocation2 + $0x180] sm:$0xff] %v4191
    %4256 = vst [vmem:[#allocation2 + $0x188] sm:$0xff] %v4192
    %4257 = vst [vmem:[#allocation2 + $0x190] sm:$0xff] %v4193
    %4258 = vst [vmem:[#allocation2 + $0x198] sm:$0xff] %v4194
    %4259 = vst [vmem:[#allocation2 + $0x1a0] sm:$0xff] %v4195
    %4260 = vst [vmem:[#allocation2 + $0x1a8] sm:$0xff] %v4196
    %4261 = vst [vmem:[#allocation2 + $0x1b0] sm:$0xff] %v4197
    %4262 = vst [vmem:[#allocation2 + $0x1b8] sm:$0xff] %v4198
    %4263 = vst [vmem:[#allocation2 + $0x1c0] sm:$0xff] %v4199
    %4264 = vst [vmem:[#allocation2 + $0x1c8] sm:$0xff] %v4200
    %4265 = vst [vmem:[#allocation2 + $0x1d0] sm:$0xff] %v4201
    %4266 = vst [vmem:[#allocation2 + $0x1d8] sm:$0xff] %v4202
    %4267 = vst [vmem:[#allocation2 + $0x1e0] sm:$0xff] %v4203
    %4268 = vst [vmem:[#allocation2 + $0x1e8] sm:$0xff] %v4204
    %4269 = vst [vmem:[#allocation2 + $0x1f0] sm:$0xff] %v4205
    %4270 = vst [vmem:[#allocation2 + $0x1f8] sm:$0xff] %v4206
    %v4271 = vld [vmem:[#allocation2] ss:$4 sm:$0xff]
    %s4272 = scalar_lea.vmem [#allocation2], 32
    %v4273 = vld [vmem:[%s4272] ss:$4 sm:$0xff]
    %s4274 = scalar_lea.vmem [#allocation2], 64
    %v4275 = vld [vmem:[%s4274] ss:$4 sm:$0xff]
    %s4276 = scalar_lea.vmem [#allocation2], 96
    %v4277 = vld [vmem:[%s4276] ss:$4 sm:$0xff]
    %s4278 = scalar_lea.vmem [#allocation2], 128
    %v4279 = vld [vmem:[%s4278] ss:$4 sm:$0xff]
    %s4280 = scalar_lea.vmem [#allocation2], 160
    %v4281 = vld [vmem:[%s4280] ss:$4 sm:$0xff]
    %s4282 = scalar_lea.vmem [#allocation2], 192
    %v4283 = vld [vmem:[%s4282] ss:$4 sm:$0xff]
    %s4284 = scalar_lea.vmem [#allocation2], 224
    %v4285 = vld [vmem:[%s4284] ss:$4 sm:$0xff]
    %s4286 = scalar_lea.vmem [#allocation2], 256
    %v4287 = vld [vmem:[%s4286] ss:$4 sm:$0xff]
    %s4288 = scalar_lea.vmem [#allocation2], 288
    %v4289 = vld [vmem:[%s4288] ss:$4 sm:$0xff]
    %s4290 = scalar_lea.vmem [#allocation2], 320
    %v4291 = vld [vmem:[%s4290] ss:$4 sm:$0xff]
    %s4292 = scalar_lea.vmem [#allocation2], 352
    %v4293 = vld [vmem:[%s4292] ss:$4 sm:$0xff]
    %s4294 = scalar_lea.vmem [#allocation2], 384
    %v4295 = vld [vmem:[%s4294] ss:$4 sm:$0xff]
    %s4296 = scalar_lea.vmem [#allocation2], 416
    %v4297 = vld [vmem:[%s4296] ss:$4 sm:$0xff]
    %s4298 = scalar_lea.vmem [#allocation2], 448
    %v4299 = vld [vmem:[%s4298] ss:$4 sm:$0xff]
    %s4300 = scalar_lea.vmem [#allocation2], 480
    %v4301 = vld [vmem:[%s4300] ss:$4 sm:$0xff]
    %v4302 = vld [vmem:[%s3006] ss:$4 sm:$0xff]
    %v4303 = vld [vmem:[%s3008] ss:$4 sm:$0xff]
    %v4304 = vld [vmem:[%s3010] ss:$4 sm:$0xff]
    %v4305 = vld [vmem:[%s3012] ss:$4 sm:$0xff]
    %v4306 = vld [vmem:[%s3014] ss:$4 sm:$0xff]
    %v4307 = vld [vmem:[%s3016] ss:$4 sm:$0xff]
    %v4308 = vld [vmem:[%s3018] ss:$4 sm:$0xff]
    %v4309 = vld [vmem:[%s3020] ss:$4 sm:$0xff]
    %v4310 = vld [vmem:[%s3022] ss:$4 sm:$0xff]
    %v4311 = vld [vmem:[%s3024] ss:$4 sm:$0xff]
    %v4312 = vld [vmem:[%s3026] ss:$4 sm:$0xff]
    %v4313 = vld [vmem:[%s3028] ss:$4 sm:$0xff]
    %v4314 = vld [vmem:[%s3030] ss:$4 sm:$0xff]
    %v4315 = vld [vmem:[%s3032] ss:$4 sm:$0xff]
    %v4316 = vld [vmem:[%s3034] ss:$4 sm:$0xff]
    %v4317 = vld [vmem:[%s3036] ss:$4 sm:$0xff]
    %v4318 = vadd.f32 %v4271, %v4302
    %v4319 = vadd.f32 %v4273, %v4303
    %v4320 = vadd.f32 %v4275, %v4304
    %v4321 = vadd.f32 %v4277, %v4305
    %v4322 = vadd.f32 %v4279, %v4306
    %v4323 = vadd.f32 %v4281, %v4307
    %v4324 = vadd.f32 %v4283, %v4308
    %v4325 = vadd.f32 %v4285, %v4309
    %v4326 = vadd.f32 %v4287, %v4310
    %v4327 = vadd.f32 %v4289, %v4311
    %v4328 = vadd.f32 %v4291, %v4312
    %v4329 = vadd.f32 %v4293, %v4313
    %v4330 = vadd.f32 %v4295, %v4314
    %v4331 = vadd.f32 %v4297, %v4315
    %v4332 = vadd.f32 %v4299, %v4316
    %v4333 = vadd.f32 %v4301, %v4317
    %v4334 = vld [vmem:[%s3198] ss:$4 sm:$0xff]
    %v4335 = vld [vmem:[%s3200] ss:$4 sm:$0xff]
    %v4336 = vld [vmem:[%s3202] ss:$4 sm:$0xff]
    %v4337 = vld [vmem:[%s3204] ss:$4 sm:$0xff]
    %v4338 = vld [vmem:[%s3206] ss:$4 sm:$0xff]
    %v4339 = vld [vmem:[%s3208] ss:$4 sm:$0xff]
    %v4340 = vld [vmem:[%s3210] ss:$4 sm:$0xff]
    %v4341 = vld [vmem:[%s3212] ss:$4 sm:$0xff]
    %v4342 = vld [vmem:[%s3214] ss:$4 sm:$0xff]
    %v4343 = vld [vmem:[%s3216] ss:$4 sm:$0xff]
    %v4344 = vld [vmem:[%s3218] ss:$4 sm:$0xff]
    %v4345 = vld [vmem:[%s3220] ss:$4 sm:$0xff]
    %v4346 = vld [vmem:[%s3222] ss:$4 sm:$0xff]
    %v4347 = vld [vmem:[%s3224] ss:$4 sm:$0xff]
    %v4348 = vld [vmem:[%s3226] ss:$4 sm:$0xff]
    %v4349 = vld [vmem:[%s3228] ss:$4 sm:$0xff]
    %v4350 = vadd.f32 %v4318, %v4334
    %v4351 = vadd.f32 %v4319, %v4335
    %v4352 = vadd.f32 %v4320, %v4336
    %v4353 = vadd.f32 %v4321, %v4337
    %v4354 = vadd.f32 %v4322, %v4338
    %v4355 = vadd.f32 %v4323, %v4339
    %v4356 = vadd.f32 %v4324, %v4340
    %v4357 = vadd.f32 %v4325, %v4341
    %v4358 = vadd.f32 %v4326, %v4342
    %v4359 = vadd.f32 %v4327, %v4343
    %v4360 = vadd.f32 %v4328, %v4344
    %v4361 = vadd.f32 %v4329, %v4345
    %v4362 = vadd.f32 %v4330, %v4346
    %v4363 = vadd.f32 %v4331, %v4347
    %v4364 = vadd.f32 %v4332, %v4348
    %v4365 = vadd.f32 %v4333, %v4349
    %v4366 = vld [vmem:[%s3390] ss:$4 sm:$0xff]
    %v4367 = vld [vmem:[%s3392] ss:$4 sm:$0xff]
    %v4368 = vld [vmem:[%s3394] ss:$4 sm:$0xff]
    %v4369 = vld [vmem:[%s3396] ss:$4 sm:$0xff]
    %v4370 = vld [vmem:[%s3398] ss:$4 sm:$0xff]
    %v4371 = vld [vmem:[%s3400] ss:$4 sm:$0xff]
    %v4372 = vld [vmem:[%s3402] ss:$4 sm:$0xff]
    %v4373 = vld [vmem:[%s3404] ss:$4 sm:$0xff]
    %v4374 = vld [vmem:[%s3406] ss:$4 sm:$0xff]
    %v4375 = vld [vmem:[%s3408] ss:$4 sm:$0xff]
    %v4376 = vld [vmem:[%s3410] ss:$4 sm:$0xff]
    %v4377 = vld [vmem:[%s3412] ss:$4 sm:$0xff]
    %v4378 = vld [vmem:[%s3414] ss:$4 sm:$0xff]
    %v4379 = vld [vmem:[%s3416] ss:$4 sm:$0xff]
    %v4380 = vld [vmem:[%s3418] ss:$4 sm:$0xff]
    %v4381 = vld [vmem:[%s3420] ss:$4 sm:$0xff]
    %v4382 = vadd.f32 %v4350, %v4366
    %v4383 = vadd.f32 %v4351, %v4367
    %v4384 = vadd.f32 %v4352, %v4368
    %v4385 = vadd.f32 %v4353, %v4369
    %v4386 = vadd.f32 %v4354, %v4370
    %v4387 = vadd.f32 %v4355, %v4371
    %v4388 = vadd.f32 %v4356, %v4372
    %v4389 = vadd.f32 %v4357, %v4373
    %v4390 = vadd.f32 %v4358, %v4374
    %v4391 = vadd.f32 %v4359, %v4375
    %v4392 = vadd.f32 %v4360, %v4376
    %v4393 = vadd.f32 %v4361, %v4377
    %v4394 = vadd.f32 %v4362, %v4378
    %v4395 = vadd.f32 %v4363, %v4379
    %v4396 = vadd.f32 %v4364, %v4380
    %v4397 = vadd.f32 %v4365, %v4381
    %v4398 = vmul.f32 %v4382, 0.25
    %v4399 = vmul.f32 %v4383, 0.25
    %v4400 = vmul.f32 %v4384, 0.25
    %v4401 = vmul.f32 %v4385, 0.25
    %v4402 = vmul.f32 %v4386, 0.25
    %v4403 = vmul.f32 %v4387, 0.25
    %v4404 = vmul.f32 %v4388, 0.25
    %v4405 = vmul.f32 %v4389, 0.25
    %v4406 = vmul.f32 %v4390, 0.25
    %v4407 = vmul.f32 %v4391, 0.25
    %v4408 = vmul.f32 %v4392, 0.25
    %v4409 = vmul.f32 %v4393, 0.25
    %v4410 = vmul.f32 %v4394, 0.25
    %v4411 = vmul.f32 %v4395, 0.25
    %v4412 = vmul.f32 %v4396, 0.25
    %v4413 = vmul.f32 %v4397, 0.25
    %v4414 = vsub.f32 %v4398, %v4406
    %v4415 = vsub.f32 %v4399, %v4407
    %v4416 = vsub.f32 %v4400, %v4408
    %v4417 = vsub.f32 %v4401, %v4409
    %v4418 = vsub.f32 %v4402, %v4410
    %v4419 = vsub.f32 %v4403, %v4411
    %v4420 = vsub.f32 %v4404, %v4412
    %v4421 = vsub.f32 %v4405, %v4413
    %v4422 = vmul.f32 %v4414, %v4414
    %v4423 = vmul.f32 %v4415, %v4415
    %v4424 = vmul.f32 %v4416, %v4416
    %v4425 = vmul.f32 %v4417, %v4417
    %v4426 = vmul.f32 %v4418, %v4418
    %v4427 = vmul.f32 %v4419, %v4419
    %v4428 = vmul.f32 %v4420, %v4420
    %v4429 = vmul.f32 %v4421, %v4421
    %v4430 = vadd.f32 %v4422, %v4423
    %v4431 = vadd.f32 %v4430, %v4424
    %v4432 = vadd.f32 %v4431, %v4425
    %v4433 = vadd.f32 %v4432, %v4426
    %v4434 = vadd.f32 %v4433, %v4427
    %v4435 = vadd.f32 %v4434, %v4428
    %v4436 = vadd.f32 %v4435, %v4429
    %4437 = vadd.xlane.f32.xlu0 %v4436
    %v4438 = vpop.xlane.xlu0 %4437
    %v4439 = vrot.slane %v4438, 4
    %v4440 = vadd.f32 %v4438, %v4439
    %v4441 = vrot.slane %v4440, 2
    %v4442 = vadd.f32 %v4440, %v4441
    %v4443 = vrot.slane %v4442, 1
    %v4444 = vadd.f32 %v4442, %v4443
    %s4445 = vtos %v4444
    %s4446 = smul.f32 %s4445, 0.00024414063
    %s4447 = scalar_lea.smem [#allocation3], 1
    %4448 = sst [smem:[%s4447]] %s4446
    %v4449 = vpack.c.bf16 %v4399, %v4398
    %v4450 = vpack.c.bf16 %v4401, %v4400
    %v4451 = vpack.c.bf16 %v4403, %v4402
    %v4452 = vpack.c.bf16 %v4405, %v4404
    %v4453 = vpack.c.bf16 %v4407, %v4406
    %v4454 = vpack.c.bf16 %v4409, %v4408
    %v4455 = vpack.c.bf16 %v4411, %v4410
    %v4456 = vpack.c.bf16 %v4413, %v4412
    %v4457 = vld [vmem:[%s1 + $0x48] sm:$0xf]
    %v4458 = vld [vmem:[%s1 + $0x4c] sm:$0xf]
    %v4459 = vld [vmem:[%s1 + $0x50] sm:$0xf]
    %v4460 = vld [vmem:[%s1 + $0x54] sm:$0xf]
    %v4461 = vld [vmem:[%s1 + $0x58] sm:$0xf]
    %v4462 = vld [vmem:[%s1 + $0x5c] sm:$0xf]
    %v4463 = vld [vmem:[%s1 + $0x60] sm:$0xf]
    %v4464 = vld [vmem:[%s1 + $0x64] sm:$0xf]
    %v4465 = vld [vmem:[%s1 + $0x68] sm:$0xf]
    %v4466 = vld [vmem:[%s1 + $0x6c] sm:$0xf]
    %v4467 = vld [vmem:[%s1 + $0x70] sm:$0xf]
    %v4468 = vld [vmem:[%s1 + $0x74] sm:$0xf]
    %v4469 = vld [vmem:[%s1 + $0x78] sm:$0xf]
    %v4470 = vld [vmem:[%s1 + $0x7c] sm:$0xf]
    %v4471 = vld [vmem:[%s1 + $0x80] sm:$0xf]
    %v4472 = vld [vmem:[%s1 + $0x84] sm:$0xf]
    %v4473 = vld [vmem:[%s2 + $0x2] sm:$0x1]
    %v4474 = vlaneseq
    %v4475 = vshrl.u32 %v4474, 7
    %v4476 = vsub.s32 0, %v4475
    %v4477 = vrot.slane %v4473, %v4476
    %v4494 = vunpack.c.l.b16 %v4457
    %v4495 = vunpack.c.l.b16 %v4458
    %v4496 = vunpack.c.l.b16 %v4459
    %v4497 = vunpack.c.l.b16 %v4460
    %v4498 = vunpack.c.l.b16 %v4461
    %v4499 = vunpack.c.l.b16 %v4462
    %v4500 = vunpack.c.l.b16 %v4463
    %v4501 = vunpack.c.l.b16 %v4464
    %v4502 = vunpack.c.l.b16 %v4465
    %v4503 = vunpack.c.l.b16 %v4466
    %v4504 = vunpack.c.l.b16 %v4467
    %v4505 = vunpack.c.l.b16 %v4468
    %v4506 = vunpack.c.l.b16 %v4469
    %v4507 = vunpack.c.l.b16 %v4470
    %v4508 = vunpack.c.l.b16 %v4471
    %v4509 = vunpack.c.l.b16 %v4472
    %v4510 = vpack.c.b16 %v4495, %v4494
    %v4511 = vpack.c.b16 %v4497, %v4496
    %v4512 = vpack.c.b16 %v4499, %v4498
    %v4513 = vpack.c.b16 %v4501, %v4500
    %v4514 = vpack.c.b16 %v4503, %v4502
    %v4515 = vpack.c.b16 %v4505, %v4504
    %v4516 = vpack.c.b16 %v4507, %v4506
    %v4517 = vpack.c.b16 %v4509, %v4508
    %4526 = vmatprep.subr.bf16.mxu0 0
    %4527 = vmatpush1.bf16.msra.mxu0 %v4510
    %4528 = vmatprep.subr.bf16.mxu0 0
    %4529 = vmatpush1.bf16.msra.mxu0 %v4511
    %4530 = vmatprep.subr.bf16.mxu0 0
    %4531 = vmatpush1.bf16.msra.mxu0 %v4512
    %4532 = vmatprep.subr.bf16.mxu0 0
    %4533 = vmatpush1.bf16.msra.mxu0 %v4513
    %4534 = vmatprep.subr.bf16.mxu0 0
    %4535 = vmatpush1.bf16.msra.mxu0 %v4514
    %4536 = vmatprep.subr.bf16.mxu0 0
    %4537 = vmatpush1.bf16.msra.mxu0 %v4515
    %4538 = vmatprep.subr.bf16.mxu0 0
    %4539 = vmatpush1.bf16.msra.mxu0 %v4516
    %4540 = vmatprep.subr.bf16.mxu0 0
    %4541 = vmatpush1.bf16.msra.mxu0 %v4517
    %4542 = vmatprep.subr.bf16.mxu0 0
    %4543 = vmatpush1.bf16.msra.mxu0 0
    %4544 = vmatprep.subr.bf16.mxu0 0
    %4545 = vmatpush1.bf16.msra.mxu0 0
    %4546 = vmatprep.subr.bf16.mxu0 0
    %4547 = vmatpush1.bf16.msra.mxu0 0
    %4548 = vmatprep.subr.bf16.mxu0 0
    %4549 = vmatpush1.bf16.msra.mxu0 0
    %4550 = vmatprep.subr.bf16.mxu0 0
    %4551 = vmatpush1.bf16.msra.mxu0 0
    %4552 = vmatprep.subr.bf16.mxu0 0
    %4553 = vmatpush1.bf16.msra.mxu0 0
    %4554 = vmatprep.subr.bf16.mxu0 0
    %4555 = vmatpush1.bf16.msra.mxu0 0
    %4556 = vmatprep.subr.bf16.mxu0 0
    %4557 = vmatpush1.bf16.msra.mxu0 0
    %4558 = vmatprep.mubr.bf16.mxu0 0
    %4559 = vmatmul.mubr.bf16.gmra.mrb[0].mxu0 %v4449
    %v4560 = vpop.f32.mrb[0].mxu0
    %v4561 = vadd.f32 %v4477, %v4560
    %v4562 = vpop.f32.mrb[0].mxu0
    %v4563 = vpop.f32.mrb[0].mxu0
    %v4564 = vadd.f32 %v4477, %v4563
    %v4565 = vpop.f32.mrb[0].mxu0
    %4566 = vmatprep.mubr.bf16.mxu0 0
    %4567 = vmatmul.mubr.bf16.gmra.mrb[0].mxu0 %v4450
    %v4568 = vpop.f32.mrb[0].mxu0
    %v4569 = vadd.f32 %v4477, %v4568
    %v4570 = vpop.f32.mrb[0].mxu0
    %v4571 = vpop.f32.mrb[0].mxu0
    %v4572 = vadd.f32 %v4477, %v4571
    %v4573 = vpop.f32.mrb[0].mxu0
    %4574 = vmatprep.mubr.bf16.mxu0 0
    %4575 = vmatmul.mubr.bf16.gmra.mrb[0].mxu0 %v4451
    %v4576 = vpop.f32.mrb[0].mxu0
    %v4577 = vadd.f32 %v4477, %v4576
    %v4578 = vpop.f32.mrb[0].mxu0
    %v4579 = vpop.f32.mrb[0].mxu0
    %v4580 = vadd.f32 %v4477, %v4579
    %v4581 = vpop.f32.mrb[0].mxu0
    %4582 = vmatprep.mubr.bf16.mxu0 0
    %4583 = vmatmul.mubr.bf16.gmra.mrb[0].mxu0 %v4452
    %v4584 = vpop.f32.mrb[0].mxu0
    %v4585 = vadd.f32 %v4477, %v4584
    %v4586 = vpop.f32.mrb[0].mxu0
    %v4587 = vpop.f32.mrb[0].mxu0
    %v4588 = vadd.f32 %v4477, %v4587
    %v4589 = vpop.f32.mrb[0].mxu0
    %4590 = vmatprep.mubr.bf16.mxu0 0
    %4591 = vmatmul.mubr.bf16.gmra.mrb[0].mxu0 %v4453
    %v4592 = vpop.f32.mrb[0].mxu0
    %v4593 = vadd.f32 %v4477, %v4592
    %v4594 = vpop.f32.mrb[0].mxu0
    %v4595 = vpop.f32.mrb[0].mxu0
    %v4596 = vadd.f32 %v4477, %v4595
    %v4597 = vpop.f32.mrb[0].mxu0
    %4598 = vmatprep.mubr.bf16.mxu0 0
    %4599 = vmatmul.mubr.bf16.gmra.mrb[0].mxu0 %v4454
    %v4600 = vpop.f32.mrb[0].mxu0
    %v4601 = vadd.f32 %v4477, %v4600
    %v4602 = vpop.f32.mrb[0].mxu0
    %v4603 = vpop.f32.mrb[0].mxu0
    %v4604 = vadd.f32 %v4477, %v4603
    %v4605 = vpop.f32.mrb[0].mxu0
    %4606 = vmatprep.mubr.bf16.mxu0 0
    %4607 = vmatmul.mubr.bf16.gmra.mrb[0].mxu0 %v4455
    %v4608 = vpop.f32.mrb[0].mxu0
    %v4609 = vadd.f32 %v4477, %v4608
    %v4610 = vpop.f32.mrb[0].mxu0
    %v4611 = vpop.f32.mrb[0].mxu0
    %v4612 = vadd.f32 %v4477, %v4611
    %v4613 = vpop.f32.mrb[0].mxu0
    %4614 = vmatprep.mubr.bf16.mxu0 0
    %4615 = vmatmul.mubr.bf16.gmra.mrb[0].mxu0 %v4456
    %v4616 = vpop.f32.mrb[0].mxu0
    %v4617 = vadd.f32 %v4477, %v4616
    %v4618 = vpop.f32.mrb[0].mxu0
    %v4619 = vpop.f32.mrb[0].mxu0
    %v4620 = vadd.f32 %v4477, %v4619
    %v4621 = vpop.f32.mrb[0].mxu0
    %4622 = vdwg.mxu0
    %v4623 = vmax.f32 %v4561, 0.0
    %v4624 = vmax.f32 %v4564, 0.0
    %v4625 = vmax.f32 %v4569, 0.0
    %v4626 = vmax.f32 %v4572, 0.0
    %v4627 = vmax.f32 %v4577, 0.0
    %v4628 = vmax.f32 %v4580, 0.0
    %v4629 = vmax.f32 %v4585, 0.0
    %v4630 = vmax.f32 %v4588, 0.0
    %v4631 = vmax.f32 %v4593, 0.0
    %v4632 = vmax.f32 %v4596, 0.0
    %v4633 = vmax.f32 %v4601, 0.0
    %v4634 = vmax.f32 %v4604, 0.0
    %v4635 = vmax.f32 %v4609, 0.0
    %v4636 = vmax.f32 %v4612, 0.0
    %v4637 = vmax.f32 %v4617, 0.0
    %v4638 = vmax.f32 %v4620, 0.0
    %4639 = vst [vmem:[#allocation2] sm:$0xff] %v4623
    %4640 = vst [vmem:[#allocation2 + $0x8] sm:$0xff] %v4624
    %4641 = vst [vmem:[#allocation2 + $0x10] sm:$0xff] %v4625
    %4642 = vst [vmem:[#allocation2 + $0x18] sm:$0xff] %v4626
    %4643 = vst [vmem:[#allocation2 + $0x20] sm:$0xff] %v4627
    %4644 = vst [vmem:[#allocation2 + $0x28] sm:$0xff] %v4628
    %4645 = vst [vmem:[#allocation2 + $0x30] sm:$0xff] %v4629
    %4646 = vst [vmem:[#allocation2 + $0x38] sm:$0xff] %v4630
    %4647 = vst [vmem:[#allocation2 + $0x40] sm:$0xff] %v4631
    %4648 = vst [vmem:[#allocation2 + $0x48] sm:$0xff] %v4632
    %4649 = vst [vmem:[#allocation2 + $0x50] sm:$0xff] %v4633
    %4650 = vst [vmem:[#allocation2 + $0x58] sm:$0xff] %v4634
    %4651 = vst [vmem:[#allocation2 + $0x60] sm:$0xff] %v4635
    %4652 = vst [vmem:[#allocation2 + $0x68] sm:$0xff] %v4636
    %4653 = vst [vmem:[#allocation2 + $0x70] sm:$0xff] %v4637
    %4654 = vst [vmem:[#allocation2 + $0x78] sm:$0xff] %v4638
    %v4655 = vld [vmem:[#allocation2] ss:$4 sm:$0xff]
    %v4656 = vld [vmem:[%s4272] ss:$4 sm:$0xff]
    %v4657 = vld [vmem:[%s4274] ss:$4 sm:$0xff]
    %v4658 = vld [vmem:[%s4276] ss:$4 sm:$0xff]
    %v4659 = vld [vmem:[%s3006] ss:$4 sm:$0xff]
    %v4660 = vld [vmem:[%s3008] ss:$4 sm:$0xff]
    %v4661 = vld [vmem:[%s3010] ss:$4 sm:$0xff]
    %v4662 = vld [vmem:[%s3012] ss:$4 sm:$0xff]
    %v4663 = vadd.f32 %v4655, %v4659
    %v4664 = vadd.f32 %v4656, %v4660
    %v4665 = vadd.f32 %v4657, %v4661
    %v4666 = vadd.f32 %v4658, %v4662
    %v4667 = vld [vmem:[%s3198] ss:$4 sm:$0xff]
    %v4668 = vld [vmem:[%s3200] ss:$4 sm:$0xff]
    %v4669 = vld [vmem:[%s3202] ss:$4 sm:$0xff]
    %v4670 = vld [vmem:[%s3204] ss:$4 sm:$0xff]
    %v4671 = vadd.f32 %v4663, %v4667
    %v4672 = vadd.f32 %v4664, %v4668
    %v4673 = vadd.f32 %v4665, %v4669
    %v4674 = vadd.f32 %v4666, %v4670
    %v4675 = vld [vmem:[%s3390] ss:$4 sm:$0xff]
    %v4676 = vld [vmem:[%s3392] ss:$4 sm:$0xff]
    %v4677 = vld [vmem:[%s3394] ss:$4 sm:$0xff]
    %v4678 = vld [vmem:[%s3396] ss:$4 sm:$0xff]
    %v4679 = vadd.f32 %v4671, %v4675
    %v4680 = vadd.f32 %v4672, %v4676
    %v4681 = vadd.f32 %v4673, %v4677
    %v4682 = vadd.f32 %v4674, %v4678
    %v4683 = vmul.f32 %v4679, 0.25
    %v4684 = vmul.f32 %v4680, 0.25
    %v4685 = vmul.f32 %v4681, 0.25
    %v4686 = vmul.f32 %v4682, 0.25
    %v4687 = vsub.f32 %v4683, %v4685
    %v4688 = vsub.f32 %v4684, %v4686
    %v4689 = vmul.f32 %v4687, %v4687
    %v4690 = vmul.f32 %v4688, %v4688
    %v4691 = vadd.f32 %v4689, %v4690
    %4692 = vadd.xlane.f32.xlu0 %v4691
    %v4693 = vpop.xlane.xlu0 %4692
    %v4694 = vrot.slane %v4693, 4
    %v4695 = vadd.f32 %v4693, %v4694
    %v4696 = vrot.slane %v4695, 2
    %v4697 = vadd.f32 %v4695, %v4696
    %v4698 = vrot.slane %v4697, 1
    %v4699 = vadd.f32 %v4697, %v4698
    %s4700 = vtos %v4699
    %s4701 = smul.f32 %s4700, 0.0009765625
    %s4702 = scalar_lea.smem [#allocation3], 2
    %4703 = sst [smem:[%s4702]] %s4701
    %v4704 = vpack.c.bf16 %v4684, %v4683
    %v4705 = vpack.c.bf16 %v4686, %v4685
    %v4706 = vld [vmem:[%s1 + $0x88] sm:$0xf]
    %v4707 = vld [vmem:[%s1 + $0x8c] sm:$0xf]
    %v4708 = vld [vmem:[%s1 + $0x90] sm:$0xf]
    %v4709 = vld [vmem:[%s1 + $0x94] sm:$0xf]
    %v4710 = vld [vmem:[%s1 + $0x98] sm:$0xf]
    %v4711 = vld [vmem:[%s1 + $0x9c] sm:$0xf]
    %v4712 = vld [vmem:[%s1 + $0xa0] sm:$0xf]
    %v4713 = vld [vmem:[%s1 + $0xa4] sm:$0xf]
    %v4714 = vld [vmem:[%s1 + $0xa8] sm:$0xf]
    %v4715 = vld [vmem:[%s1 + $0xac] sm:$0xf]
    %v4716 = vld [vmem:[%s1 + $0xb0] sm:$0xf]
    %v4717 = vld [vmem:[%s1 + $0xb4] sm:$0xf]
    %v4718 = vld [vmem:[%s1 + $0xb8] sm:$0xf]
    %v4719 = vld [vmem:[%s1 + $0xbc] sm:$0xf]
    %v4720 = vld [vmem:[%s1 + $0xc0] sm:$0xf]
    %v4721 = vld [vmem:[%s1 + $0xc4] sm:$0xf]
    %v4722 = vld [vmem:[%s2 + $0x3] sm:$0x1]
    %v4723 = vlaneseq
    %v4724 = vshrl.u32 %v4723, 7
    %v4725 = vsub.s32 0, %v4724
    %v4726 = vrot.slane %v4722, %v4725
    %v4743 = vunpack.c.l.b16 %v4706
    %v4744 = vunpack.c.l.b16 %v4707
    %v4745 = vunpack.c.l.b16 %v4708
    %v4746 = vunpack.c.l.b16 %v4709
    %v4747 = vunpack.c.l.b16 %v4710
    %v4748 = vunpack.c.l.b16 %v4711
    %v4749 = vunpack.c.l.b16 %v4712
    %v4750 = vunpack.c.l.b16 %v4713
    %v4751 = vunpack.c.l.b16 %v4714
    %v4752 = vunpack.c.l.b16 %v4715
    %v4753 = vunpack.c.l.b16 %v4716
    %v4754 = vunpack.c.l.b16 %v4717
    %v4755 = vunpack.c.l.b16 %v4718
    %v4756 = vunpack.c.l.b16 %v4719
    %v4757 = vunpack.c.l.b16 %v4720
    %v4758 = vunpack.c.l.b16 %v4721
    %v4759 = vpack.c.b16 %v4744, %v4743
    %v4760 = vpack.c.b16 %v4746, %v4745
    %v4761 = vpack.c.b16 %v4748, %v4747
    %v4762 = vpack.c.b16 %v4750, %v4749
    %v4763 = vpack.c.b16 %v4752, %v4751
    %v4764 = vpack.c.b16 %v4754, %v4753
    %v4765 = vpack.c.b16 %v4756, %v4755
    %v4766 = vpack.c.b16 %v4758, %v4757
    %4775 = vmatprep.subr.bf16.mxu0 0
    %4776 = vmatpush1.bf16.msra.mxu0 %v4759
    %4777 = vmatprep.subr.bf16.mxu0 0
    %4778 = vmatpush1.bf16.msra.mxu0 %v4760
    %4779 = vmatprep.subr.bf16.mxu0 0
    %4780 = vmatpush1.bf16.msra.mxu0 %v4761
    %4781 = vmatprep.subr.bf16.mxu0 0
    %4782 = vmatpush1.bf16.msra.mxu0 %v4762
    %4783 = vmatprep.subr.bf16.mxu0 0
    %4784 = vmatpush1.bf16.msra.mxu0 %v4763
    %4785 = vmatprep.subr.bf16.mxu0 0
    %4786 = vmatpush1.bf16.msra.mxu0 %v4764
    %4787 = vmatprep.subr.bf16.mxu0 0
    %4788 = vmatpush1.bf16.msra.mxu0 %v4765
    %4789 = vmatprep.subr.bf16.mxu0 0
    %4790 = vmatpush1.bf16.msra.mxu0 %v4766
    %4791 = vmatprep.subr.bf16.mxu0 0
    %4792 = vmatpush1.bf16.msra.mxu0 0
    %4793 = vmatprep.subr.bf16.mxu0 0
    %4794 = vmatpush1.bf16.msra.mxu0 0
    %4795 = vmatprep.subr.bf16.mxu0 0
    %4796 = vmatpush1.bf16.msra.mxu0 0
    %4797 = vmatprep.subr.bf16.mxu0 0
    %4798 = vmatpush1.bf16.msra.mxu0 0
    %4799 = vmatprep.subr.bf16.mxu0 0
    %4800 = vmatpush1.bf16.msra.mxu0 0
    %4801 = vmatprep.subr.bf16.mxu0 0
    %4802 = vmatpush1.bf16.msra.mxu0 0
    %4803 = vmatprep.subr.bf16.mxu0 0
    %4804 = vmatpush1.bf16.msra.mxu0 0
    %4805 = vmatprep.subr.bf16.mxu0 0
    %4806 = vmatpush1.bf16.msra.mxu0 0
    %4807 = vmatprep.mubr.bf16.mxu0 0
    %4808 = vmatmul.mubr.bf16.gmra.mrb[0].mxu0 %v4704
    %v4809 = vpop.f32.mrb[0].mxu0
    %v4810 = vadd.f32 %v4726, %v4809
    %v4811 = vpop.f32.mrb[0].mxu0
    %v4812 = vpop.f32.mrb[0].mxu0
    %v4813 = vadd.f32 %v4726, %v4812
    %v4814 = vpop.f32.mrb[0].mxu0
    %4815 = vmatprep.mubr.bf16.mxu0 0
    %4816 = vmatmul.mubr.bf16.gmra.mrb[0].mxu0 %v4705
    %v4817 = vpop.f32.mrb[0].mxu0
    %v4818 = vadd.f32 %v4726, %v4817
    %v4819 = vpop.f32.mrb[0].mxu0
    %v4820 = vpop.f32.mrb[0].mxu0
    %v4821 = vadd.f32 %v4726, %v4820
    %v4822 = vpop.f32.mrb[0].mxu0
    %4823 = vdwg.mxu0
    %v4824 = vmax.f32 %v4810, 0.0
    %v4825 = vmax.f32 %v4813, 0.0
    %v4826 = vmax.f32 %v4818, 0.0
    %v4827 = vmax.f32 %v4821, 0.0
    %4828 = vst [vmem:[#allocation2] sm:$0xff] %v4824
    %4829 = vst [vmem:[#allocation2 + $0x8] sm:$0xff] %v4825
    %4830 = vst [vmem:[#allocation2 + $0x10] sm:$0xff] %v4826
    %4831 = vst [vmem:[#allocation2 + $0x18] sm:$0xff] %v4827
    %v4832 = vld [vmem:[#allocation2] ss:$4 sm:$0xff]
    %v4833 = vld [vmem:[%s3006] ss:$4 sm:$0xff]
    %v4834 = vadd.f32 %v4832, %v4833
    %v4835 = vld [vmem:[%s3198] ss:$4 sm:$0xff]
    %v4836 = vadd.f32 %v4834, %v4835
    %v4837 = vld [vmem:[%s3390] ss:$4 sm:$0xff]
    %v4838 = vadd.f32 %v4836, %v4837
    %v4839 = vmul.f32 %v4838, 0.25
    %v4841 = vrot.slane %v4839, 4
    %v4843 = vsub.f32 %v4839, %v4841
    %v4844 = vmul.f32 %v4843, %v4843
    %vm4845 = vcmask 1043456
    %v4846 = vsel %vm4845, %v4844, 0.0
    %4847 = vadd.xlane.f32.xlu0 %v4846
    %v4848 = vpop.xlane.xlu0 %4847
    %v4849 = vrot.slane %v4848, 4
    %v4850 = vadd.f32 %v4848, %v4849
    %v4851 = vrot.slane %v4850, 2
    %v4852 = vadd.f32 %v4850, %v4851
    %v4853 = vrot.slane %v4852, 1
    %v4854 = vadd.f32 %v4852, %v4853
    %s4855 = vtos %v4854
    %s4856 = smul.f32 %s4855, 0.001953125
    %s4857 = scalar_lea.smem [#allocation3], 3
    %4858 = sst [smem:[%s4857]] %s4856
    %v4859 = vpack.c.bf16 %v4839, %v4839
    %v4860 = vld [vmem:[%s1 + $0xc8] sm:$0xf]
    %v4861 = vld [vmem:[%s1 + $0xcc] sm:$0xf]
    %v4862 = vld [vmem:[%s1 + $0xd0] sm:$0xf]
    %v4863 = vld [vmem:[%s1 + $0xd4] sm:$0xf]
    %v4864 = vld [vmem:[%s1 + $0xd8] sm:$0xf]
    %v4865 = vld [vmem:[%s1 + $0xdc] sm:$0xf]
    %v4866 = vld [vmem:[%s1 + $0xe0] sm:$0xf]
    %v4867 = vld [vmem:[%s1 + $0xe4] sm:$0xf]
    %v4868 = vld [vmem:[%s1 + $0xe8] sm:$0xf]
    %v4869 = vld [vmem:[%s1 + $0xec] sm:$0xf]
    %v4870 = vld [vmem:[%s1 + $0xf0] sm:$0xf]
    %v4871 = vld [vmem:[%s1 + $0xf4] sm:$0xf]
    %v4872 = vld [vmem:[%s1 + $0xf8] sm:$0xf]
    %v4873 = vld [vmem:[%s1 + $0xfc] sm:$0xf]
    %v4874 = vld [vmem:[%s1 + $0x100] sm:$0xf]
    %v4875 = vld [vmem:[%s1 + $0x104] sm:$0xf]
    %v4876 = vld [vmem:[%s2 + $0x4] sm:$0x1]
    %v4877 = vlaneseq
    %v4878 = vshrl.u32 %v4877, 7
    %v4879 = vsub.s32 0, %v4878
    %v4880 = vrot.slane %v4876, %v4879
    %v4897 = vunpack.c.l.b16 %v4860
    %v4898 = vunpack.c.l.b16 %v4861
    %v4899 = vunpack.c.l.b16 %v4862
    %v4900 = vunpack.c.l.b16 %v4863
    %v4901 = vunpack.c.l.b16 %v4864
    %v4902 = vunpack.c.l.b16 %v4865
    %v4903 = vunpack.c.l.b16 %v4866
    %v4904 = vunpack.c.l.b16 %v4867
    %v4905 = vunpack.c.l.b16 %v4868
    %v4906 = vunpack.c.l.b16 %v4869
    %v4907 = vunpack.c.l.b16 %v4870
    %v4908 = vunpack.c.l.b16 %v4871
    %v4909 = vunpack.c.l.b16 %v4872
    %v4910 = vunpack.c.l.b16 %v4873
    %v4911 = vunpack.c.l.b16 %v4874
    %v4912 = vunpack.c.l.b16 %v4875
    %v4913 = vpack.c.b16 %v4898, %v4897
    %v4914 = vpack.c.b16 %v4900, %v4899
    %v4915 = vpack.c.b16 %v4902, %v4901
    %v4916 = vpack.c.b16 %v4904, %v4903
    %v4917 = vpack.c.b16 %v4906, %v4905
    %v4918 = vpack.c.b16 %v4908, %v4907
    %v4919 = vpack.c.b16 %v4910, %v4909
    %v4920 = vpack.c.b16 %v4912, %v4911
    %4929 = vmatprep.subr.bf16.mxu0 0
    %4930 = vmatpush1.bf16.msra.mxu0 %v4913
    %4931 = vmatprep.subr.bf16.mxu0 0
    %4932 = vmatpush1.bf16.msra.mxu0 %v4914
    %4933 = vmatprep.subr.bf16.mxu0 0
    %4934 = vmatpush1.bf16.msra.mxu0 %v4915
    %4935 = vmatprep.subr.bf16.mxu0 0
    %4936 = vmatpush1.bf16.msra.mxu0 %v4916
    %4937 = vmatprep.subr.bf16.mxu0 0
    %4938 = vmatpush1.bf16.msra.mxu0 %v4917
    %4939 = vmatprep.subr.bf16.mxu0 0
    %4940 = vmatpush1.bf16.msra.mxu0 %v4918
    %4941 = vmatprep.subr.bf16.mxu0 0
    %4942 = vmatpush1.bf16.msra.mxu0 %v4919
    %4943 = vmatprep.subr.bf16.mxu0 0
    %4944 = vmatpush1.bf16.msra.mxu0 %v4920
    %4945 = vmatprep.subr.bf16.mxu0 0
    %4946 = vmatpush1.bf16.msra.mxu0 0
    %4947 = vmatprep.subr.bf16.mxu0 0
    %4948 = vmatpush1.bf16.msra.mxu0 0
    %4949 = vmatprep.subr.bf16.mxu0 0
    %4950 = vmatpush1.bf16.msra.mxu0 0
    %4951 = vmatprep.subr.bf16.mxu0 0
    %4952 = vmatpush1.bf16.msra.mxu0 0
    %4953 = vmatprep.subr.bf16.mxu0 0
    %4954 = vmatpush1.bf16.msra.mxu0 0
    %4955 = vmatprep.subr.bf16.mxu0 0
    %4956 = vmatpush1.bf16.msra.mxu0 0
    %4957 = vmatprep.subr.bf16.mxu0 0
    %4958 = vmatpush1.bf16.msra.mxu0 0
    %4959 = vmatprep.subr.bf16.mxu0 0
    %4960 = vmatpush1.bf16.msra.mxu0 0
    %4961 = vmatprep.mubr.bf16.mxu0 0
    %4962 = vmatmul.mubr.bf16.gmra.mrb[0].mxu0 %v4859
    %v4963 = vpop.f32.mrb[0].mxu0
    %v4964 = vadd.f32 %v4880, %v4963
    %v4965 = vpop.f32.mrb[0].mxu0
    %v4966 = vpop.f32.mrb[0].mxu0
    %v4967 = vpop.f32.mrb[0].mxu0
    %4968 = vdwg.mxu0
    %v4969 = vmax.f32 %v4964, 0.0
    %4970 = vst [vmem:[#allocation2] sm:$0xff] %v4969
    %v4971 = vld [vmem:[#allocation2] ss:$4 sm:$0x3]
    %v4972 = vld [vmem:[%s3006] ss:$4 sm:$0x3]
    %v4973 = vadd.f32 %v4971, %v4972
    %v4974 = vld [vmem:[%s3198] ss:$4 sm:$0x3]
    %v4975 = vadd.f32 %v4973, %v4974
    %v4976 = vld [vmem:[%s3390] ss:$4 sm:$0x3]
    %v4977 = vadd.f32 %v4975, %v4976
    %v4978 = vmul.f32 %v4977, 0.25
    %v4980 = vrot.slane %v4978, 1
    %v4982 = vsub.f32 %v4978, %v4980
    %v4983 = vmul.f32 %v4982, %v4982
    %vm4984 = vcmask 1040384
    %v4985 = vsel %vm4984, %v4983, 0.0
    %4986 = vadd.xlane.f32.xlu0 %v4985
    %v4987 = vpop.xlane.xlu0 %4986
    %v4988 = vrot.slane %v4987, 4
    %v4989 = vadd.f32 %v4987, %v4988
    %v4990 = vrot.slane %v4989, 2
    %v4991 = vadd.f32 %v4989, %v4990
    %v4992 = vrot.slane %v4991, 1
    %v4993 = vadd.f32 %v4991, %v4992
    %s4994 = vtos %v4993
    %s4995 = smul.f32 %s4994, 0.0078125
    %s4996 = scalar_lea.smem [#allocation3], 4
    %4997 = sst [smem:[%s4996]] %s4995
    %v4998 = vld [vmem:[%s1 + $0x108] sm:$0xf]
    %v4999 = vld [vmem:[%s1 + $0x10c] sm:$0xf]
    %v5000 = vld [vmem:[%s1 + $0x110] sm:$0xf]
    %v5001 = vld [vmem:[%s1 + $0x114] sm:$0xf]
    %v5002 = vld [vmem:[%s1 + $0x118] sm:$0xf]
    %v5003 = vld [vmem:[%s1 + $0x11c] sm:$0xf]
    %v5004 = vld [vmem:[%s1 + $0x120] sm:$0xf]
    %v5005 = vld [vmem:[%s1 + $0x124] sm:$0xf]
    %v5006 = vld [vmem:[%s1 + $0x128] sm:$0xf]
    %v5007 = vld [vmem:[%s1 + $0x12c] sm:$0xf]
    %v5008 = vld [vmem:[%s1 + $0x130] sm:$0xf]
    %v5009 = vld [vmem:[%s1 + $0x134] sm:$0xf]
    %v5010 = vld [vmem:[%s1 + $0x138] sm:$0xf]
    %v5011 = vld [vmem:[%s1 + $0x13c] sm:$0xf]
    %v5012 = vld [vmem:[%s1 + $0x140] sm:$0xf]
    %v5013 = vld [vmem:[%s1 + $0x144] sm:$0xf]
    %v5014 = vld [vmem:[%s2 + $0x5] sm:$0x1]
    %v5015 = vpack.c.bf16 %v4978, %v4978
    %v5016 = vlaneseq
    %v5017 = vshrl.u32 %v5016, 7
    %v5018 = vsub.s32 0, %v5017
    %v5019 = vrot.slane %v5014, %v5018
    %v5036 = vunpack.c.l.b16 %v4998
    %v5037 = vunpack.c.l.b16 %v4999
    %v5038 = vunpack.c.l.b16 %v5000
    %v5039 = vunpack.c.l.b16 %v5001
    %v5040 = vunpack.c.l.b16 %v5002
    %v5041 = vunpack.c.l.b16 %v5003
    %v5042 = vunpack.c.l.b16 %v5004
    %v5043 = vunpack.c.l.b16 %v5005
    %v5044 = vunpack.c.l.b16 %v5006
    %v5045 = vunpack.c.l.b16 %v5007
    %v5046 = vunpack.c.l.b16 %v5008
    %v5047 = vunpack.c.l.b16 %v5009
    %v5048 = vunpack.c.l.b16 %v5010
    %v5049 = vunpack.c.l.b16 %v5011
    %v5050 = vunpack.c.l.b16 %v5012
    %v5051 = vunpack.c.l.b16 %v5013
    %v5052 = vpack.c.b16 %v5037, %v5036
    %v5053 = vpack.c.b16 %v5039, %v5038
    %v5054 = vpack.c.b16 %v5041, %v5040
    %v5055 = vpack.c.b16 %v5043, %v5042
    %v5056 = vpack.c.b16 %v5045, %v5044
    %v5057 = vpack.c.b16 %v5047, %v5046
    %v5058 = vpack.c.b16 %v5049, %v5048
    %v5059 = vpack.c.b16 %v5051, %v5050
    %5068 = vmatprep.subr.bf16.mxu0 0
    %5069 = vmatpush1.bf16.msra.mxu0 %v5052
    %5070 = vmatprep.subr.bf16.mxu0 0
    %5071 = vmatpush1.bf16.msra.mxu0 %v5053
    %5072 = vmatprep.subr.bf16.mxu0 0
    %5073 = vmatpush1.bf16.msra.mxu0 %v5054
    %5074 = vmatprep.subr.bf16.mxu0 0
    %5075 = vmatpush1.bf16.msra.mxu0 %v5055
    %5076 = vmatprep.subr.bf16.mxu0 0
    %5077 = vmatpush1.bf16.msra.mxu0 %v5056
    %5078 = vmatprep.subr.bf16.mxu0 0
    %5079 = vmatpush1.bf16.msra.mxu0 %v5057
    %5080 = vmatprep.subr.bf16.mxu0 0
    %5081 = vmatpush1.bf16.msra.mxu0 %v5058
    %5082 = vmatprep.subr.bf16.mxu0 0
    %5083 = vmatpush1.bf16.msra.mxu0 %v5059
    %5084 = vmatprep.subr.bf16.mxu0 0
    %5085 = vmatpush1.bf16.msra.mxu0 0
    %5086 = vmatprep.subr.bf16.mxu0 0
    %5087 = vmatpush1.bf16.msra.mxu0 0
    %5088 = vmatprep.subr.bf16.mxu0 0
    %5089 = vmatpush1.bf16.msra.mxu0 0
    %5090 = vmatprep.subr.bf16.mxu0 0
    %5091 = vmatpush1.bf16.msra.mxu0 0
    %5092 = vmatprep.subr.bf16.mxu0 0
    %5093 = vmatpush1.bf16.msra.mxu0 0
    %5094 = vmatprep.subr.bf16.mxu0 0
    %5095 = vmatpush1.bf16.msra.mxu0 0
    %5096 = vmatprep.subr.bf16.mxu0 0
    %5097 = vmatpush1.bf16.msra.mxu0 0
    %5098 = vmatprep.subr.bf16.mxu0 0
    %5099 = vmatpush1.bf16.msra.mxu0 0
    %5100 = vmatprep.mubr.bf16.mxu0 0
    %5101 = vmatmul.mubr.bf16.gmra.mrb[0].mxu0 %v5015
    %v5102 = vpop.f32.mrb[0].mxu0
    %v5103 = vadd.f32 %v5019, %v5102
    %v5104 = vpop.f32.mrb[0].mxu0
    %v5105 = vpop.f32.mrb[0].mxu0
    %v5106 = vpop.f32.mrb[0].mxu0
    %5107 = vdwg.mxu0
    %v5109 = vrot.slane %v5103, 1
    %v5111 = vmul.f32 %v5103, %v5109
    %v5112 = vsel %vm4984, %v5111, 0.0
    %5113 = vadd.xlane.f32.xlu0 %v5112
    %v5114 = vpop.xlane.xlu0 %5113
    %v5115 = vmul.f32 %v5103, %v5103
    %v5116 = vsel %vm4984, %v5115, 0.0
    %5117 = vadd.xlane.f32.xlu0 %v5116
    %v5118 = vpop.xlane.xlu0 %5117
    %vm5119 = vcmask 1041409
    %v5120 = vsel %vm5119, %v5115, 0.0
    %5121 = vadd.xlane.f32.xlu0 %v5120
    %v5122 = vpop.xlane.xlu0 %5121
    %v5124 = vrot.slane %v5122, 1
    %v5126 = vmul.f32 %v5118, %v5124
    %v5127 = vmax.f32 %v5126, 1e-16
    %v5128 = vrsqrt.pop %v5127
    %v5129 = vmul.f32 %v5114, %v5128
    %v5130 = vsub.f32 1.0, %v5129
    %v5131 = vadd.f32 %v5130, 0.0
    %s5132 = vtos %v5131
    %s5133 = scalar_lea.smem [#allocation3], 5
    %5134 = sst [smem:[%s5133]] %s5132
    // Predicated region
    $region14: #{loss_forward.1} parent=1 // pred_check
      _
    $region15: #{loss_forward.1} parent=1 // pred_check_branch
      %5136 = sbr.rel (0) target = $region17
    $region16: #{loss_forward.1} parent=1 // pred_region
      %s5138 = ssub.s32 16, 16
      %5139 = vsyncadd [#allocation4], %s5138
      %s5141 = sshll.u32 %s3, 4
      %s5142 = int_to_ptr.vmem [resolvable:$true] %s5141
      %5144 = dma.smem_to_vmem [#allocation3], 16, %s5142, [#allocation4]
    $region17: #{loss_forward.1} parent=1 // pred_fallthru
      _
    // Predicated region
    $region18: #{loss_forward.1} parent=1 // pred_check
      _
    $region19: #{loss_forward.1} parent=1 // pred_check_branch
      %5146 = sbr.rel (0) target = $region21
    $region20: #{loss_forward.1} parent=1 // pred_region
      %5147 = dma.done [#allocation4], 16
    $region21: #{loss_forward.1} parent=1 // pred_fallthru
      _
    %5148 = sfence
    %5149 = vsyncpa [#allocation4], 1

</llo_original>
